<compile_context>
chip_gen: v5e
topology: v5e:2x2
jax: 0.10.0
libtpu: 0.0.40
codegen_flags: <defaults>
</compile_context>

<pallas_src>
import functools

import jax
import jax.numpy as jnp
from jax import lax
from jax.experimental import pallas as pl
from jax.experimental.pallas import tpu as pltpu


def _round_up(x, m):
    return ((x + m - 1) // m) * m


# --------------------------------- Kernels ----------------------------------- #
def matmul_bias_kernel(x_ref, w_ref, b_ref, o_ref, acc_ref, *, relu):
    """Tiled matmul with f32 accumulator; bias (+optional ReLU) epilogue on last k."""
    @pl.when(pl.program_id(2) == 0)
    def _():
        acc_ref[...] = jnp.zeros_like(acc_ref)

    acc_ref[...] += jnp.dot(x_ref[...], w_ref[...],
                            preferred_element_type=jnp.float32)

    @pl.when(pl.program_id(2) == pl.num_programs(2) - 1)
    def _():
        y = acc_ref[...] + b_ref[...]
        if relu:
            y = jnp.maximum(y, 0.0)
        o_ref[...] = y.astype(o_ref.dtype)


def conv_relu_pool_kernel(p_ref, w_ref, b_ref, o_ref, *, hw_total, needs_mask):
    """Fused conv(im2col-matmul) + bias + ReLU + global average pool.

    Grid iterates over HW chunks; the [B, Cmp] running sum lives directly in the
    (grid-invariant) output block and is scaled by 1/HW on the last grid step.
    The HW-padding mask is only applied on the final partial chunk.
    """
    # TODO(synk): on v7x, add a leading 'parallel' batch/Cmp grid axis to use both TCs.
    i = pl.program_id(0)
    last = i == pl.num_programs(0) - 1

    @pl.when(i == 0)
    def _():
        o_ref[...] = jnp.zeros_like(o_ref)

    x = p_ref[...]                                   # [B, thw, CKp] bf16
    B, thw, ckp = x.shape
    y = jnp.dot(x.reshape(B * thw, ckp), w_ref[...],
                preferred_element_type=jnp.float32)  # [B*thw, Cmp]
    y = jnp.maximum(y + b_ref[...], 0.0).reshape(B, thw, -1)

    if needs_mask:
        @pl.when(last)
        def _():
            row = lax.broadcasted_iota(jnp.int32, y.shape, 1) + i * thw
            o_ref[...] += jnp.sum(jnp.where(row < hw_total, y, 0.0), axis=1)

        @pl.when(jnp.logical_not(last))
        def _():
            o_ref[...] += jnp.sum(y, axis=1)
    else:
        o_ref[...] += jnp.sum(y, axis=1)

    @pl.when(last)
    def _():
        o_ref[...] = o_ref[...] * (1.0 / hw_total)


def lstm_recurrent_kernel(gx_ref, whh_ref, hseq_ref, h_sc, c_sc, *, hidden_p, t_chunk):
    """A chunk of t_chunk timesteps per grid step; only h @ W_hh stays serial.

    gx already holds x @ W_ih + (b_ih + b_hh), precomputed as one big matmul (bf16).
    Gate order matches PyTorch nn.LSTM: i, f, g, o. Gate slices are 128-lane aligned
    because H is padded to hidden_p (multiple of 128). h/c persist in VMEM scratch
    (f32) across chunks.
    """
    ci = pl.program_id(0)
    Hp = hidden_p

    @pl.when(ci == 0)
    def _():
        h_sc[...] = jnp.zeros_like(h_sc)
        c_sc[...] = jnp.zeros_like(c_sc)

    whh = whh_ref[...]                                          # [Hp, 4Hp] bf16
    for tc in range(t_chunk):                                   # statically unrolled
        gates = gx_ref[tc].astype(jnp.float32) + jnp.dot(
            h_sc[...].astype(jnp.bfloat16), whh,
            preferred_element_type=jnp.float32)                 # [Bp, 4Hp]
        i_g = jax.nn.sigmoid(gates[:, 0:Hp])
        f_g = jax.nn.sigmoid(gates[:, Hp:2 * Hp])
        g_g = jnp.tanh(gates[:, 2 * Hp:3 * Hp])
        o_g = jax.nn.sigmoid(gates[:, 3 * Hp:4 * Hp])
        c_new = f_g * c_sc[...] + i_g * g_g
        h_new = o_g * jnp.tanh(c_new)
        c_sc[...] = c_new
        h_sc[...] = h_new
        hseq_ref[tc] = h_new.astype(hseq_ref.dtype)


# ------------------------------ Wrapper ops ----------------------------------- #
def matmul_bias(x, w, b, *, relu=False, out_dtype=jnp.float32, tm_hint=None):
    """Tiled, padded matmul-with-bias: bf16 operands, f32 accumulate.

    Pads/casts become no-ops when operands are already lane-aligned bf16
    (weights are pre-padded/cast once in prepare_params).
    """
    M, K = x.shape
    Kw, N = w.shape
    assert Kw == K and b.shape == (1, N)
    # NOTE: tm=256 fills the 256-wide MXU on v6e/v7x; on v5e (128-wide MXU) this
    # simply runs two passes per tile — still correct.
    tm = min(tm_hint if tm_hint is not None else 256, _round_up(M, 8))
    tn = min(512, _round_up(N, 128))
    tk = min(512, _round_up(K, 128))
    Mp, Np, Kp = _round_up(M, tm), _round_up(N, tn), _round_up(K, tk)
    xp = jnp.pad(x, ((0, Mp - M), (0, Kp - K))).astype(jnp.bfloat16)
    wp = jnp.pad(w, ((0, Kp - K), (0, Np - N))).astype(jnp.bfloat16)
    bp = jnp.pad(b, ((0, 0), (0, Np - N))).astype(jnp.float32)
    out = pl.pallas_call(
        functools.partial(matmul_bias_kernel, relu=relu),
        out_shape=jax.ShapeDtypeStruct((Mp, Np), out_dtype),
        grid=(Mp // tm, Np // tn, Kp // tk),
        in_specs=[
            pl.BlockSpec((tm, tk), lambda i, j, k: (i, k)),
            pl.BlockSpec((tk, tn), lambda i, j, k: (k, j)),
            pl.BlockSpec((1, tn), lambda i, j, k: (0, j)),
        ],
        out_specs=pl.BlockSpec((tm, tn), lambda i, j, k: (i, j)),
        scratch_shapes=[pltpu.VMEM((tm, tn), jnp.float32)],
        compiler_params=pltpu.CompilerParams(
            dimension_semantics=("parallel", "parallel", "arbitrary")),
    )(xp, wp, bp)
    return out[:M, :N]


def conv_relu_pool(patches, conv_w, conv_b):
    """patches: [B, HW, C*9]; conv_w pre-padded [CKp, Cmp] bf16 -> pooled [B, Cmp] f32."""
    B, HW, CK = patches.shape
    CKp, Cmp = conv_w.shape
    thw = min(512, _round_up(HW, 8))
    HWp = _round_up(HW, thw)
    pp = jnp.pad(patches, ((0, 0), (0, HWp - HW), (0, CKp - CK))).astype(jnp.bfloat16)
    return pl.pallas_call(
        functools.partial(conv_relu_pool_kernel, hw_total=HW, needs_mask=HWp != HW),
        out_shape=jax.ShapeDtypeStruct((B, Cmp), jnp.float32),
        grid=(HWp // thw,),
        in_specs=[
            pl.BlockSpec((B, thw, CKp), lambda i: (0, i, 0)),
            pl.BlockSpec((CKp, Cmp), lambda i: (0, 0)),
            pl.BlockSpec((1, Cmp), lambda i: (0, 0)),
        ],
        out_specs=pl.BlockSpec((B, Cmp), lambda i: (0, 0)),
        compiler_params=pltpu.CompilerParams(dimension_semantics=("arbitrary",)),
    )(pp, conv_w, conv_b)


def lstm_recurrent(gx, w_hh):
    """gx: [T+1, Bp, 4Hp] bf16 (x @ W_ih + b, precomputed); w_hh: [Hp, 4Hp] bf16.

    Processes up to 16 timesteps per grid step; returns bf16 hidden sequence.
    """
    # TODO(synk): for production Hp (>=2048) on v7x, set vmem_limit_bytes and/or
    # split W_hh over a gate-chunk grid axis so it fits the 64 MiB VMEM budget.
    Tp1, Bp, G = gx.shape
    Hp = G // 4
    Tc = Tp1 if Tp1 <= 16 else 8
    Tp1c = _round_up(Tp1, Tc)
    if Tp1c != Tp1:
        gx = jnp.pad(gx, ((0, Tp1c - Tp1), (0, 0), (0, 0)))
    return pl.pallas_call(
        functools.partial(lstm_recurrent_kernel, hidden_p=Hp, t_chunk=Tc),
        out_shape=jax.ShapeDtypeStruct((Tp1c, Bp, Hp), jnp.bfloat16),
        grid=(Tp1c // Tc,),
        in_specs=[
            pl.BlockSpec((Tc, Bp, G), lambda t: (t, 0, 0)),
            pl.BlockSpec((Hp, G), lambda t: (0, 0)),
        ],
        out_specs=pl.BlockSpec((Tc, Bp, Hp), lambda t: (t, 0, 0)),
        scratch_shapes=[pltpu.VMEM((Bp, Hp), jnp.float32),
                        pltpu.VMEM((Bp, Hp), jnp.float32)],
        compiler_params=pltpu.CompilerParams(dimension_semantics=("arbitrary",)),
    )(gx, w_hh)[:Tp1]


# ------------------------------ Layout helpers --------------------------------- #
def im2col_3x3(x):
    # x: [B, C, H, W] (NCHW) -> patches: [B, H*W, C*9] (channel-major, then (dy, dx))
    B, C, H, W = x.shape
    xp = jnp.pad(x, ((0, 0), (0, 0), (1, 1), (1, 1)))
    patches = []
    for dy in range(3):
        for dx in range(3):
            patches.append(xp[:, :, dy:dy + H, dx:dx + W])
    p = jnp.stack(patches, axis=0)           # [9, B, C, H, W]
    p = p.transpose(1, 3, 4, 2, 0)           # [B, H, W, C, 9]
    return p.reshape(B, H * W, C * 9)


def _pad_gates(w, H, Hp):
    """Pad each of the 4 PyTorch-ordered (i,f,g,o) gate blocks along the last axis
    from H to Hp, keeping gate slices 128-lane aligned inside the recurrent kernel."""
    if Hp == H:
        return w
    pad = [(0, 0)] * (w.ndim - 1) + [(0, Hp - H)]
    parts = [jnp.pad(w[..., k * H:(k + 1) * H], pad) for k in range(4)]
    return jnp.concatenate(parts, axis=-1)


def prepare_params(params, num_layers):
    """One-time weight preparation: gate re-layout, lane padding, bf16 casting.

    Done outside the jitted forward so no per-call weight HBM passes remain.
    """
    CK, Cmid = params["conv_w"].shape
    E = params["fc_w"].shape[1]
    H, V = params["lin_w"].shape
    CKp, Cmp = _round_up(CK, 128), _round_up(Cmid, 128)
    Ep, Hp, Vp = _round_up(E, 128), _round_up(H, 128), _round_up(V, 128)

    pp = {}
    pp["conv_w"] = jnp.pad(params["conv_w"], ((0, CKp - CK), (0, Cmp - Cmid))
                           ).astype(jnp.bfloat16)
    pp["conv_b"] = jnp.pad(params["conv_b"], ((0, 0), (0, Cmp - Cmid))
                           ).astype(jnp.float32)
    pp["fc_w"] = jnp.pad(params["fc_w"], ((0, Cmp - Cmid), (0, Ep - E))
                         ).astype(jnp.bfloat16)
    pp["fc_b"] = jnp.pad(params["fc_b"], ((0, 0), (0, Ep - E))).astype(jnp.float32)
    pp["embed_w"] = jnp.pad(params["embed_w"], ((0, 0), (0, Ep - E))
                            ).astype(jnp.bfloat16)
    for l in range(num_layers):
        in_dim = E if l == 0 else H
        in_p = Ep if l == 0 else Hp
        w_ih = _pad_gates(params[f"w_ih_l{l}"], H, Hp)
        pp[f"w_ih_l{l}"] = jnp.pad(w_ih, ((0, in_p - in_dim), (0, 0))
                                   ).astype(jnp.bfloat16)
        w_hh = _pad_gates(params[f"w_hh_l{l}"], H, Hp)
        pp[f"w_hh_l{l}"] = jnp.pad(w_hh, ((0, Hp - H), (0, 0))).astype(jnp.bfloat16)
        pp[f"b_l{l}"] = _pad_gates(params[f"b_l{l}"], H, Hp).astype(jnp.float32)
    pp["lin_w"] = jnp.pad(params["lin_w"], ((0, Hp - H), (0, Vp - V))
                          ).astype(jnp.bfloat16)
    pp["lin_b"] = jnp.pad(params["lin_b"], ((0, 0), (0, Vp - V))).astype(jnp.float32)

    cfg = dict(E=E, H=H, V=V, Ep=Ep, Hp=Hp, Vp=Vp, num_layers=num_layers)
    return pp, cfg


# ------------------------------ Model pieces ---------------------------------- #
def encoder_cnn(images, params, cfg):
    # Surrogate EncoderCNN: conv3x3 -> ReLU -> global avg pool -> fc -> ReLU (dropout=id)
    patches = im2col_3x3(images.astype(jnp.float32))                      # [B, H*W, C*9]
    pooled = conv_relu_pool(patches, params["conv_w"], params["conv_b"])  # [B, Cmp] f32
    feats = matmul_bias(pooled, params["fc_w"], params["fc_b"],
                        relu=True, out_dtype=jnp.bfloat16)                # [B, Ep] bf16
    return feats


def decoder_rnn(features, captions, params, cfg):
    # features: [B, Ep] bf16; captions: [T, B] int32 -> logits [T+1, B, V] f32
    T, B = captions.shape
    Ep, Hp, Vp, V = cfg["Ep"], cfg["Hp"], cfg["Vp"], cfg["V"]
    num_layers = cfg["num_layers"]
    Bp = _round_up(B, 8)
    Tp1 = T + 1

    # Embedding lookup (dropout = identity in eval). embed_w is pre-padded to Ep.
    embeddings = jnp.take(params["embed_w"], captions, axis=0)            # [T, B, Ep]
    x = jnp.concatenate([features[None, :, :], embeddings], axis=0)       # [T+1, B, Ep]
    x = jnp.pad(x, ((0, 0), (0, Bp - B), (0, 0)))                         # [T+1, Bp, Ep]

    h = x
    in_p = Ep
    for l in range(num_layers):
        # Hoisted input-to-hidden matmul: one well-shaped MXU matmul for all timesteps
        # (bias folded in here, outside the serial recurrence). bf16 output.
        gx = matmul_bias(h.reshape(Tp1 * Bp, in_p), params[f"w_ih_l{l}"],
                         params[f"b_l{l}"], out_dtype=jnp.bfloat16)       # [(T+1)*Bp, 4Hp]
        gx = gx.reshape(Tp1, Bp, 4 * Hp)
        # Serial recurrence: chunk of timesteps per grid step, h/c in VMEM scratch.
        h = lstm_recurrent(gx, params[f"w_hh_l{l}"])                      # [T+1, Bp, Hp]
        in_p = Hp

    # Vocab projection: large tm hint so lin_w (the largest weight) streams once.
    logits = matmul_bias(h.reshape(Tp1 * Bp, Hp), params["lin_w"], params["lin_b"],
                         out_dtype=jnp.float32, tm_hint=1024)             # [(T+1)*Bp, Vp]
    return logits.reshape(Tp1, Bp, Vp)[:, :B, :V]


def cnn_to_rnn_forward(images, captions, params, cfg):
    feats = encoder_cnn(images, params, cfg)
    return decoder_rnn(feats, captions, params, cfg)


# --------------------------------- Setup --------------------------------------- #
def init_params(key, in_ch, mid_ch, embed_size, hidden_size, vocab_size, num_layers):
    ks = jax.random.split(key, 7 + 3 * num_layers)
    p = {}
    p["conv_w"] = 0.1 * jax.random.normal(ks[0], (in_ch * 9, mid_ch), jnp.float32)
    p["conv_b"] = 0.1 * jax.random.normal(ks[1], (1, mid_ch), jnp.float32)
    p["fc_w"] = 0.1 * jax.random.normal(ks[2], (mid_ch, embed_size), jnp.float32)
    p["fc_b"] = 0.1 * jax.random.normal(ks[3], (1, embed_size), jnp.float32)
    p["embed_w"] = 0.1 * jax.random.normal(ks[4], (vocab_size, embed_size), jnp.float32)
    p["lin_w"] = 0.1 * jax.random.normal(ks[5], (hidden_size, vocab_size), jnp.float32)
    p["lin_b"] = 0.1 * jax.random.normal(ks[6], (1, vocab_size), jnp.float32)
    for l in range(num_layers):
        in_dim = embed_size if l == 0 else hidden_size
        p[f"w_ih_l{l}"] = 0.1 * jax.random.normal(
            ks[7 + 3 * l], (in_dim, 4 * hidden_size), jnp.float32)
        p[f"w_hh_l{l}"] = 0.1 * jax.random.normal(
            ks[8 + 3 * l], (hidden_size, 4 * hidden_size), jnp.float32)
        p[f"b_l{l}"] = 0.1 * jax.random.normal(
            ks[9 + 3 * l], (1, 4 * hidden_size), jnp.float32)
    return p


if __name__ == "__main__":
    # Small synthetic shapes consistent with the module's forward signature.
    batch, in_ch, spatial = 2, 4, 16
    seq_len = 8
    embed_size, hidden_size, vocab_size, num_layers = 32, 32, 48, 2
    mid_ch = 16

    key = jax.random.PRNGKey(0)
    k_img, k_cap, k_par = jax.random.split(key, 3)

    images = jax.random.normal(k_img, (batch, in_ch, spatial, spatial), jnp.float32)
    captions = jax.random.randint(k_cap, (seq_len, batch), 0, vocab_size, jnp.int32)
    params = init_params(k_par, in_ch, mid_ch, embed_size, hidden_size,
                         vocab_size, num_layers)

    # One-time weight preparation (padding / gate layout / bf16) outside the forward.
    prep, cfg = prepare_params(params, num_layers)
    forward = jax.jit(functools.partial(cnn_to_rnn_forward, cfg=cfg))

    outputs = forward(images, captions, prep)
    outputs = jax.block_until_ready(outputs)

    assert outputs.shape == (seq_len + 1, batch, vocab_size), outputs.shape
    assert outputs.dtype == jnp.float32
    assert bool(jnp.all(jnp.isfinite(outputs)))
    print("KERNEL_OK")
</pallas_src>

<mosaic_0001>
module attributes {stable_mosaic.version = 11 : i64} {
  func.func @matmul_bias_kernel(%arg0: i32, %arg1: i32, %arg2: i32, %arg3: memref<8x128xbf16, #tpu.memory_space<vmem>>, %arg4: memref<128x128xbf16, #tpu.memory_space<vmem>>, %arg5: memref<1x128xf32, #tpu.memory_space<vmem>>, %arg6: memref<8x128xbf16, #tpu.memory_space<vmem>>, %arg7: memref<8x128xf32, #tpu.memory_space<vmem>>) attributes {dimension_semantics = [#tpu.dimension_semantics<parallel>, #tpu.dimension_semantics<parallel>, #tpu.dimension_semantics<arbitrary>], iteration_bounds = array<i64: 1, 1, 1>, scalar_prefetch = 0 : i64, scratch_operands = 1 : i64, tpu.core_type = #tpu.core_type<tc>, window_params = [{transform_indices = @transform_0, window_bounds = array<i64: 8, 128>}, {transform_indices = @transform_1, window_bounds = array<i64: 128, 128>}, {transform_indices = @transform_2, window_bounds = array<i64: 1, 128>}, {transform_indices = @transform_3, window_bounds = array<i64: 8, 128>}]} {
    %c0_i32 = arith.constant 0 : i32
    %0 = arith.cmpi eq, %arg2, %c0_i32 : i32
    %1 = arith.extui %0 : i1 to i32
    %c0_i32_0 = arith.constant 0 : i32
    %2 = arith.cmpi ne, %1, %c0_i32_0 : i32
    scf.if %2 {
      %cst_10 = arith.constant 0.000000e+00 : f32
      %12 = vector.broadcast %cst_10 : f32 to vector<8x128xf32>
      %c0_11 = arith.constant 0 : index
      %c0_12 = arith.constant 0 : index
      %13 = vector.load %arg7[%c0_11, %c0_12] : memref<8x128xf32, #tpu.memory_space<vmem>>, vector<8x128xf32>
      tpu.vector_store %arg7[%c0_11, %c0_12], %12 {strides = array<i32>} : memref<8x128xf32, #tpu.memory_space<vmem>>, vector<8x128xf32>,
    } else {
    }
    %c0 = arith.constant 0 : index
    %c0_1 = arith.constant 0 : index
    %3 = vector.load %arg7[%c0, %c0_1] : memref<8x128xf32, #tpu.memory_space<vmem>>, vector<8x128xf32>
    %c0_2 = arith.constant 0 : index
    %c0_3 = arith.constant 0 : index
    %4 = vector.load %arg3[%c0_2, %c0_3] : memref<8x128xbf16, #tpu.memory_space<vmem>>, vector<8x128xbf16>
    %c0_4 = arith.constant 0 : index
    %c0_5 = arith.constant 0 : index
    %5 = vector.load %arg4[%c0_4, %c0_5] : memref<128x128xbf16, #tpu.memory_space<vmem>>, vector<128x128xbf16>
    %cst = arith.constant dense<0.000000e+00> : vector<8x128xf32>
    %6 = tpu.matmul %4, %5, %cst {dimension_numbers = #tpu.dot_dimension_numbers<[1], [0], [0], [1], [0, 0, 1, 1], [], []>} : vector<8x128xbf16>, vector<128x128xbf16>, vector<8x128xf32> -> vector<8x128xf32>
    %7 = arith.addf %3, %6 : vector<8x128xf32>
    %c0_6 = arith.constant 0 : index
    %c0_7 = arith.constant 0 : index
    %8 = vector.load %arg7[%c0_6, %c0_7] : memref<8x128xf32, #tpu.memory_space<vmem>>, vector<8x128xf32>
    tpu.vector_store %arg7[%c0_6, %c0_7], %7 {strides = array<i32>} : memref<8x128xf32, #tpu.memory_space<vmem>>, vector<8x128xf32>,
    %c0_i32_8 = arith.constant 0 : i32
    %9 = arith.cmpi eq, %arg2, %c0_i32_8 : i32
    %10 = arith.extui %9 : i1 to i32
    %c0_i32_9 = arith.constant 0 : i32
    %11 = arith.cmpi ne, %10, %c0_i32_9 : i32
    scf.if %11 {
      %c0_10 = arith.constant 0 : index
      %c0_11 = arith.constant 0 : index
      %12 = vector.load %arg7[%c0_10, %c0_11] : memref<8x128xf32, #tpu.memory_space<vmem>>, vector<8x128xf32>
      %c0_12 = arith.constant 0 : index
      %c0_13 = arith.constant 0 : index
      %13 = vector.load %arg5[%c0_12, %c0_13] : memref<1x128xf32, #tpu.memory_space<vmem>>, vector<1x128xf32>
      %14 = vector.broadcast %13 : vector<1x128xf32> to vector<8x128xf32>
      %15 = arith.addf %12, %14 : vector<8x128xf32>
      %cst_14 = arith.constant 0.000000e+00 : f32
      %16 = vector.broadcast %cst_14 : f32 to vector<8x128xf32>
      %17 = arith.maximumf %15, %16 : vector<8x128xf32>
      %18 = arith.truncf %17 : vector<8x128xf32> to vector<8x128xbf16>
      %c0_15 = arith.constant 0 : index
      %c0_16 = arith.constant 0 : index
      %19 = vector.load %arg6[%c0_15, %c0_16] : memref<8x128xbf16, #tpu.memory_space<vmem>>, vector<8x128xbf16>
      tpu.vector_store %arg6[%c0_15, %c0_16], %18 {strides = array<i32>} : memref<8x128xbf16, #tpu.memory_space<vmem>>, vector<8x128xbf16>,
    } else {
    }
    return
  }
  func.func @transform_0(%arg0: i32, %arg1: i32, %arg2: i32) -> (i32, i32) {
    %c0_i32 = arith.constant 0 : i32
    return %arg0, %arg2 : i32, i32
  }
  func.func @transform_1(%arg0: i32, %arg1: i32, %arg2: i32) -> (i32, i32) {
    %c0_i32 = arith.constant 0 : i32
    return %arg2, %arg1 : i32, i32
  }
  func.func @transform_2(%arg0: i32, %arg1: i32, %arg2: i32) -> (i32, i32) {
    %c0_i32 = arith.constant 0 : i32
    %c0_i32_0 = arith.constant 0 : i32
    return %c0_i32, %arg1 : i32, i32
  }
  func.func @transform_3(%arg0: i32, %arg1: i32, %arg2: i32) -> (i32, i32) {
    %c0_i32 = arith.constant 0 : i32
    return %arg0, %arg1 : i32, i32
  }
}

module attributes {stable_mosaic.version = 11 : i64} {
  func.func @conv_relu_pool_kernel(%arg0: i32, %arg1: memref<2x256x128xbf16, #tpu.memory_space<vmem>>, %arg2: memref<128x128xbf16, #tpu.memory_space<vmem>>, %arg3: memref<1x128xf32, #tpu.memory_space<vmem>>, %arg4: memref<2x128xf32, #tpu.memory_space<vmem>>) attributes {dimension_semantics = [#tpu.dimension_semantics<arbitrary>], iteration_bounds = array<i64: 1>, scalar_prefetch = 0 : i64, scratch_operands = 0 : i64, tpu.core_type = #tpu.core_type<tc>, window_params = [{transform_indices = @transform_0, window_bounds = array<i64: 2, 256, 128>}, {pipeline_mode = #tpu.pipeline_mode<synchronous>, transform_indices = @transform_1, window_bounds = array<i64: 128, 128>}, {pipeline_mode = #tpu.pipeline_mode<synchronous>, transform_indices = @transform_2, window_bounds = array<i64: 1, 128>}, {pipeline_mode = #tpu.pipeline_mode<synchronous>, transform_indices = @transform_3, window_bounds = array<i64: 2, 128>}]} {
    %c0_i32 = arith.constant 0 : i32
    %0 = arith.cmpi eq, %arg0, %c0_i32 : i32
    %c0_i32_0 = arith.constant 0 : i32
    %1 = arith.cmpi eq, %arg0, %c0_i32_0 : i32
    %2 = arith.extui %1 : i1 to i32
    %c0_i32_1 = arith.constant 0 : i32
    %3 = arith.cmpi ne, %2, %c0_i32_1 : i32
    scf.if %3 {
      %cst_15 = arith.constant 0.000000e+00 : f32
      %20 = vector.broadcast %cst_15 : f32 to vector<2x128xf32>
      %c0_16 = arith.constant 0 : index
      %c0_17 = arith.constant 0 : index
      %21 = vector.load %arg4[%c0_16, %c0_17] : memref<2x128xf32, #tpu.memory_space<vmem>>, vector<2x128xf32>
      tpu.vector_store %arg4[%c0_16, %c0_17], %20 {strides = array<i32>} : memref<2x128xf32, #tpu.memory_space<vmem>>, vector<2x128xf32>,
    } else {
    }
    %c0 = arith.constant 0 : index
    %c0_2 = arith.constant 0 : index
    %c0_3 = arith.constant 0 : index
    %4 = vector.load %arg1[%c0, %c0_2, %c0_3] : memref<2x256x128xbf16, #tpu.memory_space<vmem>>, vector<2x256x128xbf16>
    %5 = vector.shape_cast %4 : vector<2x256x128xbf16> to vector<512x128xbf16>
    %c0_4 = arith.constant 0 : index
    %c0_5 = arith.constant 0 : index
    %6 = vector.load %arg2[%c0_4, %c0_5] : memref<128x128xbf16, #tpu.memory_space<vmem>>, vector<128x128xbf16>
    %cst = arith.constant dense<0.000000e+00> : vector<512x128xf32>
    %7 = tpu.matmul %5, %6, %cst {dimension_numbers = #tpu.dot_dimension_numbers<[1], [0], [0], [1], [0, 0, 1, 1], [], []>} : vector<512x128xbf16>, vector<128x128xbf16>, vector<512x128xf32> -> vector<512x128xf32>
    %c0_6 = arith.constant 0 : index
    %c0_7 = arith.constant 0 : index
    %8 = vector.load %arg3[%c0_6, %c0_7] : memref<1x128xf32, #tpu.memory_space<vmem>>, vector<1x128xf32>
    %9 = vector.broadcast %8 : vector<1x128xf32> to vector<512x128xf32>
    %10 = arith.addf %7, %9 : vector<512x128xf32>
    %cst_8 = arith.constant 0.000000e+00 : f32
    %11 = vector.broadcast %cst_8 : f32 to vector<512x128xf32>
    %12 = arith.maximumf %10, %11 : vector<512x128xf32>
    %13 = vector.shape_cast %12 : vector<512x128xf32> to vector<2x256x128xf32>
    %c0_9 = arith.constant 0 : index
    %c0_10 = arith.constant 0 : index
    %14 = vector.load %arg4[%c0_9, %c0_10] : memref<2x128xf32, #tpu.memory_space<vmem>>, vector<2x128xf32>
    %cst_11 = arith.constant dense<0.000000e+00> : vector<2x128xf32>
    %15 = vector.multi_reduction <add>, %13, %cst_11 [1] : vector<2x256x128xf32> to vector<2x128xf32>
    %16 = arith.addf %14, %15 : vector<2x128xf32>
    %c0_12 = arith.constant 0 : index
    %c0_13 = arith.constant 0 : index
    %17 = vector.load %arg4[%c0_12, %c0_13] : memref<2x128xf32, #tpu.memory_space<vmem>>, vector<2x128xf32>
    tpu.vector_store %arg4[%c0_12, %c0_13], %16 {strides = array<i32>} : memref<2x128xf32, #tpu.memory_space<vmem>>, vector<2x128xf32>,
    %18 = arith.extui %0 : i1 to i32
    %c0_i32_14 = arith.constant 0 : i32
    %19 = arith.cmpi ne, %18, %c0_i32_14 : i32
    scf.if %19 {
      %c0_15 = arith.constant 0 : index
      %c0_16 = arith.constant 0 : index
      %20 = vector.load %arg4[%c0_15, %c0_16] : memref<2x128xf32, #tpu.memory_space<vmem>>, vector<2x128xf32>
      %cst_17 = arith.constant 3.906250e-03 : f32
      %21 = vector.broadcast %cst_17 : f32 to vector<2x128xf32>
      %22 = arith.mulf %20, %21 : vector<2x128xf32>
      %c0_18 = arith.constant 0 : index
      %c0_19 = arith.constant 0 : index
      %23 = vector.load %arg4[%c0_18, %c0_19] : memref<2x128xf32, #tpu.memory_space<vmem>>, vector<2x128xf32>
      tpu.vector_store %arg4[%c0_18, %c0_19], %22 {strides = array<i32>} : memref<2x128xf32, #tpu.memory_space<vmem>>, vector<2x128xf32>,
    } else {
    }
    return
  }
  func.func @transform_0(%arg0: i32) -> (i32, i32, i32) {
    %c0_i32 = arith.constant 0 : i32
    %c0_i32_0 = arith.constant 0 : i32
    %c0_i32_1 = arith.constant 0 : i32
    return %c0_i32, %arg0, %c0_i32_0 : i32, i32, i32
  }
  func.func @transform_1(%arg0: i32) -> (i32, i32) {
    %c0_i32 = arith.constant 0 : i32
    %c0_i32_0 = arith.constant 0 : i32
    %c0_i32_1 = arith.constant 0 : i32
    return %c0_i32, %c0_i32_0 : i32, i32
  }
  func.func @transform_2(%arg0: i32) -> (i32, i32) {
    %c0_i32 = arith.constant 0 : i32
    %c0_i32_0 = arith.constant 0 : i32
    %c0_i32_1 = arith.constant 0 : i32
    return %c0_i32, %c0_i32_0 : i32, i32
  }
  func.func @transform_3(%arg0: i32) -> (i32, i32) {
    %c0_i32 = arith.constant 0 : i32
    %c0_i32_0 = arith.constant 0 : i32
    %c0_i32_1 = arith.constant 0 : i32
    return %c0_i32, %c0_i32_0 : i32, i32
  }
}

module attributes {stable_mosaic.version = 11 : i64} {
  func.func @matmul_bias_kernel(%arg0: i32, %arg1: i32, %arg2: i32, %arg3: memref<72x128xbf16, #tpu.memory_space<vmem>>, %arg4: memref<128x512xbf16, #tpu.memory_space<vmem>>, %arg5: memref<1x512xf32, #tpu.memory_space<vmem>>, %arg6: memref<72x512xbf16, #tpu.memory_space<vmem>>, %arg7: memref<72x512xf32, #tpu.memory_space<vmem>>) attributes {dimension_semantics = [#tpu.dimension_semantics<parallel>, #tpu.dimension_semantics<parallel>, #tpu.dimension_semantics<arbitrary>], iteration_bounds = array<i64: 1, 1, 1>, scalar_prefetch = 0 : i64, scratch_operands = 1 : i64, tpu.core_type = #tpu.core_type<tc>, window_params = [{transform_indices = @transform_0, window_bounds = array<i64: 72, 128>}, {transform_indices = @transform_1, window_bounds = array<i64: 128, 512>}, {transform_indices = @transform_2, window_bounds = array<i64: 1, 512>}, {transform_indices = @transform_3, window_bounds = array<i64: 72, 512>}]} {
    %c0_i32 = arith.constant 0 : i32
    %0 = arith.cmpi eq, %arg2, %c0_i32 : i32
    %1 = arith.extui %0 : i1 to i32
    %c0_i32_0 = arith.constant 0 : i32
    %2 = arith.cmpi ne, %1, %c0_i32_0 : i32
    scf.if %2 {
      %cst_10 = arith.constant 0.000000e+00 : f32
      %12 = vector.broadcast %cst_10 : f32 to vector<72x512xf32>
      %c0_11 = arith.constant 0 : index
      %c0_12 = arith.constant 0 : index
      %13 = vector.load %arg7[%c0_11, %c0_12] : memref<72x512xf32, #tpu.memory_space<vmem>>, vector<72x512xf32>
      tpu.vector_store %arg7[%c0_11, %c0_12], %12 {strides = array<i32>} : memref<72x512xf32, #tpu.memory_space<vmem>>, vector<72x512xf32>,
    } else {
    }
    %c0 = arith.constant 0 : index
    %c0_1 = arith.constant 0 : index
    %3 = vector.load %arg7[%c0, %c0_1] : memref<72x512xf32, #tpu.memory_space<vmem>>, vector<72x512xf32>
    %c0_2 = arith.constant 0 : index
    %c0_3 = arith.constant 0 : index
    %4 = vector.load %arg3[%c0_2, %c0_3] : memref<72x128xbf16, #tpu.memory_space<vmem>>, vector<72x128xbf16>
    %c0_4 = arith.constant 0 : index
    %c0_5 = arith.constant 0 : index
    %5 = vector.load %arg4[%c0_4, %c0_5] : memref<128x512xbf16, #tpu.memory_space<vmem>>, vector<128x512xbf16>
    %cst = arith.constant dense<0.000000e+00> : vector<72x512xf32>
    %6 = tpu.matmul %4, %5, %cst {dimension_numbers = #tpu.dot_dimension_numbers<[1], [0], [0], [1], [0, 0, 1, 1], [], []>} : vector<72x128xbf16>, vector<128x512xbf16>, vector<72x512xf32> -> vector<72x512xf32>
    %7 = arith.addf %3, %6 : vector<72x512xf32>
    %c0_6 = arith.constant 0 : index
    %c0_7 = arith.constant 0 : index
    %8 = vector.load %arg7[%c0_6, %c0_7] : memref<72x512xf32, #tpu.memory_space<vmem>>, vector<72x512xf32>
    tpu.vector_store %arg7[%c0_6, %c0_7], %7 {strides = array<i32>} : memref<72x512xf32, #tpu.memory_space<vmem>>, vector<72x512xf32>,
    %c0_i32_8 = arith.constant 0 : i32
    %9 = arith.cmpi eq, %arg2, %c0_i32_8 : i32
    %10 = arith.extui %9 : i1 to i32
    %c0_i32_9 = arith.constant 0 : i32
    %11 = arith.cmpi ne, %10, %c0_i32_9 : i32
    scf.if %11 {
      %c0_10 = arith.constant 0 : index
      %c0_11 = arith.constant 0 : index
      %12 = vector.load %arg7[%c0_10, %c0_11] : memref<72x512xf32, #tpu.memory_space<vmem>>, vector<72x512xf32>
      %c0_12 = arith.constant 0 : index
      %c0_13 = arith.constant 0 : index
      %13 = vector.load %arg5[%c0_12, %c0_13] : memref<1x512xf32, #tpu.memory_space<vmem>>, vector<1x512xf32>
      %14 = vector.broadcast %13 : vector<1x512xf32> to vector<72x512xf32>
      %15 = arith.addf %12, %14 : vector<72x512xf32>
      %16 = arith.truncf %15 : vector<72x512xf32> to vector<72x512xbf16>
      %c0_14 = arith.constant 0 : index
      %c0_15 = arith.constant 0 : index
      %17 = vector.load %arg6[%c0_14, %c0_15] : memref<72x512xbf16, #tpu.memory_space<vmem>>, vector<72x512xbf16>
      tpu.vector_store %arg6[%c0_14, %c0_15], %16 {strides = array<i32>} : memref<72x512xbf16, #tpu.memory_space<vmem>>, vector<72x512xbf16>,
    } else {
    }
    return
  }
  func.func @transform_0(%arg0: i32, %arg1: i32, %arg2: i32) -> (i32, i32) {
    %c0_i32 = arith.constant 0 : i32
    return %arg0, %arg2 : i32, i32
  }
  func.func @transform_1(%arg0: i32, %arg1: i32, %arg2: i32) -> (i32, i32) {
    %c0_i32 = arith.constant 0 : i32
    return %arg2, %arg1 : i32, i32
  }
  func.func @transform_2(%arg0: i32, %arg1: i32, %arg2: i32) -> (i32, i32) {
    %c0_i32 = arith.constant 0 : i32
    %c0_i32_0 = arith.constant 0 : i32
    return %c0_i32, %arg1 : i32, i32
  }
  func.func @transform_3(%arg0: i32, %arg1: i32, %arg2: i32) -> (i32, i32) {
    %c0_i32 = arith.constant 0 : i32
    return %arg0, %arg1 : i32, i32
  }
}

module attributes {stable_mosaic.version = 11 : i64} {
  func.func @lstm_recurrent_kernel(%arg0: i32, %arg1: memref<9x8x512xbf16, #tpu.memory_space<vmem>>, %arg2: memref<128x512xbf16, #tpu.memory_space<vmem>>, %arg3: memref<9x8x128xbf16, #tpu.memory_space<vmem>>, %arg4: memref<8x128xf32, #tpu.memory_space<vmem>>, %arg5: memref<8x128xf32, #tpu.memory_space<vmem>>) attributes {dimension_semantics = [#tpu.dimension_semantics<arbitrary>], iteration_bounds = array<i64: 1>, scalar_prefetch = 0 : i64, scratch_operands = 2 : i64, tpu.core_type = #tpu.core_type<tc>, window_params = [{transform_indices = @transform_0, window_bounds = array<i64: 9, 8, 512>}, {pipeline_mode = #tpu.pipeline_mode<synchronous>, transform_indices = @transform_1, window_bounds = array<i64: 128, 512>}, {transform_indices = @transform_2, window_bounds = array<i64: 9, 8, 128>}]} {
    %c0_i32 = arith.constant 0 : i32
    %0 = arith.cmpi eq, %arg0, %c0_i32 : i32
    %1 = arith.extui %0 : i1 to i32
    %c0_i32_0 = arith.constant 0 : i32
    %2 = arith.cmpi ne, %1, %c0_i32_0 : i32
    scf.if %2 {
      %cst_155 = arith.constant 0.000000e+00 : f32
      %355 = vector.broadcast %cst_155 : f32 to vector<8x128xf32>
      %c0_156 = arith.constant 0 : index
      %c0_157 = arith.constant 0 : index
      %356 = vector.load %arg4[%c0_156, %c0_157] : memref<8x128xf32, #tpu.memory_space<vmem>>, vector<8x128xf32>
      tpu.vector_store %arg4[%c0_156, %c0_157], %355 {strides = array<i32>} : memref<8x128xf32, #tpu.memory_space<vmem>>, vector<8x128xf32>,
      %cst_158 = arith.constant 0.000000e+00 : f32
      %357 = vector.broadcast %cst_158 : f32 to vector<8x128xf32>
      %c0_159 = arith.constant 0 : index
      %c0_160 = arith.constant 0 : index
      %358 = vector.load %arg5[%c0_159, %c0_160] : memref<8x128xf32, #tpu.memory_space<vmem>>, vector<8x128xf32>
      tpu.vector_store %arg5[%c0_159, %c0_160], %357 {strides = array<i32>} : memref<8x128xf32, #tpu.memory_space<vmem>>, vector<8x128xf32>,
    } else {
    }
    %c0 = arith.constant 0 : index
    %c0_1 = arith.constant 0 : index
    %3 = vector.load %arg2[%c0, %c0_1] : memref<128x512xbf16, #tpu.memory_space<vmem>>, vector<128x512xbf16>
    %c0_2 = arith.constant 0 : index
    %c0_3 = arith.constant 0 : index
    %c0_4 = arith.constant 0 : index
    %4 = vector.load %arg1[%c0_2, %c0_3, %c0_4] : memref<9x8x512xbf16, #tpu.memory_space<vmem>>, vector<1x8x512xbf16>
    %5 = vector.shape_cast %4 : vector<1x8x512xbf16> to vector<8x512xbf16>
    %6 = arith.extf %5 : vector<8x512xbf16> to vector<8x512xf32>
    %c0_5 = arith.constant 0 : index
    %c0_6 = arith.constant 0 : index
    %7 = vector.load %arg4[%c0_5, %c0_6] : memref<8x128xf32, #tpu.memory_space<vmem>>, vector<8x128xf32>
    %8 = arith.truncf %7 : vector<8x128xf32> to vector<8x128xbf16>
    %cst = arith.constant dense<0.000000e+00> : vector<8x512xf32>
    %9 = tpu.matmul %8, %3, %cst {dimension_numbers = #tpu.dot_dimension_numbers<[1], [0], [0], [1], [0, 0, 1, 1], [], []>} : vector<8x128xbf16>, vector<128x512xbf16>, vector<8x512xf32> -> vector<8x512xf32>
    %10 = arith.addf %6, %9 : vector<8x512xf32>
    %11 = vector.extract_strided_slice %10 {offsets = [0, 0], sizes = [8, 128], strides = [1, 1]} : vector<8x512xf32> to vector<8x128xf32>
    %12 = arith.negf %11 : vector<8x128xf32>
    %13 = math.exp %12 : vector<8x128xf32>
    %cst_7 = arith.constant 1.000000e+00 : f32
    %14 = vector.broadcast %cst_7 : f32 to vector<8x128xf32>
    %15 = arith.addf %14, %13 : vector<8x128xf32>
    %16 = arith.divf %14, %15 : vector<8x128xf32>
    %17 = vector.extract_strided_slice %10 {offsets = [0, 128], sizes = [8, 128], strides = [1, 1]} : vector<8x512xf32> to vector<8x128xf32>
    %18 = arith.negf %17 : vector<8x128xf32>
    %19 = math.exp %18 : vector<8x128xf32>
    %cst_8 = arith.constant 1.000000e+00 : f32
    %20 = vector.broadcast %cst_8 : f32 to vector<8x128xf32>
    %21 = arith.addf %20, %19 : vector<8x128xf32>
    %22 = arith.divf %20, %21 : vector<8x128xf32>
    %23 = vector.extract_strided_slice %10 {offsets = [0, 256], sizes = [8, 128], strides = [1, 1]} : vector<8x512xf32> to vector<8x128xf32>
    %24 = math.tanh %23 : vector<8x128xf32>
    %25 = vector.extract_strided_slice %10 {offsets = [0, 384], sizes = [8, 128], strides = [1, 1]} : vector<8x512xf32> to vector<8x128xf32>
    %26 = arith.negf %25 : vector<8x128xf32>
    %27 = math.exp %26 : vector<8x128xf32>
    %cst_9 = arith.constant 1.000000e+00 : f32
    %28 = vector.broadcast %cst_9 : f32 to vector<8x128xf32>
    %29 = arith.addf %28, %27 : vector<8x128xf32>
    %30 = arith.divf %28, %29 : vector<8x128xf32>
    %c0_10 = arith.constant 0 : index
    %c0_11 = arith.constant 0 : index
    %31 = vector.load %arg5[%c0_10, %c0_11] : memref<8x128xf32, #tpu.memory_space<vmem>>, vector<8x128xf32>
    %32 = arith.mulf %22, %31 : vector<8x128xf32>
    %33 = arith.mulf %16, %24 : vector<8x128xf32>
    %34 = arith.addf %32, %33 : vector<8x128xf32>
    %35 = math.tanh %34 : vector<8x128xf32>
    %36 = arith.mulf %30, %35 : vector<8x128xf32>
    %c0_12 = arith.constant 0 : index
    %c0_13 = arith.constant 0 : index
    %37 = vector.load %arg5[%c0_12, %c0_13] : memref<8x128xf32, #tpu.memory_space<vmem>>, vector<8x128xf32>
    tpu.vector_store %arg5[%c0_12, %c0_13], %34 {strides = array<i32>} : memref<8x128xf32, #tpu.memory_space<vmem>>, vector<8x128xf32>,
    %c0_14 = arith.constant 0 : index
    %c0_15 = arith.constant 0 : index
    %38 = vector.load %arg4[%c0_14, %c0_15] : memref<8x128xf32, #tpu.memory_space<vmem>>, vector<8x128xf32>
    tpu.vector_store %arg4[%c0_14, %c0_15], %36 {strides = array<i32>} : memref<8x128xf32, #tpu.memory_space<vmem>>, vector<8x128xf32>,
    %39 = arith.truncf %36 : vector<8x128xf32> to vector<8x128xbf16>
    %c0_16 = arith.constant 0 : index
    %c0_17 = arith.constant 0 : index
    %c0_18 = arith.constant 0 : index
    %40 = vector.load %arg3[%c0_16, %c0_17, %c0_18] : memref<9x8x128xbf16, #tpu.memory_space<vmem>>, vector<1x8x128xbf16>
    %41 = vector.shape_cast %40 : vector<1x8x128xbf16> to vector<8x128xbf16>
    %42 = vector.shape_cast %39 : vector<8x128xbf16> to vector<1x8x128xbf16>
    tpu.vector_store %arg3[%c0_16, %c0_17, %c0_18], %42 {strides = array<i32>} : memref<9x8x128xbf16, #tpu.memory_space<vmem>>, vector<1x8x128xbf16>,
    %c1 = arith.constant 1 : index
    %c0_19 = arith.constant 0 : index
    %c0_20 = arith.constant 0 : index
    %43 = vector.load %arg1[%c1, %c0_19, %c0_20] : memref<9x8x512xbf16, #tpu.memory_space<vmem>>, vector<1x8x512xbf16>
    %44 = vector.shape_cast %43 : vector<1x8x512xbf16> to vector<8x512xbf16>
    %45 = arith.extf %44 : vector<8x512xbf16> to vector<8x512xf32>
    %c0_21 = arith.constant 0 : index
    %c0_22 = arith.constant 0 : index
    %46 = vector.load %arg4[%c0_21, %c0_22] : memref<8x128xf32, #tpu.memory_space<vmem>>, vector<8x128xf32>
    %47 = arith.truncf %46 : vector<8x128xf32> to vector<8x128xbf16>
    %cst_23 = arith.constant dense<0.000000e+00> : vector<8x512xf32>
    %48 = tpu.matmul %47, %3, %cst_23 {dimension_numbers = #tpu.dot_dimension_numbers<[1], [0], [0], [1], [0, 0, 1, 1], [], []>} : vector<8x128xbf16>, vector<128x512xbf16>, vector<8x512xf32> -> vector<8x512xf32>
    %49 = arith.addf %45, %48 : vector<8x512xf32>
    %50 = vector.extract_strided_slice %49 {offsets = [0, 0], sizes = [8, 128], strides = [1, 1]} : vector<8x512xf32> to vector<8x128xf32>
    %51 = arith.negf %50 : vector<8x128xf32>
    %52 = math.exp %51 : vector<8x128xf32>
    %cst_24 = arith.constant 1.000000e+00 : f32
    %53 = vector.broadcast %cst_24 : f32 to vector<8x128xf32>
    %54 = arith.addf %53, %52 : vector<8x128xf32>
    %55 = arith.divf %53, %54 : vector<8x128xf32>
    %56 = vector.extract_strided_slice %49 {offsets = [0, 128], sizes = [8, 128], strides = [1, 1]} : vector<8x512xf32> to vector<8x128xf32>
    %57 = arith.negf %56 : vector<8x128xf32>
    %58 = math.exp %57 : vector<8x128xf32>
    %cst_25 = arith.constant 1.000000e+00 : f32
    %59 = vector.broadcast %cst_25 : f32 to vector<8x128xf32>
    %60 = arith.addf %59, %58 : vector<8x128xf32>
    %61 = arith.divf %59, %60 : vector<8x128xf32>
    %62 = vector.extract_strided_slice %49 {offsets = [0, 256], sizes = [8, 128], strides = [1, 1]} : vector<8x512xf32> to vector<8x128xf32>
    %63 = math.tanh %62 : vector<8x128xf32>
    %64 = vector.extract_strided_slice %49 {offsets = [0, 384], sizes = [8, 128], strides = [1, 1]} : vector<8x512xf32> to vector<8x128xf32>
    %65 = arith.negf %64 : vector<8x128xf32>
    %66 = math.exp %65 : vector<8x128xf32>
    %cst_26 = arith.constant 1.000000e+00 : f32
    %67 = vector.broadcast %cst_26 : f32 to vector<8x128xf32>
    %68 = arith.addf %67, %66 : vector<8x128xf32>
    %69 = arith.divf %67, %68 : vector<8x128xf32>
    %c0_27 = arith.constant 0 : index
    %c0_28 = arith.constant 0 : index
    %70 = vector.load %arg5[%c0_27, %c0_28] : memref<8x128xf32, #tpu.memory_space<vmem>>, vector<8x128xf32>
    %71 = arith.mulf %61, %70 : vector<8x128xf32>
    %72 = arith.mulf %55, %63 : vector<8x128xf32>
    %73 = arith.addf %71, %72 : vector<8x128xf32>
    %74 = math.tanh %73 : vector<8x128xf32>
    %75 = arith.mulf %69, %74 : vector<8x128xf32>
    %c0_29 = arith.constant 0 : index
    %c0_30 = arith.constant 0 : index
    %76 = vector.load %arg5[%c0_29, %c0_30] : memref<8x128xf32, #tpu.memory_space<vmem>>, vector<8x128xf32>
    tpu.vector_store %arg5[%c0_29, %c0_30], %73 {strides = array<i32>} : memref<8x128xf32, #tpu.memory_space<vmem>>, vector<8x128xf32>,
    %c0_31 = arith.constant 0 : index
    %c0_32 = arith.constant 0 : index
    %77 = vector.load %arg4[%c0_31, %c0_32] : memref<8x128xf32, #tpu.memory_space<vmem>>, vector<8x128xf32>
    tpu.vector_store %arg4[%c0_31, %c0_32], %75 {strides = array<i32>} : memref<8x128xf32, #tpu.memory_space<vmem>>, vector<8x128xf32>,
    %78 = arith.truncf %75 : vector<8x128xf32> to vector<8x128xbf16>
    %c1_33 = arith.constant 1 : index
    %c0_34 = arith.constant 0 : index
    %c0_35 = arith.constant 0 : index
    %79 = vector.load %arg3[%c1_33, %c0_34, %c0_35] : memref<9x8x128xbf16, #tpu.memory_space<vmem>>, vector<1x8x128xbf16>
    %80 = vector.shape_cast %79 : vector<1x8x128xbf16> to vector<8x128xbf16>
    %81 = vector.shape_cast %78 : vector<8x128xbf16> to vector<1x8x128xbf16>
    tpu.vector_store %arg3[%c1_33, %c0_34, %c0_35], %81 {strides = array<i32>} : memref<9x8x128xbf16, #tpu.memory_space<vmem>>, vector<1x8x128xbf16>,
    %c2 = arith.constant 2 : index
    %c0_36 = arith.constant 0 : index
    %c0_37 = arith.constant 0 : index
    %82 = vector.load %arg1[%c2, %c0_36, %c0_37] : memref<9x8x512xbf16, #tpu.memory_space<vmem>>, vector<1x8x512xbf16>
    %83 = vector.shape_cast %82 : vector<1x8x512xbf16> to vector<8x512xbf16>
    %84 = arith.extf %83 : vector<8x512xbf16> to vector<8x512xf32>
    %c0_38 = arith.constant 0 : index
    %c0_39 = arith.constant 0 : index
    %85 = vector.load %arg4[%c0_38, %c0_39] : memref<8x128xf32, #tpu.memory_space<vmem>>, vector<8x128xf32>
    %86 = arith.truncf %85 : vector<8x128xf32> to vector<8x128xbf16>
    %cst_40 = arith.constant dense<0.000000e+00> : vector<8x512xf32>
    %87 = tpu.matmul %86, %3, %cst_40 {dimension_numbers = #tpu.dot_dimension_numbers<[1], [0], [0], [1], [0, 0, 1, 1], [], []>} : vector<8x128xbf16>, vector<128x512xbf16>, vector<8x512xf32> -> vector<8x512xf32>
    %88 = arith.addf %84, %87 : vector<8x512xf32>
    %89 = vector.extract_strided_slice %88 {offsets = [0, 0], sizes = [8, 128], strides = [1, 1]} : vector<8x512xf32> to vector<8x128xf32>
    %90 = arith.negf %89 : vector<8x128xf32>
    %91 = math.exp %90 : vector<8x128xf32>
    %cst_41 = arith.constant 1.000000e+00 : f32
    %92 = vector.broadcast %cst_41 : f32 to vector<8x128xf32>
    %93 = arith.addf %92, %91 : vector<8x128xf32>
    %94 = arith.divf %92, %93 : vector<8x128xf32>
    %95 = vector.extract_strided_slice %88 {offsets = [0, 128], sizes = [8, 128], strides = [1, 1]} : vector<8x512xf32> to vector<8x128xf32>
    %96 = arith.negf %95 : vector<8x128xf32>
    %97 = math.exp %96 : vector<8x128xf32>
    %cst_42 = arith.constant 1.000000e+00 : f32
    %98 = vector.broadcast %cst_42 : f32 to vector<8x128xf32>
    %99 = arith.addf %98, %97 : vector<8x128xf32>
    %100 = arith.divf %98, %99 : vector<8x128xf32>
    %101 = vector.extract_strided_slice %88 {offsets = [0, 256], sizes = [8, 128], strides = [1, 1]} : vector<8x512xf32> to vector<8x128xf32>
    %102 = math.tanh %101 : vector<8x128xf32>
    %103 = vector.extract_strided_slice %88 {offsets = [0, 384], sizes = [8, 128], strides = [1, 1]} : vector<8x512xf32> to vector<8x128xf32>
    %104 = arith.negf %103 : vector<8x128xf32>
    %105 = math.exp %104 : vector<8x128xf32>
    %cst_43 = arith.constant 1.000000e+00 : f32
    %106 = vector.broadcast %cst_43 : f32 to vector<8x128xf32>
    %107 = arith.addf %106, %105 : vector<8x128xf32>
    %108 = arith.divf %106, %107 : vector<8x128xf32>
    %c0_44 = arith.constant 0 : index
    %c0_45 = arith.constant 0 : index
    %109 = vector.load %arg5[%c0_44, %c0_45] : memref<8x128xf32, #tpu.memory_space<vmem>>, vector<8x128xf32>
    %110 = arith.mulf %100, %109 : vector<8x128xf32>
    %111 = arith.mulf %94, %102 : vector<8x128xf32>
    %112 = arith.addf %110, %111 : vector<8x128xf32>
    %113 = math.tanh %112 : vector<8x128xf32>
    %114 = arith.mulf %108, %113 : vector<8x128xf32>
    %c0_46 = arith.constant 0 : index
    %c0_47 = arith.constant 0 : index
    %115 = vector.load %arg5[%c0_46, %c0_47] : memref<8x128xf32, #tpu.memory_space<vmem>>, vector<8x128xf32>
    tpu.vector_store %arg5[%c0_46, %c0_47], %112 {strides = array<i32>} : memref<8x128xf32, #tpu.memory_space<vmem>>, vector<8x128xf32>,
    %c0_48 = arith.constant 0 : index
    %c0_49 = arith.constant 0 : index
    %116 = vector.load %arg4[%c0_48, %c0_49] : memref<8x128xf32, #tpu.memory_space<vmem>>, vector<8x128xf32>
    tpu.vector_store %arg4[%c0_48, %c0_49], %114 {strides = array<i32>} : memref<8x128xf32, #tpu.memory_space<vmem>>, vector<8x128xf32>,
    %117 = arith.truncf %114 : vector<8x128xf32> to vector<8x128xbf16>
    %c2_50 = arith.constant 2 : index
    %c0_51 = arith.constant 0 : index
    %c0_52 = arith.constant 0 : index
    %118 = vector.load %arg3[%c2_50, %c0_51, %c0_52] : memref<9x8x128xbf16, #tpu.memory_space<vmem>>, vector<1x8x128xbf16>
    %119 = vector.shape_cast %118 : vector<1x8x128xbf16> to vector<8x128xbf16>
    %120 = vector.shape_cast %117 : vector<8x128xbf16> to vector<1x8x128xbf16>
    tpu.vector_store %arg3[%c2_50, %c0_51, %c0_52], %120 {strides = array<i32>} : memref<9x8x128xbf16, #tpu.memory_space<vmem>>, vector<1x8x128xbf16>,
    %c3 = arith.constant 3 : index
    %c0_53 = arith.constant 0 : index
    %c0_54 = arith.constant 0 : index
    %121 = vector.load %arg1[%c3, %c0_53, %c0_54] : memref<9x8x512xbf16, #tpu.memory_space<vmem>>, vector<1x8x512xbf16>
    %122 = vector.shape_cast %121 : vector<1x8x512xbf16> to vector<8x512xbf16>
    %123 = arith.extf %122 : vector<8x512xbf16> to vector<8x512xf32>
    %c0_55 = arith.constant 0 : index
    %c0_56 = arith.constant 0 : index
    %124 = vector.load %arg4[%c0_55, %c0_56] : memref<8x128xf32, #tpu.memory_space<vmem>>, vector<8x128xf32>
    %125 = arith.truncf %124 : vector<8x128xf32> to vector<8x128xbf16>
    %cst_57 = arith.constant dense<0.000000e+00> : vector<8x512xf32>
    %126 = tpu.matmul %125, %3, %cst_57 {dimension_numbers = #tpu.dot_dimension_numbers<[1], [0], [0], [1], [0, 0, 1, 1], [], []>} : vector<8x128xbf16>, vector<128x512xbf16>, vector<8x512xf32> -> vector<8x512xf32>
    %127 = arith.addf %123, %126 : vector<8x512xf32>
    %128 = vector.extract_strided_slice %127 {offsets = [0, 0], sizes = [8, 128], strides = [1, 1]} : vector<8x512xf32> to vector<8x128xf32>
    %129 = arith.negf %128 : vector<8x128xf32>
    %130 = math.exp %129 : vector<8x128xf32>
    %cst_58 = arith.constant 1.000000e+00 : f32
    %131 = vector.broadcast %cst_58 : f32 to vector<8x128xf32>
    %132 = arith.addf %131, %130 : vector<8x128xf32>
    %133 = arith.divf %131, %132 : vector<8x128xf32>
    %134 = vector.extract_strided_slice %127 {offsets = [0, 128], sizes = [8, 128], strides = [1, 1]} : vector<8x512xf32> to vector<8x128xf32>
    %135 = arith.negf %134 : vector<8x128xf32>
    %136 = math.exp %135 : vector<8x128xf32>
    %cst_59 = arith.constant 1.000000e+00 : f32
    %137 = vector.broadcast %cst_59 : f32 to vector<8x128xf32>
    %138 = arith.addf %137, %136 : vector<8x128xf32>
    %139 = arith.divf %137, %138 : vector<8x128xf32>
    %140 = vector.extract_strided_slice %127 {offsets = [0, 256], sizes = [8, 128], strides = [1, 1]} : vector<8x512xf32> to vector<8x128xf32>
    %141 = math.tanh %140 : vector<8x128xf32>
    %142 = vector.extract_strided_slice %127 {offsets = [0, 384], sizes = [8, 128], strides = [1, 1]} : vector<8x512xf32> to vector<8x128xf32>
    %143 = arith.negf %142 : vector<8x128xf32>
    %144 = math.exp %143 : vector<8x128xf32>
    %cst_60 = arith.constant 1.000000e+00 : f32
    %145 = vector.broadcast %cst_60 : f32 to vector<8x128xf32>
    %146 = arith.addf %145, %144 : vector<8x128xf32>
    %147 = arith.divf %145, %146 : vector<8x128xf32>
    %c0_61 = arith.constant 0 : index
    %c0_62 = arith.constant 0 : index
    %148 = vector.load %arg5[%c0_61, %c0_62] : memref<8x128xf32, #tpu.memory_space<vmem>>, vector<8x128xf32>
    %149 = arith.mulf %139, %148 : vector<8x128xf32>
    %150 = arith.mulf %133, %141 : vector<8x128xf32>
    %151 = arith.addf %149, %150 : vector<8x128xf32>
    %152 = math.tanh %151 : vector<8x128xf32>
    %153 = arith.mulf %147, %152 : vector<8x128xf32>
    %c0_63 = arith.constant 0 : index
    %c0_64 = arith.constant 0 : index
    %154 = vector.load %arg5[%c0_63, %c0_64] : memref<8x128xf32, #tpu.memory_space<vmem>>, vector<8x128xf32>
    tpu.vector_store %arg5[%c0_63, %c0_64], %151 {strides = array<i32>} : memref<8x128xf32, #tpu.memory_space<vmem>>, vector<8x128xf32>,
    %c0_65 = arith.constant 0 : index
    %c0_66 = arith.constant 0 : index
    %155 = vector.load %arg4[%c0_65, %c0_66] : memref<8x128xf32, #tpu.memory_space<vmem>>, vector<8x128xf32>
    tpu.vector_store %arg4[%c0_65, %c0_66], %153 {strides = array<i32>} : memref<8x128xf32, #tpu.memory_space<vmem>>, vector<8x128xf32>,
    %156 = arith.truncf %153 : vector<8x128xf32> to vector<8x128xbf16>
    %c3_67 = arith.constant 3 : index
    %c0_68 = arith.constant 0 : index
    %c0_69 = arith.constant 0 : index
    %157 = vector.load %arg3[%c3_67, %c0_68, %c0_69] : memref<9x8x128xbf16, #tpu.memory_space<vmem>>, vector<1x8x128xbf16>
    %158 = vector.shape_cast %157 : vector<1x8x128xbf16> to vector<8x128xbf16>
    %159 = vector.shape_cast %156 : vector<8x128xbf16> to vector<1x8x128xbf16>
    tpu.vector_store %arg3[%c3_67, %c0_68, %c0_69], %159 {strides = array<i32>} : memref<9x8x128xbf16, #tpu.memory_space<vmem>>, vector<1x8x128xbf16>,
    %c4 = arith.constant 4 : index
    %c0_70 = arith.constant 0 : index
    %c0_71 = arith.constant 0 : index
    %160 = vector.load %arg1[%c4, %c0_70, %c0_71] : memref<9x8x512xbf16, #tpu.memory_space<vmem>>, vector<1x8x512xbf16>
    %161 = vector.shape_cast %160 : vector<1x8x512xbf16> to vector<8x512xbf16>
    %162 = arith.extf %161 : vector<8x512xbf16> to vector<8x512xf32>
    %c0_72 = arith.constant 0 : index
    %c0_73 = arith.constant 0 : index
    %163 = vector.load %arg4[%c0_72, %c0_73] : memref<8x128xf32, #tpu.memory_space<vmem>>, vector<8x128xf32>
    %164 = arith.truncf %163 : vector<8x128xf32> to vector<8x128xbf16>
    %cst_74 = arith.constant dense<0.000000e+00> : vector<8x512xf32>
    %165 = tpu.matmul %164, %3, %cst_74 {dimension_numbers = #tpu.dot_dimension_numbers<[1], [0], [0], [1], [0, 0, 1, 1], [], []>} : vector<8x128xbf16>, vector<128x512xbf16>, vector<8x512xf32> -> vector<8x512xf32>
    %166 = arith.addf %162, %165 : vector<8x512xf32>
    %167 = vector.extract_strided_slice %166 {offsets = [0, 0], sizes = [8, 128], strides = [1, 1]} : vector<8x512xf32> to vector<8x128xf32>
    %168 = arith.negf %167 : vector<8x128xf32>
    %169 = math.exp %168 : vector<8x128xf32>
    %cst_75 = arith.constant 1.000000e+00 : f32
    %170 = vector.broadcast %cst_75 : f32 to vector<8x128xf32>
    %171 = arith.addf %170, %169 : vector<8x128xf32>
    %172 = arith.divf %170, %171 : vector<8x128xf32>
    %173 = vector.extract_strided_slice %166 {offsets = [0, 128], sizes = [8, 128], strides = [1, 1]} : vector<8x512xf32> to vector<8x128xf32>
    %174 = arith.negf %173 : vector<8x128xf32>
    %175 = math.exp %174 : vector<8x128xf32>
    %cst_76 = arith.constant 1.000000e+00 : f32
    %176 = vector.broadcast %cst_76 : f32 to vector<8x128xf32>
    %177 = arith.addf %176, %175 : vector<8x128xf32>
    %178 = arith.divf %176, %177 : vector<8x128xf32>
    %179 = vector.extract_strided_slice %166 {offsets = [0, 256], sizes = [8, 128], strides = [1, 1]} : vector<8x512xf32> to vector<8x128xf32>
    %180 = math.tanh %179 : vector<8x128xf32>
    %181 = vector.extract_strided_slice %166 {offsets = [0, 384], sizes = [8, 128], strides = [1, 1]} : vector<8x512xf32> to vector<8x128xf32>
    %182 = arith.negf %181 : vector<8x128xf32>
    %183 = math.exp %182 : vector<8x128xf32>
    %cst_77 = arith.constant 1.000000e+00 : f32
    %184 = vector.broadcast %cst_77 : f32 to vector<8x128xf32>
    %185 = arith.addf %184, %183 : vector<8x128xf32>
    %186 = arith.divf %184, %185 : vector<8x128xf32>
    %c0_78 = arith.constant 0 : index
    %c0_79 = arith.constant 0 : index
    %187 = vector.load %arg5[%c0_78, %c0_79] : memref<8x128xf32, #tpu.memory_space<vmem>>, vector<8x128xf32>
    %188 = arith.mulf %178, %187 : vector<8x128xf32>
    %189 = arith.mulf %172, %180 : vector<8x128xf32>
    %190 = arith.addf %188, %189 : vector<8x128xf32>
    %191 = math.tanh %190 : vector<8x128xf32>
    %192 = arith.mulf %186, %191 : vector<8x128xf32>
    %c0_80 = arith.constant 0 : index
    %c0_81 = arith.constant 0 : index
    %193 = vector.load %arg5[%c0_80, %c0_81] : memref<8x128xf32, #tpu.memory_space<vmem>>, vector<8x128xf32>
    tpu.vector_store %arg5[%c0_80, %c0_81], %190 {strides = array<i32>} : memref<8x128xf32, #tpu.memory_space<vmem>>, vector<8x128xf32>,
    %c0_82 = arith.constant 0 : index
    %c0_83 = arith.constant 0 : index
    %194 = vector.load %arg4[%c0_82, %c0_83] : memref<8x128xf32, #tpu.memory_space<vmem>>, vector<8x128xf32>
    tpu.vector_store %arg4[%c0_82, %c0_83], %192 {strides = array<i32>} : memref<8x128xf32, #tpu.memory_space<vmem>>, vector<8x128xf32>,
    %195 = arith.truncf %192 : vector<8x128xf32> to vector<8x128xbf16>
    %c4_84 = arith.constant 4 : index
    %c0_85 = arith.constant 0 : index
    %c0_86 = arith.constant 0 : index
    %196 = vector.load %arg3[%c4_84, %c0_85, %c0_86] : memref<9x8x128xbf16, #tpu.memory_space<vmem>>, vector<1x8x128xbf16>
    %197 = vector.shape_cast %196 : vector<1x8x128xbf16> to vector<8x128xbf16>
    %198 = vector.shape_cast %195 : vector<8x128xbf16> to vector<1x8x128xbf16>
    tpu.vector_store %arg3[%c4_84, %c0_85, %c0_86], %198 {strides = array<i32>} : memref<9x8x128xbf16, #tpu.memory_space<vmem>>, vector<1x8x128xbf16>,
    %c5 = arith.constant 5 : index
    %c0_87 = arith.constant 0 : index
    %c0_88 = arith.constant 0 : index
    %199 = vector.load %arg1[%c5, %c0_87, %c0_88] : memref<9x8x512xbf16, #tpu.memory_space<vmem>>, vector<1x8x512xbf16>
    %200 = vector.shape_cast %199 : vector<1x8x512xbf16> to vector<8x512xbf16>
    %201 = arith.extf %200 : vector<8x512xbf16> to vector<8x512xf32>
    %c0_89 = arith.constant 0 : index
    %c0_90 = arith.constant 0 : index
    %202 = vector.load %arg4[%c0_89, %c0_90] : memref<8x128xf32, #tpu.memory_space<vmem>>, vector<8x128xf32>
    %203 = arith.truncf %202 : vector<8x128xf32> to vector<8x128xbf16>
    %cst_91 = arith.constant dense<0.000000e+00> : vector<8x512xf32>
    %204 = tpu.matmul %203, %3, %cst_91 {dimension_numbers = #tpu.dot_dimension_numbers<[1], [0], [0], [1], [0, 0, 1, 1], [], []>} : vector<8x128xbf16>, vector<128x512xbf16>, vector<8x512xf32> -> vector<8x512xf32>
    %205 = arith.addf %201, %204 : vector<8x512xf32>
    %206 = vector.extract_strided_slice %205 {offsets = [0, 0], sizes = [8, 128], strides = [1, 1]} : vector<8x512xf32> to vector<8x128xf32>
    %207 = arith.negf %206 : vector<8x128xf32>
    %208 = math.exp %207 : vector<8x128xf32>
    %cst_92 = arith.constant 1.000000e+00 : f32
    %209 = vector.broadcast %cst_92 : f32 to vector<8x128xf32>
    %210 = arith.addf %209, %208 : vector<8x128xf32>
    %211 = arith.divf %209, %210 : vector<8x128xf32>
    %212 = vector.extract_strided_slice %205 {offsets = [0, 128], sizes = [8, 128], strides = [1, 1]} : vector<8x512xf32> to vector<8x128xf32>
    %213 = arith.negf %212 : vector<8x128xf32>
    %214 = math.exp %213 : vector<8x128xf32>
    %cst_93 = arith.constant 1.000000e+00 : f32
    %215 = vector.broadcast %cst_93 : f32 to vector<8x128xf32>
    %216 = arith.addf %215, %214 : vector<8x128xf32>
    %217 = arith.divf %215, %216 : vector<8x128xf32>
    %218 = vector.extract_strided_slice %205 {offsets = [0, 256], sizes = [8, 128], strides = [1, 1]} : vector<8x512xf32> to vector<8x128xf32>
    %219 = math.tanh %218 : vector<8x128xf32>
    %220 = vector.extract_strided_slice %205 {offsets = [0, 384], sizes = [8, 128], strides = [1, 1]} : vector<8x512xf32> to vector<8x128xf32>
    %221 = arith.negf %220 : vector<8x128xf32>
    %222 = math.exp %221 : vector<8x128xf32>
    %cst_94 = arith.constant 1.000000e+00 : f32
    %223 = vector.broadcast %cst_94 : f32 to vector<8x128xf32>
    %224 = arith.addf %223, %222 : vector<8x128xf32>
    %225 = arith.divf %223, %224 : vector<8x128xf32>
    %c0_95 = arith.constant 0 : index
    %c0_96 = arith.constant 0 : index
    %226 = vector.load %arg5[%c0_95, %c0_96] : memref<8x128xf32, #tpu.memory_space<vmem>>, vector<8x128xf32>
    %227 = arith.mulf %217, %226 : vector<8x128xf32>
    %228 = arith.mulf %211, %219 : vector<8x128xf32>
    %229 = arith.addf %227, %228 : vector<8x128xf32>
    %230 = math.tanh %229 : vector<8x128xf32>
    %231 = arith.mulf %225, %230 : vector<8x128xf32>
    %c0_97 = arith.constant 0 : index
    %c0_98 = arith.constant 0 : index
    %232 = vector.load %arg5[%c0_97, %c0_98] : memref<8x128xf32, #tpu.memory_space<vmem>>, vector<8x128xf32>
    tpu.vector_store %arg5[%c0_97, %c0_98], %229 {strides = array<i32>} : memref<8x128xf32, #tpu.memory_space<vmem>>, vector<8x128xf32>,
    %c0_99 = arith.constant 0 : index
    %c0_100 = arith.constant 0 : index
    %233 = vector.load %arg4[%c0_99, %c0_100] : memref<8x128xf32, #tpu.memory_space<vmem>>, vector<8x128xf32>
    tpu.vector_store %arg4[%c0_99, %c0_100], %231 {strides = array<i32>} : memref<8x128xf32, #tpu.memory_space<vmem>>, vector<8x128xf32>,
    %234 = arith.truncf %231 : vector<8x128xf32> to vector<8x128xbf16>
    %c5_101 = arith.constant 5 : index
    %c0_102 = arith.constant 0 : index
    %c0_103 = arith.constant 0 : index
    %235 = vector.load %arg3[%c5_101, %c0_102, %c0_103] : memref<9x8x128xbf16, #tpu.memory_space<vmem>>, vector<1x8x128xbf16>
    %236 = vector.shape_cast %235 : vector<1x8x128xbf16> to vector<8x128xbf16>
    %237 = vector.shape_cast %234 : vector<8x128xbf16> to vector<1x8x128xbf16>
    tpu.vector_store %arg3[%c5_101, %c0_102, %c0_103], %237 {strides = array<i32>} : memref<9x8x128xbf16, #tpu.memory_space<vmem>>, vector<1x8x128xbf16>,
    %c6 = arith.constant 6 : index
    %c0_104 = arith.constant 0 : index
    %c0_105 = arith.constant 0 : index
    %238 = vector.load %arg1[%c6, %c0_104, %c0_105] : memref<9x8x512xbf16, #tpu.memory_space<vmem>>, vector<1x8x512xbf16>
    %239 = vector.shape_cast %238 : vector<1x8x512xbf16> to vector<8x512xbf16>
    %240 = arith.extf %239 : vector<8x512xbf16> to vector<8x512xf32>
    %c0_106 = arith.constant 0 : index
    %c0_107 = arith.constant 0 : index
    %241 = vector.load %arg4[%c0_106, %c0_107] : memref<8x128xf32, #tpu.memory_space<vmem>>, vector<8x128xf32>
    %242 = arith.truncf %241 : vector<8x128xf32> to vector<8x128xbf16>
    %cst_108 = arith.constant dense<0.000000e+00> : vector<8x512xf32>
    %243 = tpu.matmul %242, %3, %cst_108 {dimension_numbers = #tpu.dot_dimension_numbers<[1], [0], [0], [1], [0, 0, 1, 1], [], []>} : vector<8x128xbf16>, vector<128x512xbf16>, vector<8x512xf32> -> vector<8x512xf32>
    %244 = arith.addf %240, %243 : vector<8x512xf32>
    %245 = vector.extract_strided_slice %244 {offsets = [0, 0], sizes = [8, 128], strides = [1, 1]} : vector<8x512xf32> to vector<8x128xf32>
    %246 = arith.negf %245 : vector<8x128xf32>
    %247 = math.exp %246 : vector<8x128xf32>
    %cst_109 = arith.constant 1.000000e+00 : f32
    %248 = vector.broadcast %cst_109 : f32 to vector<8x128xf32>
    %249 = arith.addf %248, %247 : vector<8x128xf32>
    %250 = arith.divf %248, %249 : vector<8x128xf32>
    %251 = vector.extract_strided_slice %244 {offsets = [0, 128], sizes = [8, 128], strides = [1, 1]} : vector<8x512xf32> to vector<8x128xf32>
    %252 = arith.negf %251 : vector<8x128xf32>
    %253 = math.exp %252 : vector<8x128xf32>
    %cst_110 = arith.constant 1.000000e+00 : f32
    %254 = vector.broadcast %cst_110 : f32 to vector<8x128xf32>
    %255 = arith.addf %254, %253 : vector<8x128xf32>
    %256 = arith.divf %254, %255 : vector<8x128xf32>
    %257 = vector.extract_strided_slice %244 {offsets = [0, 256], sizes = [8, 128], strides = [1, 1]} : vector<8x512xf32> to vector<8x128xf32>
    %258 = math.tanh %257 : vector<8x128xf32>
    %259 = vector.extract_strided_slice %244 {offsets = [0, 384], sizes = [8, 128], strides = [1, 1]} : vector<8x512xf32> to vector<8x128xf32>
    %260 = arith.negf %259 : vector<8x128xf32>
    %261 = math.exp %260 : vector<8x128xf32>
    %cst_111 = arith.constant 1.000000e+00 : f32
    %262 = vector.broadcast %cst_111 : f32 to vector<8x128xf32>
    %263 = arith.addf %262, %261 : vector<8x128xf32>
    %264 = arith.divf %262, %263 : vector<8x128xf32>
    %c0_112 = arith.constant 0 : index
    %c0_113 = arith.constant 0 : index
    %265 = vector.load %arg5[%c0_112, %c0_113] : memref<8x128xf32, #tpu.memory_space<vmem>>, vector<8x128xf32>
    %266 = arith.mulf %256, %265 : vector<8x128xf32>
    %267 = arith.mulf %250, %258 : vector<8x128xf32>
    %268 = arith.addf %266, %267 : vector<8x128xf32>
    %269 = math.tanh %268 : vector<8x128xf32>
    %270 = arith.mulf %264, %269 : vector<8x128xf32>
    %c0_114 = arith.constant 0 : index
    %c0_115 = arith.constant 0 : index
    %271 = vector.load %arg5[%c0_114, %c0_115] : memref<8x128xf32, #tpu.memory_space<vmem>>, vector<8x128xf32>
    tpu.vector_store %arg5[%c0_114, %c0_115], %268 {strides = array<i32>} : memref<8x128xf32, #tpu.memory_space<vmem>>, vector<8x128xf32>,
    %c0_116 = arith.constant 0 : index
    %c0_117 = arith.constant 0 : index
    %272 = vector.load %arg4[%c0_116, %c0_117] : memref<8x128xf32, #tpu.memory_space<vmem>>, vector<8x128xf32>
    tpu.vector_store %arg4[%c0_116, %c0_117], %270 {strides = array<i32>} : memref<8x128xf32, #tpu.memory_space<vmem>>, vector<8x128xf32>,
    %273 = arith.truncf %270 : vector<8x128xf32> to vector<8x128xbf16>
    %c6_118 = arith.constant 6 : index
    %c0_119 = arith.constant 0 : index
    %c0_120 = arith.constant 0 : index
    %274 = vector.load %arg3[%c6_118, %c0_119, %c0_120] : memref<9x8x128xbf16, #tpu.memory_space<vmem>>, vector<1x8x128xbf16>
    %275 = vector.shape_cast %274 : vector<1x8x128xbf16> to vector<8x128xbf16>
    %276 = vector.shape_cast %273 : vector<8x128xbf16> to vector<1x8x128xbf16>
    tpu.vector_store %arg3[%c6_118, %c0_119, %c0_120], %276 {strides = array<i32>} : memref<9x8x128xbf16, #tpu.memory_space<vmem>>, vector<1x8x128xbf16>,
    %c7 = arith.constant 7 : index
    %c0_121 = arith.constant 0 : index
    %c0_122 = arith.constant 0 : index
    %277 = vector.load %arg1[%c7, %c0_121, %c0_122] : memref<9x8x512xbf16, #tpu.memory_space<vmem>>, vector<1x8x512xbf16>
    %278 = vector.shape_cast %277 : vector<1x8x512xbf16> to vector<8x512xbf16>
    %279 = arith.extf %278 : vector<8x512xbf16> to vector<8x512xf32>
    %c0_123 = arith.constant 0 : index
    %c0_124 = arith.constant 0 : index
    %280 = vector.load %arg4[%c0_123, %c0_124] : memref<8x128xf32, #tpu.memory_space<vmem>>, vector<8x128xf32>
    %281 = arith.truncf %280 : vector<8x128xf32> to vector<8x128xbf16>
    %cst_125 = arith.constant dense<0.000000e+00> : vector<8x512xf32>
    %282 = tpu.matmul %281, %3, %cst_125 {dimension_numbers = #tpu.dot_dimension_numbers<[1], [0], [0], [1], [0, 0, 1, 1], [], []>} : vector<8x128xbf16>, vector<128x512xbf16>, vector<8x512xf32> -> vector<8x512xf32>
    %283 = arith.addf %279, %282 : vector<8x512xf32>
    %284 = vector.extract_strided_slice %283 {offsets = [0, 0], sizes = [8, 128], strides = [1, 1]} : vector<8x512xf32> to vector<8x128xf32>
    %285 = arith.negf %284 : vector<8x128xf32>
    %286 = math.exp %285 : vector<8x128xf32>
    %cst_126 = arith.constant 1.000000e+00 : f32
    %287 = vector.broadcast %cst_126 : f32 to vector<8x128xf32>
    %288 = arith.addf %287, %286 : vector<8x128xf32>
    %289 = arith.divf %287, %288 : vector<8x128xf32>
    %290 = vector.extract_strided_slice %283 {offsets = [0, 128], sizes = [8, 128], strides = [1, 1]} : vector<8x512xf32> to vector<8x128xf32>
    %291 = arith.negf %290 : vector<8x128xf32>
    %292 = math.exp %291 : vector<8x128xf32>
    %cst_127 = arith.constant 1.000000e+00 : f32
    %293 = vector.broadcast %cst_127 : f32 to vector<8x128xf32>
    %294 = arith.addf %293, %292 : vector<8x128xf32>
    %295 = arith.divf %293, %294 : vector<8x128xf32>
    %296 = vector.extract_strided_slice %283 {offsets = [0, 256], sizes = [8, 128], strides = [1, 1]} : vector<8x512xf32> to vector<8x128xf32>
    %297 = math.tanh %296 : vector<8x128xf32>
    %298 = vector.extract_strided_slice %283 {offsets = [0, 384], sizes = [8, 128], strides = [1, 1]} : vector<8x512xf32> to vector<8x128xf32>
    %299 = arith.negf %298 : vector<8x128xf32>
    %300 = math.exp %299 : vector<8x128xf32>
    %cst_128 = arith.constant 1.000000e+00 : f32
    %301 = vector.broadcast %cst_128 : f32 to vector<8x128xf32>
    %302 = arith.addf %301, %300 : vector<8x128xf32>
    %303 = arith.divf %301, %302 : vector<8x128xf32>
    %c0_129 = arith.constant 0 : index
    %c0_130 = arith.constant 0 : index
    %304 = vector.load %arg5[%c0_129, %c0_130] : memref<8x128xf32, #tpu.memory_space<vmem>>, vector<8x128xf32>
    %305 = arith.mulf %295, %304 : vector<8x128xf32>
    %306 = arith.mulf %289, %297 : vector<8x128xf32>
    %307 = arith.addf %305, %306 : vector<8x128xf32>
    %308 = math.tanh %307 : vector<8x128xf32>
    %309 = arith.mulf %303, %308 : vector<8x128xf32>
    %c0_131 = arith.constant 0 : index
    %c0_132 = arith.constant 0 : index
    %310 = vector.load %arg5[%c0_131, %c0_132] : memref<8x128xf32, #tpu.memory_space<vmem>>, vector<8x128xf32>
    tpu.vector_store %arg5[%c0_131, %c0_132], %307 {strides = array<i32>} : memref<8x128xf32, #tpu.memory_space<vmem>>, vector<8x128xf32>,
    %c0_133 = arith.constant 0 : index
    %c0_134 = arith.constant 0 : index
    %311 = vector.load %arg4[%c0_133, %c0_134] : memref<8x128xf32, #tpu.memory_space<vmem>>, vector<8x128xf32>
    tpu.vector_store %arg4[%c0_133, %c0_134], %309 {strides = array<i32>} : memref<8x128xf32, #tpu.memory_space<vmem>>, vector<8x128xf32>,
    %312 = arith.truncf %309 : vector<8x128xf32> to vector<8x128xbf16>
    %c7_135 = arith.constant 7 : index
    %c0_136 = arith.constant 0 : index
    %c0_137 = arith.constant 0 : index
    %313 = vector.load %arg3[%c7_135, %c0_136, %c0_137] : memref<9x8x128xbf16, #tpu.memory_space<vmem>>, vector<1x8x128xbf16>
    %314 = vector.shape_cast %313 : vector<1x8x128xbf16> to vector<8x128xbf16>
    %315 = vector.shape_cast %312 : vector<8x128xbf16> to vector<1x8x128xbf16>
    tpu.vector_store %arg3[%c7_135, %c0_136, %c0_137], %315 {strides = array<i32>} : memref<9x8x128xbf16, #tpu.memory_space<vmem>>, vector<1x8x128xbf16>,
    %c8 = arith.constant 8 : index
    %c0_138 = arith.constant 0 : index
    %c0_139 = arith.constant 0 : index
    %316 = vector.load %arg1[%c8, %c0_138, %c0_139] : memref<9x8x512xbf16, #tpu.memory_space<vmem>>, vector<1x8x512xbf16>
    %317 = vector.shape_cast %316 : vector<1x8x512xbf16> to vector<8x512xbf16>
    %318 = arith.extf %317 : vector<8x512xbf16> to vector<8x512xf32>
    %c0_140 = arith.constant 0 : index
    %c0_141 = arith.constant 0 : index
    %319 = vector.load %arg4[%c0_140, %c0_141] : memref<8x128xf32, #tpu.memory_space<vmem>>, vector<8x128xf32>
    %320 = arith.truncf %319 : vector<8x128xf32> to vector<8x128xbf16>
    %cst_142 = arith.constant dense<0.000000e+00> : vector<8x512xf32>
    %321 = tpu.matmul %320, %3, %cst_142 {dimension_numbers = #tpu.dot_dimension_numbers<[1], [0], [0], [1], [0, 0, 1, 1], [], []>} : vector<8x128xbf16>, vector<128x512xbf16>, vector<8x512xf32> -> vector<8x512xf32>
    %322 = arith.addf %318, %321 : vector<8x512xf32>
    %323 = vector.extract_strided_slice %322 {offsets = [0, 0], sizes = [8, 128], strides = [1, 1]} : vector<8x512xf32> to vector<8x128xf32>
    %324 = arith.negf %323 : vector<8x128xf32>
    %325 = math.exp %324 : vector<8x128xf32>
    %cst_143 = arith.constant 1.000000e+00 : f32
    %326 = vector.broadcast %cst_143 : f32 to vector<8x128xf32>
    %327 = arith.addf %326, %325 : vector<8x128xf32>
    %328 = arith.divf %326, %327 : vector<8x128xf32>
    %329 = vector.extract_strided_slice %322 {offsets = [0, 128], sizes = [8, 128], strides = [1, 1]} : vector<8x512xf32> to vector<8x128xf32>
    %330 = arith.negf %329 : vector<8x128xf32>
    %331 = math.exp %330 : vector<8x128xf32>
    %cst_144 = arith.constant 1.000000e+00 : f32
    %332 = vector.broadcast %cst_144 : f32 to vector<8x128xf32>
    %333 = arith.addf %332, %331 : vector<8x128xf32>
    %334 = arith.divf %332, %333 : vector<8x128xf32>
    %335 = vector.extract_strided_slice %322 {offsets = [0, 256], sizes = [8, 128], strides = [1, 1]} : vector<8x512xf32> to vector<8x128xf32>
    %336 = math.tanh %335 : vector<8x128xf32>
    %337 = vector.extract_strided_slice %322 {offsets = [0, 384], sizes = [8, 128], strides = [1, 1]} : vector<8x512xf32> to vector<8x128xf32>
    %338 = arith.negf %337 : vector<8x128xf32>
    %339 = math.exp %338 : vector<8x128xf32>
    %cst_145 = arith.constant 1.000000e+00 : f32
    %340 = vector.broadcast %cst_145 : f32 to vector<8x128xf32>
    %341 = arith.addf %340, %339 : vector<8x128xf32>
    %342 = arith.divf %340, %341 : vector<8x128xf32>
    %c0_146 = arith.constant 0 : index
    %c0_147 = arith.constant 0 : index
    %343 = vector.load %arg5[%c0_146, %c0_147] : memref<8x128xf32, #tpu.memory_space<vmem>>, vector<8x128xf32>
    %344 = arith.mulf %334, %343 : vector<8x128xf32>
    %345 = arith.mulf %328, %336 : vector<8x128xf32>
    %346 = arith.addf %344, %345 : vector<8x128xf32>
    %347 = math.tanh %346 : vector<8x128xf32>
    %348 = arith.mulf %342, %347 : vector<8x128xf32>
    %c0_148 = arith.constant 0 : index
    %c0_149 = arith.constant 0 : index
    %349 = vector.load %arg5[%c0_148, %c0_149] : memref<8x128xf32, #tpu.memory_space<vmem>>, vector<8x128xf32>
    tpu.vector_store %arg5[%c0_148, %c0_149], %346 {strides = array<i32>} : memref<8x128xf32, #tpu.memory_space<vmem>>, vector<8x128xf32>,
    %c0_150 = arith.constant 0 : index
    %c0_151 = arith.constant 0 : index
    %350 = vector.load %arg4[%c0_150, %c0_151] : memref<8x128xf32, #tpu.memory_space<vmem>>, vector<8x128xf32>
    tpu.vector_store %arg4[%c0_150, %c0_151], %348 {strides = array<i32>} : memref<8x128xf32, #tpu.memory_space<vmem>>, vector<8x128xf32>,
    %351 = arith.truncf %348 : vector<8x128xf32> to vector<8x128xbf16>
    %c8_152 = arith.constant 8 : index
    %c0_153 = arith.constant 0 : index
    %c0_154 = arith.constant 0 : index
    %352 = vector.load %arg3[%c8_152, %c0_153, %c0_154] : memref<9x8x128xbf16, #tpu.memory_space<vmem>>, vector<1x8x128xbf16>
    %353 = vector.shape_cast %352 : vector<1x8x128xbf16> to vector<8x128xbf16>
    %354 = vector.shape_cast %351 : vector<8x128xbf16> to vector<1x8x128xbf16>
    tpu.vector_store %arg3[%c8_152, %c0_153, %c0_154], %354 {strides = array<i32>} : memref<9x8x128xbf16, #tpu.memory_space<vmem>>, vector<1x8x128xbf16>,
    return
  }
  func.func @transform_0(%arg0: i32) -> (i32, i32, i32) {
    %c0_i32 = arith.constant 0 : i32
    %c0_i32_0 = arith.constant 0 : i32
    %c0_i32_1 = arith.constant 0 : i32
    return %arg0, %c0_i32, %c0_i32_0 : i32, i32, i32
  }
  func.func @transform_1(%arg0: i32) -> (i32, i32) {
    %c0_i32 = arith.constant 0 : i32
    %c0_i32_0 = arith.constant 0 : i32
    %c0_i32_1 = arith.constant 0 : i32
    return %c0_i32, %c0_i32_0 : i32, i32
  }
  func.func @transform_2(%arg0: i32) -> (i32, i32, i32) {
    %c0_i32 = arith.constant 0 : i32
    %c0_i32_0 = arith.constant 0 : i32
    %c0_i32_1 = arith.constant 0 : i32
    return %arg0, %c0_i32, %c0_i32_0 : i32, i32, i32
  }
}

module attributes {stable_mosaic.version = 11 : i64} {
  func.func @matmul_bias_kernel(%arg0: i32, %arg1: i32, %arg2: i32, %arg3: memref<72x128xbf16, #tpu.memory_space<vmem>>, %arg4: memref<128x128xbf16, #tpu.memory_space<vmem>>, %arg5: memref<1x128xf32, #tpu.memory_space<vmem>>, %arg6: memref<72x128xf32, #tpu.memory_space<vmem>>, %arg7: memref<72x128xf32, #tpu.memory_space<vmem>>) attributes {dimension_semantics = [#tpu.dimension_semantics<parallel>, #tpu.dimension_semantics<parallel>, #tpu.dimension_semantics<arbitrary>], iteration_bounds = array<i64: 1, 1, 1>, scalar_prefetch = 0 : i64, scratch_operands = 1 : i64, tpu.core_type = #tpu.core_type<tc>, window_params = [{transform_indices = @transform_0, window_bounds = array<i64: 72, 128>}, {transform_indices = @transform_1, window_bounds = array<i64: 128, 128>}, {transform_indices = @transform_2, window_bounds = array<i64: 1, 128>}, {transform_indices = @transform_3, window_bounds = array<i64: 72, 128>}]} {
    %c0_i32 = arith.constant 0 : i32
    %0 = arith.cmpi eq, %arg2, %c0_i32 : i32
    %1 = arith.extui %0 : i1 to i32
    %c0_i32_0 = arith.constant 0 : i32
    %2 = arith.cmpi ne, %1, %c0_i32_0 : i32
    scf.if %2 {
      %cst_10 = arith.constant 0.000000e+00 : f32
      %12 = vector.broadcast %cst_10 : f32 to vector<72x128xf32>
      %c0_11 = arith.constant 0 : index
      %c0_12 = arith.constant 0 : index
      %13 = vector.load %arg7[%c0_11, %c0_12] : memref<72x128xf32, #tpu.memory_space<vmem>>, vector<72x128xf32>
      tpu.vector_store %arg7[%c0_11, %c0_12], %12 {strides = array<i32>} : memref<72x128xf32, #tpu.memory_space<vmem>>, vector<72x128xf32>,
    } else {
    }
    %c0 = arith.constant 0 : index
    %c0_1 = arith.constant 0 : index
    %3 = vector.load %arg7[%c0, %c0_1] : memref<72x128xf32, #tpu.memory_space<vmem>>, vector<72x128xf32>
    %c0_2 = arith.constant 0 : index
    %c0_3 = arith.constant 0 : index
    %4 = vector.load %arg3[%c0_2, %c0_3] : memref<72x128xbf16, #tpu.memory_space<vmem>>, vector<72x128xbf16>
    %c0_4 = arith.constant 0 : index
    %c0_5 = arith.constant 0 : index
    %5 = vector.load %arg4[%c0_4, %c0_5] : memref<128x128xbf16, #tpu.memory_space<vmem>>, vector<128x128xbf16>
    %cst = arith.constant dense<0.000000e+00> : vector<72x128xf32>
    %6 = tpu.matmul %4, %5, %cst {dimension_numbers = #tpu.dot_dimension_numbers<[1], [0], [0], [1], [0, 0, 1, 1], [], []>} : vector<72x128xbf16>, vector<128x128xbf16>, vector<72x128xf32> -> vector<72x128xf32>
    %7 = arith.addf %3, %6 : vector<72x128xf32>
    %c0_6 = arith.constant 0 : index
    %c0_7 = arith.constant 0 : index
    %8 = vector.load %arg7[%c0_6, %c0_7] : memref<72x128xf32, #tpu.memory_space<vmem>>, vector<72x128xf32>
    tpu.vector_store %arg7[%c0_6, %c0_7], %7 {strides = array<i32>} : memref<72x128xf32, #tpu.memory_space<vmem>>, vector<72x128xf32>,
    %c0_i32_8 = arith.constant 0 : i32
    %9 = arith.cmpi eq, %arg2, %c0_i32_8 : i32
    %10 = arith.extui %9 : i1 to i32
    %c0_i32_9 = arith.constant 0 : i32
    %11 = arith.cmpi ne, %10, %c0_i32_9 : i32
    scf.if %11 {
      %c0_10 = arith.constant 0 : index
      %c0_11 = arith.constant 0 : index
      %12 = vector.load %arg7[%c0_10, %c0_11] : memref<72x128xf32, #tpu.memory_space<vmem>>, vector<72x128xf32>
      %c0_12 = arith.constant 0 : index
      %c0_13 = arith.constant 0 : index
      %13 = vector.load %arg5[%c0_12, %c0_13] : memref<1x128xf32, #tpu.memory_space<vmem>>, vector<1x128xf32>
      %14 = vector.broadcast %13 : vector<1x128xf32> to vector<72x128xf32>
      %15 = arith.addf %12, %14 : vector<72x128xf32>
      %c0_14 = arith.constant 0 : index
      %c0_15 = arith.constant 0 : index
      %16 = vector.load %arg6[%c0_14, %c0_15] : memref<72x128xf32, #tpu.memory_space<vmem>>, vector<72x128xf32>
      tpu.vector_store %arg6[%c0_14, %c0_15], %15 {strides = array<i32>} : memref<72x128xf32, #tpu.memory_space<vmem>>, vector<72x128xf32>,
    } else {
    }
    return
  }
  func.func @transform_0(%arg0: i32, %arg1: i32, %arg2: i32) -> (i32, i32) {
    %c0_i32 = arith.constant 0 : i32
    return %arg0, %arg2 : i32, i32
  }
  func.func @transform_1(%arg0: i32, %arg1: i32, %arg2: i32) -> (i32, i32) {
    %c0_i32 = arith.constant 0 : i32
    return %arg2, %arg1 : i32, i32
  }
  func.func @transform_2(%arg0: i32, %arg1: i32, %arg2: i32) -> (i32, i32) {
    %c0_i32 = arith.constant 0 : i32
    %c0_i32_0 = arith.constant 0 : i32
    return %c0_i32, %arg1 : i32, i32
  }
  func.func @transform_3(%arg0: i32, %arg1: i32, %arg2: i32) -> (i32, i32) {
    %c0_i32 = arith.constant 0 : i32
    return %arg0, %arg1 : i32, i32
  }
}

</mosaic_0001>

<llo_original>
// kernel: cnn_to_rnn_forward.8
$region0: #{cnn_to_rnn_forward.8}
  #allocation0 [shape = 'u32[]', space=smem, size = 0x4, offset = 0x4, fixed_abs, tag = 'smem constant byte address 0x4 - core index']
  #allocation1 [shape = 'u32[72,128]{1,0:T(1,128)}', space=vmem, size = 0x9000, scoped, tag = 'internal scratch']
  #allocation2 [shape = 'f32[8,128]{1,0:T(8,128)}', space=vmem, size = 0x1000, scoped, tag = 'scratch operand']
  %s0 = inlined_call_operand.vmem [shape: bf16[8,128], index: 0, kind: input, shape index: {}]
  %s1 = inlined_call_operand.vmem [shape: bf16[128,128], index: 1, kind: input, shape index: {}]
  %s2 = inlined_call_operand.vmem [shape: f32[1,128], index: 2, kind: input, shape index: {}]
  %s3 = inlined_call_operand.vmem [shape: bf16[8,128], index: 3, kind: output, shape index: {}]
  %s4 = sld [smem:[#allocation0]]
  $region30: #{cnn_to_rnn_forward.8} parent=0
    _
  %s6 = ssub.s32 1, %s4
  %s7 = scalar_select 0, %s6, %s4
  // Predicated region
  $region2: #{cnn_to_rnn_forward.8} parent=0 // pred_check
    _
  $region3: #{cnn_to_rnn_forward.8} parent=0 // pred_check_branch
    %9 = sbr.rel (0) target = $region5
  $region4: #{cnn_to_rnn_forward.8} parent=0 // pred_region
    _
  $region5: #{cnn_to_rnn_forward.8} parent=0 // pred_fallthru
    _
  // Predicated region
  $region6: #{cnn_to_rnn_forward.8} parent=0 // pred_check
    _
  $region7: #{cnn_to_rnn_forward.8} parent=0 // pred_check_branch
    %11 = sbr.rel (0) target = $region9
  $region8: #{cnn_to_rnn_forward.8} parent=0 // pred_region
    _
  $region9: #{cnn_to_rnn_forward.8} parent=0 // pred_fallthru
    _
  // Predicated region
  $region10: #{cnn_to_rnn_forward.8} parent=0 // pred_check
    _
  $region11: #{cnn_to_rnn_forward.8} parent=0 // pred_check_branch
    %13 = sbr.rel (0) target = $region13
  $region12: #{cnn_to_rnn_forward.8} parent=0 // pred_region
    _
  $region13: #{cnn_to_rnn_forward.8} parent=0 // pred_fallthru
    _
  %p14 = scmp.eq.s32.totalorder 0, 0
  // Predicated region
  $region14: #{cnn_to_rnn_forward.8} parent=0 // pred_check
    %p15 = pneg %p14
  $region15: #{cnn_to_rnn_forward.8} parent=0 // pred_check_branch
    %17 = sbr.rel (%p15) target = $region17
  $region16: #{cnn_to_rnn_forward.8} parent=0 // pred_region
    %18 = vst [vmem:[#allocation2] sm:$0xff] 0.0
  $region17: #{cnn_to_rnn_forward.8} parent=0 // pred_fallthru
    _
  %v19 = vld [vmem:[#allocation2] sm:$0xff]
  %v20 = vld [vmem:[%s0] sm:$0xf]
  %v21 = vld [vmem:[%s1] sm:$0xf]
  %v22 = vld [vmem:[%s1 + $0x4] sm:$0xf]
  %v23 = vld [vmem:[%s1 + $0x8] sm:$0xf]
  %v24 = vld [vmem:[%s1 + $0xc] sm:$0xf]
  %v25 = vld [vmem:[%s1 + $0x10] sm:$0xf]
  %v26 = vld [vmem:[%s1 + $0x14] sm:$0xf]
  %v27 = vld [vmem:[%s1 + $0x18] sm:$0xf]
  %v28 = vld [vmem:[%s1 + $0x1c] sm:$0xf]
  %v29 = vld [vmem:[%s1 + $0x20] sm:$0xf]
  %v30 = vld [vmem:[%s1 + $0x24] sm:$0xf]
  %v31 = vld [vmem:[%s1 + $0x28] sm:$0xf]
  %v32 = vld [vmem:[%s1 + $0x2c] sm:$0xf]
  %v33 = vld [vmem:[%s1 + $0x30] sm:$0xf]
  %v34 = vld [vmem:[%s1 + $0x34] sm:$0xf]
  %v35 = vld [vmem:[%s1 + $0x38] sm:$0xf]
  %v36 = vld [vmem:[%s1 + $0x3c] sm:$0xf]
  %v53 = vunpack.c.l.b16 %v21
  %v54 = vunpack.c.l.b16 %v22
  %v55 = vunpack.c.l.b16 %v23
  %v56 = vunpack.c.l.b16 %v24
  %v57 = vunpack.c.l.b16 %v25
  %v58 = vunpack.c.l.b16 %v26
  %v59 = vunpack.c.l.b16 %v27
  %v60 = vunpack.c.l.b16 %v28
  %v61 = vunpack.c.l.b16 %v29
  %v62 = vunpack.c.l.b16 %v30
  %v63 = vunpack.c.l.b16 %v31
  %v64 = vunpack.c.l.b16 %v32
  %v65 = vunpack.c.l.b16 %v33
  %v66 = vunpack.c.l.b16 %v34
  %v67 = vunpack.c.l.b16 %v35
  %v68 = vunpack.c.l.b16 %v36
  %v69 = vpack.c.b16 %v54, %v53
  %v70 = vpack.c.b16 %v56, %v55
  %v71 = vpack.c.b16 %v58, %v57
  %v72 = vpack.c.b16 %v60, %v59
  %v73 = vpack.c.b16 %v62, %v61
  %v74 = vpack.c.b16 %v64, %v63
  %v75 = vpack.c.b16 %v66, %v65
  %v76 = vpack.c.b16 %v68, %v67
  %85 = vmatpush.bf16.msra.mxu0 %v76
  %86 = vmatpush.bf16.msra.mxu0 %v75
  %87 = vmatpush.bf16.msra.mxu0 %v74
  %88 = vmatpush.bf16.msra.mxu0 %v73
  %89 = vmatpush.bf16.msra.mxu0 %v72
  %90 = vmatpush.bf16.msra.mxu0 %v71
  %91 = vmatpush.bf16.msra.mxu0 %v70
  %92 = vmatpush.bf16.msra.mxu0 %v69
  %93 = vmatmul.bf16.gmra.mxu0 %v20
  %v94 = vpop.f32.mrf.mxu0
  %v95 = vadd.f32 0.0, %v94
  %v96 = vpop.f32.mrf.mxu0
  %97 = vdwg.mxu0
  %v98 = vadd.f32 %v19, %v95
  %99 = vst [vmem:[#allocation2] sm:$0xff] %v98
  // Predicated region
  $region18: #{cnn_to_rnn_forward.8} parent=0 // pred_check
    %p100 = pneg %p14
  $region19: #{cnn_to_rnn_forward.8} parent=0 // pred_check_branch
    %102 = sbr.rel (%p100) target = $region21
  $region20: #{cnn_to_rnn_forward.8} parent=0 // pred_region
    %v103 = vld [vmem:[#allocation2] sm:$0xff]
    %v104 = vld [vmem:[%s2] sm:$0x1]
    %v106 = vperm.slane %v104, 0
    %v108 = vadd.f32 %v103, %v106
    %v109 = vmax.f32 %v108, 0.0
    %v110 = vpack.c.bf16 %v109, %v109
    %111 = vst [vmem:[%s3] sm:$0xf] %v110
  $region21: #{cnn_to_rnn_forward.8} parent=0 // pred_fallthru
    _
  // Predicated region
  $region22: #{cnn_to_rnn_forward.8} parent=0 // pred_check
    _
  $region23: #{cnn_to_rnn_forward.8} parent=0 // pred_check_branch
    %113 = sbr.rel (0) target = $region25
  $region24: #{cnn_to_rnn_forward.8} parent=0 // pred_region
    _
  $region25: #{cnn_to_rnn_forward.8} parent=0 // pred_fallthru
    _
  // Predicated region
  $region26: #{cnn_to_rnn_forward.8} parent=0 // pred_check
    _
  $region27: #{cnn_to_rnn_forward.8} parent=0 // pred_check_branch
    %115 = sbr.rel (0) target = $region29
  $region28: #{cnn_to_rnn_forward.8} parent=0 // pred_region
    _
  $region29: #{cnn_to_rnn_forward.8} parent=0 // pred_fallthru
    _

// kernel: cnn_to_rnn_forward.7
$region0: #{cnn_to_rnn_forward.7}
  #allocation0 [shape = 'u32[]', space=smem, size = 0x4, offset = 0x4, fixed_abs, tag = 'smem constant byte address 0x4 - core index']
  #allocation1 [shape = 'u32[72,128]{1,0:T(1,128)}', space=vmem, size = 0x9000, scoped, tag = 'internal scratch']
  %s0 = inlined_call_operand.vmem [shape: bf16[2,256,128], index: 0, kind: input, shape index: {}]
  %s1 = inlined_call_operand.vmem [shape: bf16[128,128], index: 1, kind: input, shape index: {}]
  %s2 = inlined_call_operand.vmem [shape: f32[1,128], index: 2, kind: input, shape index: {}]
  %s3 = inlined_call_operand.vmem [shape: f32[2,128], index: 3, kind: output, shape index: {}]
  %s4 = sld [smem:[#allocation0]]
  $region30: #{cnn_to_rnn_forward.7} parent=0
    _
  %s6 = ssub.s32 1, %s4
  %s7 = scalar_select 0, %s6, %s4
  // Predicated region
  $region2: #{cnn_to_rnn_forward.7} parent=0 // pred_check
    _
  $region3: #{cnn_to_rnn_forward.7} parent=0 // pred_check_branch
    %9 = sbr.rel (0) target = $region5
  $region4: #{cnn_to_rnn_forward.7} parent=0 // pred_region
    _
  $region5: #{cnn_to_rnn_forward.7} parent=0 // pred_fallthru
    _
  // Predicated region
  $region6: #{cnn_to_rnn_forward.7} parent=0 // pred_check
    _
  $region7: #{cnn_to_rnn_forward.7} parent=0 // pred_check_branch
    %11 = sbr.rel (0) target = $region9
  $region8: #{cnn_to_rnn_forward.7} parent=0 // pred_region
    _
  $region9: #{cnn_to_rnn_forward.7} parent=0 // pred_fallthru
    _
  // Predicated region
  $region10: #{cnn_to_rnn_forward.7} parent=0 // pred_check
    _
  $region11: #{cnn_to_rnn_forward.7} parent=0 // pred_check_branch
    %13 = sbr.rel (0) target = $region13
  $region12: #{cnn_to_rnn_forward.7} parent=0 // pred_region
    _
  $region13: #{cnn_to_rnn_forward.7} parent=0 // pred_fallthru
    _
  %p14 = scmp.eq.s32.totalorder 0, 0
  // Predicated region
  $region14: #{cnn_to_rnn_forward.7} parent=0 // pred_check
    %p15 = pneg %p14
  $region15: #{cnn_to_rnn_forward.7} parent=0 // pred_check_branch
    %17 = sbr.rel (%p15) target = $region17
  $region16: #{cnn_to_rnn_forward.7} parent=0 // pred_region
    %18 = vst [vmem:[%s3] sm:$0x3] 0.0
  $region17: #{cnn_to_rnn_forward.7} parent=0 // pred_fallthru
    _
  %v19 = vld [vmem:[%s0] sm:$0xf]
  %v20 = vld [vmem:[%s0 + $0x4] sm:$0xf]
  %v21 = vld [vmem:[%s0 + $0x8] sm:$0xf]
  %v22 = vld [vmem:[%s0 + $0xc] sm:$0xf]
  %v23 = vld [vmem:[%s0 + $0x10] sm:$0xf]
  %v24 = vld [vmem:[%s0 + $0x14] sm:$0xf]
  %v25 = vld [vmem:[%s0 + $0x18] sm:$0xf]
  %v26 = vld [vmem:[%s0 + $0x1c] sm:$0xf]
  %v27 = vld [vmem:[%s0 + $0x20] sm:$0xf]
  %v28 = vld [vmem:[%s0 + $0x24] sm:$0xf]
  %v29 = vld [vmem:[%s0 + $0x28] sm:$0xf]
  %v30 = vld [vmem:[%s0 + $0x2c] sm:$0xf]
  %v31 = vld [vmem:[%s0 + $0x30] sm:$0xf]
  %v32 = vld [vmem:[%s0 + $0x34] sm:$0xf]
  %v33 = vld [vmem:[%s0 + $0x38] sm:$0xf]
  %v34 = vld [vmem:[%s0 + $0x3c] sm:$0xf]
  %v35 = vld [vmem:[%s0 + $0x40] sm:$0xf]
  %v36 = vld [vmem:[%s0 + $0x44] sm:$0xf]
  %v37 = vld [vmem:[%s0 + $0x48] sm:$0xf]
  %v38 = vld [vmem:[%s0 + $0x4c] sm:$0xf]
  %v39 = vld [vmem:[%s0 + $0x50] sm:$0xf]
  %v40 = vld [vmem:[%s0 + $0x54] sm:$0xf]
  %v41 = vld [vmem:[%s0 + $0x58] sm:$0xf]
  %v42 = vld [vmem:[%s0 + $0x5c] sm:$0xf]
  %v43 = vld [vmem:[%s0 + $0x60] sm:$0xf]
  %v44 = vld [vmem:[%s0 + $0x64] sm:$0xf]
  %v45 = vld [vmem:[%s0 + $0x68] sm:$0xf]
  %v46 = vld [vmem:[%s0 + $0x6c] sm:$0xf]
  %v47 = vld [vmem:[%s0 + $0x70] sm:$0xf]
  %v48 = vld [vmem:[%s0 + $0x74] sm:$0xf]
  %v49 = vld [vmem:[%s0 + $0x78] sm:$0xf]
  %v50 = vld [vmem:[%s0 + $0x7c] sm:$0xf]
  %v51 = vld [vmem:[%s0 + $0x80] sm:$0xf]
  %v52 = vld [vmem:[%s0 + $0x84] sm:$0xf]
  %v53 = vld [vmem:[%s0 + $0x88] sm:$0xf]
  %v54 = vld [vmem:[%s0 + $0x8c] sm:$0xf]
  %v55 = vld [vmem:[%s0 + $0x90] sm:$0xf]
  %v56 = vld [vmem:[%s0 + $0x94] sm:$0xf]
  %v57 = vld [vmem:[%s0 + $0x98] sm:$0xf]
  %v58 = vld [vmem:[%s0 + $0x9c] sm:$0xf]
  %v59 = vld [vmem:[%s0 + $0xa0] sm:$0xf]
  %v60 = vld [vmem:[%s0 + $0xa4] sm:$0xf]
  %v61 = vld [vmem:[%s0 + $0xa8] sm:$0xf]
  %v62 = vld [vmem:[%s0 + $0xac] sm:$0xf]
  %v63 = vld [vmem:[%s0 + $0xb0] sm:$0xf]
  %v64 = vld [vmem:[%s0 + $0xb4] sm:$0xf]
  %v65 = vld [vmem:[%s0 + $0xb8] sm:$0xf]
  %v66 = vld [vmem:[%s0 + $0xbc] sm:$0xf]
  %v67 = vld [vmem:[%s0 + $0xc0] sm:$0xf]
  %v68 = vld [vmem:[%s0 + $0xc4] sm:$0xf]
  %v69 = vld [vmem:[%s0 + $0xc8] sm:$0xf]
  %v70 = vld [vmem:[%s0 + $0xcc] sm:$0xf]
  %v71 = vld [vmem:[%s0 + $0xd0] sm:$0xf]
  %v72 = vld [vmem:[%s0 + $0xd4] sm:$0xf]
  %v73 = vld [vmem:[%s0 + $0xd8] sm:$0xf]
  %v74 = vld [vmem:[%s0 + $0xdc] sm:$0xf]
  %v75 = vld [vmem:[%s0 + $0xe0] sm:$0xf]
  %v76 = vld [vmem:[%s0 + $0xe4] sm:$0xf]
  %v77 = vld [vmem:[%s0 + $0xe8] sm:$0xf]
  %v78 = vld [vmem:[%s0 + $0xec] sm:$0xf]
  %v79 = vld [vmem:[%s0 + $0xf0] sm:$0xf]
  %v80 = vld [vmem:[%s0 + $0xf4] sm:$0xf]
  %v81 = vld [vmem:[%s0 + $0xf8] sm:$0xf]
  %v82 = vld [vmem:[%s0 + $0xfc] sm:$0xf]
  %v83 = vld [vmem:[%s1] sm:$0xf]
  %v84 = vld [vmem:[%s1 + $0x4] sm:$0xf]
  %v85 = vld [vmem:[%s1 + $0x8] sm:$0xf]
  %v86 = vld [vmem:[%s1 + $0xc] sm:$0xf]
  %v87 = vld [vmem:[%s1 + $0x10] sm:$0xf]
  %v88 = vld [vmem:[%s1 + $0x14] sm:$0xf]
  %v89 = vld [vmem:[%s1 + $0x18] sm:$0xf]
  %v90 = vld [vmem:[%s1 + $0x1c] sm:$0xf]
  %v91 = vld [vmem:[%s1 + $0x20] sm:$0xf]
  %v92 = vld [vmem:[%s1 + $0x24] sm:$0xf]
  %v93 = vld [vmem:[%s1 + $0x28] sm:$0xf]
  %v94 = vld [vmem:[%s1 + $0x2c] sm:$0xf]
  %v95 = vld [vmem:[%s1 + $0x30] sm:$0xf]
  %v96 = vld [vmem:[%s1 + $0x34] sm:$0xf]
  %v97 = vld [vmem:[%s1 + $0x38] sm:$0xf]
  %v98 = vld [vmem:[%s1 + $0x3c] sm:$0xf]
  %v99 = vld [vmem:[%s2] sm:$0x1]
  %v101 = vperm.slane %v99, 0
  %v167 = vunpack.c.l.b16 %v19
  %v168 = vunpack.c.l.b16 %v20
  %v169 = vunpack.c.l.b16 %v21
  %v170 = vunpack.c.l.b16 %v22
  %v171 = vunpack.c.l.b16 %v23
  %v172 = vunpack.c.l.b16 %v24
  %v173 = vunpack.c.l.b16 %v25
  %v174 = vunpack.c.l.b16 %v26
  %v175 = vunpack.c.l.b16 %v27
  %v176 = vunpack.c.l.b16 %v28
  %v177 = vunpack.c.l.b16 %v29
  %v178 = vunpack.c.l.b16 %v30
  %v179 = vunpack.c.l.b16 %v31
  %v180 = vunpack.c.l.b16 %v32
  %v181 = vunpack.c.l.b16 %v33
  %v182 = vunpack.c.l.b16 %v34
  %v183 = vunpack.c.l.b16 %v35
  %v184 = vunpack.c.l.b16 %v36
  %v185 = vunpack.c.l.b16 %v37
  %v186 = vunpack.c.l.b16 %v38
  %v187 = vunpack.c.l.b16 %v39
  %v188 = vunpack.c.l.b16 %v40
  %v189 = vunpack.c.l.b16 %v41
  %v190 = vunpack.c.l.b16 %v42
  %v191 = vunpack.c.l.b16 %v43
  %v192 = vunpack.c.l.b16 %v44
  %v193 = vunpack.c.l.b16 %v45
  %v194 = vunpack.c.l.b16 %v46
  %v195 = vunpack.c.l.b16 %v47
  %v196 = vunpack.c.l.b16 %v48
  %v197 = vunpack.c.l.b16 %v49
  %v198 = vunpack.c.l.b16 %v50
  %v199 = vunpack.c.l.b16 %v51
  %v200 = vunpack.c.l.b16 %v52
  %v201 = vunpack.c.l.b16 %v53
  %v202 = vunpack.c.l.b16 %v54
  %v203 = vunpack.c.l.b16 %v55
  %v204 = vunpack.c.l.b16 %v56
  %v205 = vunpack.c.l.b16 %v57
  %v206 = vunpack.c.l.b16 %v58
  %v207 = vunpack.c.l.b16 %v59
  %v208 = vunpack.c.l.b16 %v60
  %v209 = vunpack.c.l.b16 %v61
  %v210 = vunpack.c.l.b16 %v62
  %v211 = vunpack.c.l.b16 %v63
  %v212 = vunpack.c.l.b16 %v64
  %v213 = vunpack.c.l.b16 %v65
  %v214 = vunpack.c.l.b16 %v66
  %v215 = vunpack.c.l.b16 %v67
  %v216 = vunpack.c.l.b16 %v68
  %v217 = vunpack.c.l.b16 %v69
  %v218 = vunpack.c.l.b16 %v70
  %v219 = vunpack.c.l.b16 %v71
  %v220 = vunpack.c.l.b16 %v72
  %v221 = vunpack.c.l.b16 %v73
  %v222 = vunpack.c.l.b16 %v74
  %v223 = vunpack.c.l.b16 %v75
  %v224 = vunpack.c.l.b16 %v76
  %v225 = vunpack.c.l.b16 %v77
  %v226 = vunpack.c.l.b16 %v78
  %v227 = vunpack.c.l.b16 %v79
  %v228 = vunpack.c.l.b16 %v80
  %v229 = vunpack.c.l.b16 %v81
  %v230 = vunpack.c.l.b16 %v82
  %v231 = vpack.c.b16 %v168, %v167
  %v232 = vpack.c.b16 %v170, %v169
  %v233 = vpack.c.b16 %v172, %v171
  %v234 = vpack.c.b16 %v174, %v173
  %v235 = vpack.c.b16 %v176, %v175
  %v236 = vpack.c.b16 %v178, %v177
  %v237 = vpack.c.b16 %v180, %v179
  %v238 = vpack.c.b16 %v182, %v181
  %v239 = vpack.c.b16 %v184, %v183
  %v240 = vpack.c.b16 %v186, %v185
  %v241 = vpack.c.b16 %v188, %v187
  %v242 = vpack.c.b16 %v190, %v189
  %v243 = vpack.c.b16 %v192, %v191
  %v244 = vpack.c.b16 %v194, %v193
  %v245 = vpack.c.b16 %v196, %v195
  %v246 = vpack.c.b16 %v198, %v197
  %v247 = vpack.c.b16 %v200, %v199
  %v248 = vpack.c.b16 %v202, %v201
  %v249 = vpack.c.b16 %v204, %v203
  %v250 = vpack.c.b16 %v206, %v205
  %v251 = vpack.c.b16 %v208, %v207
  %v252 = vpack.c.b16 %v210, %v209
  %v253 = vpack.c.b16 %v212, %v211
  %v254 = vpack.c.b16 %v214, %v213
  %v255 = vpack.c.b16 %v216, %v215
  %v256 = vpack.c.b16 %v218, %v217
  %v257 = vpack.c.b16 %v220, %v219
  %v258 = vpack.c.b16 %v222, %v221
  %v259 = vpack.c.b16 %v224, %v223
  %v260 = vpack.c.b16 %v226, %v225
  %v261 = vpack.c.b16 %v228, %v227
  %v262 = vpack.c.b16 %v230, %v229
  %v311 = vunpack.c.l.b16 %v83
  %v312 = vunpack.c.l.b16 %v84
  %v313 = vunpack.c.l.b16 %v85
  %v314 = vunpack.c.l.b16 %v86
  %v315 = vunpack.c.l.b16 %v87
  %v316 = vunpack.c.l.b16 %v88
  %v317 = vunpack.c.l.b16 %v89
  %v318 = vunpack.c.l.b16 %v90
  %v319 = vunpack.c.l.b16 %v91
  %v320 = vunpack.c.l.b16 %v92
  %v321 = vunpack.c.l.b16 %v93
  %v322 = vunpack.c.l.b16 %v94
  %v323 = vunpack.c.l.b16 %v95
  %v324 = vunpack.c.l.b16 %v96
  %v325 = vunpack.c.l.b16 %v97
  %v326 = vunpack.c.l.b16 %v98
  %v327 = vpack.c.b16 %v312, %v311
  %v328 = vpack.c.b16 %v314, %v313
  %v329 = vpack.c.b16 %v316, %v315
  %v330 = vpack.c.b16 %v318, %v317
  %v331 = vpack.c.b16 %v320, %v319
  %v332 = vpack.c.b16 %v322, %v321
  %v333 = vpack.c.b16 %v324, %v323
  %v334 = vpack.c.b16 %v326, %v325
  %343 = vmatpush.bf16.msra.mxu0 %v334
  %344 = vmatpush.bf16.msra.mxu0 %v333
  %345 = vmatpush.bf16.msra.mxu0 %v332
  %346 = vmatpush.bf16.msra.mxu0 %v331
  %347 = vmatpush.bf16.msra.mxu0 %v330
  %348 = vmatpush.bf16.msra.mxu0 %v329
  %349 = vmatpush.bf16.msra.mxu0 %v328
  %350 = vmatpush.bf16.msra.mxu0 %v327
  %351 = vmatmul.bf16.gmra.mxu0 %v231
  %v352 = vpop.f32.mrf.mxu0
  %v353 = vadd.f32 %v101, %v352
  %v354 = vpop.f32.mrf.mxu0
  %v355 = vadd.f32 %v101, %v354
  %356 = vmatmul.bf16.gmra.mxu0 %v232
  %v357 = vpop.f32.mrf.mxu0
  %v358 = vadd.f32 %v101, %v357
  %v359 = vpop.f32.mrf.mxu0
  %v360 = vadd.f32 %v101, %v359
  %361 = vmatmul.bf16.gmra.mxu0 %v233
  %v362 = vpop.f32.mrf.mxu0
  %v363 = vadd.f32 %v101, %v362
  %v364 = vpop.f32.mrf.mxu0
  %v365 = vadd.f32 %v101, %v364
  %366 = vmatmul.bf16.gmra.mxu0 %v234
  %v367 = vpop.f32.mrf.mxu0
  %v368 = vadd.f32 %v101, %v367
  %v369 = vpop.f32.mrf.mxu0
  %v370 = vadd.f32 %v101, %v369
  %371 = vmatmul.bf16.gmra.mxu0 %v235
  %v372 = vpop.f32.mrf.mxu0
  %v373 = vadd.f32 %v101, %v372
  %v374 = vpop.f32.mrf.mxu0
  %v375 = vadd.f32 %v101, %v374
  %376 = vmatmul.bf16.gmra.mxu0 %v236
  %v377 = vpop.f32.mrf.mxu0
  %v378 = vadd.f32 %v101, %v377
  %v379 = vpop.f32.mrf.mxu0
  %v380 = vadd.f32 %v101, %v379
  %381 = vmatmul.bf16.gmra.mxu0 %v237
  %v382 = vpop.f32.mrf.mxu0
  %v383 = vadd.f32 %v101, %v382
  %v384 = vpop.f32.mrf.mxu0
  %v385 = vadd.f32 %v101, %v384
  %386 = vmatmul.bf16.gmra.mxu0 %v238
  %v387 = vpop.f32.mrf.mxu0
  %v388 = vadd.f32 %v101, %v387
  %v389 = vpop.f32.mrf.mxu0
  %v390 = vadd.f32 %v101, %v389
  %391 = vmatmul.bf16.gmra.mxu0 %v239
  %v392 = vpop.f32.mrf.mxu0
  %v393 = vadd.f32 %v101, %v392
  %v394 = vpop.f32.mrf.mxu0
  %v395 = vadd.f32 %v101, %v394
  %396 = vmatmul.bf16.gmra.mxu0 %v240
  %v397 = vpop.f32.mrf.mxu0
  %v398 = vadd.f32 %v101, %v397
  %v399 = vpop.f32.mrf.mxu0
  %v400 = vadd.f32 %v101, %v399
  %401 = vmatmul.bf16.gmra.mxu0 %v241
  %v402 = vpop.f32.mrf.mxu0
  %v403 = vadd.f32 %v101, %v402
  %v404 = vpop.f32.mrf.mxu0
  %v405 = vadd.f32 %v101, %v404
  %406 = vmatmul.bf16.gmra.mxu0 %v242
  %v407 = vpop.f32.mrf.mxu0
  %v408 = vadd.f32 %v101, %v407
  %v409 = vpop.f32.mrf.mxu0
  %v410 = vadd.f32 %v101, %v409
  %411 = vmatmul.bf16.gmra.mxu0 %v243
  %v412 = vpop.f32.mrf.mxu0
  %v413 = vadd.f32 %v101, %v412
  %v414 = vpop.f32.mrf.mxu0
  %v415 = vadd.f32 %v101, %v414
  %416 = vmatmul.bf16.gmra.mxu0 %v244
  %v417 = vpop.f32.mrf.mxu0
  %v418 = vadd.f32 %v101, %v417
  %v419 = vpop.f32.mrf.mxu0
  %v420 = vadd.f32 %v101, %v419
  %421 = vmatmul.bf16.gmra.mxu0 %v245
  %v422 = vpop.f32.mrf.mxu0
  %v423 = vadd.f32 %v101, %v422
  %v424 = vpop.f32.mrf.mxu0
  %v425 = vadd.f32 %v101, %v424
  %426 = vmatmul.bf16.gmra.mxu0 %v246
  %v427 = vpop.f32.mrf.mxu0
  %v428 = vadd.f32 %v101, %v427
  %v429 = vpop.f32.mrf.mxu0
  %v430 = vadd.f32 %v101, %v429
  %431 = vmatmul.bf16.gmra.mxu0 %v247
  %v432 = vpop.f32.mrf.mxu0
  %v433 = vadd.f32 %v101, %v432
  %v434 = vpop.f32.mrf.mxu0
  %v435 = vadd.f32 %v101, %v434
  %436 = vmatmul.bf16.gmra.mxu0 %v248
  %v437 = vpop.f32.mrf.mxu0
  %v438 = vadd.f32 %v101, %v437
  %v439 = vpop.f32.mrf.mxu0
  %v440 = vadd.f32 %v101, %v439
  %441 = vmatmul.bf16.gmra.mxu0 %v249
  %v442 = vpop.f32.mrf.mxu0
  %v443 = vadd.f32 %v101, %v442
  %v444 = vpop.f32.mrf.mxu0
  %v445 = vadd.f32 %v101, %v444
  %446 = vmatmul.bf16.gmra.mxu0 %v250
  %v447 = vpop.f32.mrf.mxu0
  %v448 = vadd.f32 %v101, %v447
  %v449 = vpop.f32.mrf.mxu0
  %v450 = vadd.f32 %v101, %v449
  %451 = vmatmul.bf16.gmra.mxu0 %v251
  %v452 = vpop.f32.mrf.mxu0
  %v453 = vadd.f32 %v101, %v452
  %v454 = vpop.f32.mrf.mxu0
  %v455 = vadd.f32 %v101, %v454
  %456 = vmatmul.bf16.gmra.mxu0 %v252
  %v457 = vpop.f32.mrf.mxu0
  %v458 = vadd.f32 %v101, %v457
  %v459 = vpop.f32.mrf.mxu0
  %v460 = vadd.f32 %v101, %v459
  %461 = vmatmul.bf16.gmra.mxu0 %v253
  %v462 = vpop.f32.mrf.mxu0
  %v463 = vadd.f32 %v101, %v462
  %v464 = vpop.f32.mrf.mxu0
  %v465 = vadd.f32 %v101, %v464
  %466 = vmatmul.bf16.gmra.mxu0 %v254
  %v467 = vpop.f32.mrf.mxu0
  %v468 = vadd.f32 %v101, %v467
  %v469 = vpop.f32.mrf.mxu0
  %v470 = vadd.f32 %v101, %v469
  %471 = vmatmul.bf16.gmra.mxu0 %v255
  %v472 = vpop.f32.mrf.mxu0
  %v473 = vadd.f32 %v101, %v472
  %v474 = vpop.f32.mrf.mxu0
  %v475 = vadd.f32 %v101, %v474
  %476 = vmatmul.bf16.gmra.mxu0 %v256
  %v477 = vpop.f32.mrf.mxu0
  %v478 = vadd.f32 %v101, %v477
  %v479 = vpop.f32.mrf.mxu0
  %v480 = vadd.f32 %v101, %v479
  %481 = vmatmul.bf16.gmra.mxu0 %v257
  %v482 = vpop.f32.mrf.mxu0
  %v483 = vadd.f32 %v101, %v482
  %v484 = vpop.f32.mrf.mxu0
  %v485 = vadd.f32 %v101, %v484
  %486 = vmatmul.bf16.gmra.mxu0 %v258
  %v487 = vpop.f32.mrf.mxu0
  %v488 = vadd.f32 %v101, %v487
  %v489 = vpop.f32.mrf.mxu0
  %v490 = vadd.f32 %v101, %v489
  %491 = vmatmul.bf16.gmra.mxu0 %v259
  %v492 = vpop.f32.mrf.mxu0
  %v493 = vadd.f32 %v101, %v492
  %v494 = vpop.f32.mrf.mxu0
  %v495 = vadd.f32 %v101, %v494
  %496 = vmatmul.bf16.gmra.mxu0 %v260
  %v497 = vpop.f32.mrf.mxu0
  %v498 = vadd.f32 %v101, %v497
  %v499 = vpop.f32.mrf.mxu0
  %v500 = vadd.f32 %v101, %v499
  %501 = vmatmul.bf16.gmra.mxu0 %v261
  %v502 = vpop.f32.mrf.mxu0
  %v503 = vadd.f32 %v101, %v502
  %v504 = vpop.f32.mrf.mxu0
  %v505 = vadd.f32 %v101, %v504
  %506 = vmatmul.bf16.gmra.mxu0 %v262
  %v507 = vpop.f32.mrf.mxu0
  %v508 = vadd.f32 %v101, %v507
  %v509 = vpop.f32.mrf.mxu0
  %v510 = vadd.f32 %v101, %v509
  %511 = vdwg.mxu0
  %v512 = vmax.f32 %v353, 0.0
  %v513 = vmax.f32 %v355, 0.0
  %v514 = vmax.f32 %v358, 0.0
  %v515 = vmax.f32 %v360, 0.0
  %v516 = vmax.f32 %v363, 0.0
  %v517 = vmax.f32 %v365, 0.0
  %v518 = vmax.f32 %v368, 0.0
  %v519 = vmax.f32 %v370, 0.0
  %v520 = vmax.f32 %v373, 0.0
  %v521 = vmax.f32 %v375, 0.0
  %v522 = vmax.f32 %v378, 0.0
  %v523 = vmax.f32 %v380, 0.0
  %v524 = vmax.f32 %v383, 0.0
  %v525 = vmax.f32 %v385, 0.0
  %v526 = vmax.f32 %v388, 0.0
  %v527 = vmax.f32 %v390, 0.0
  %v528 = vmax.f32 %v393, 0.0
  %v529 = vmax.f32 %v395, 0.0
  %v530 = vmax.f32 %v398, 0.0
  %v531 = vmax.f32 %v400, 0.0
  %v532 = vmax.f32 %v403, 0.0
  %v533 = vmax.f32 %v405, 0.0
  %v534 = vmax.f32 %v408, 0.0
  %v535 = vmax.f32 %v410, 0.0
  %v536 = vmax.f32 %v413, 0.0
  %v537 = vmax.f32 %v415, 0.0
  %v538 = vmax.f32 %v418, 0.0
  %v539 = vmax.f32 %v420, 0.0
  %v540 = vmax.f32 %v423, 0.0
  %v541 = vmax.f32 %v425, 0.0
  %v542 = vmax.f32 %v428, 0.0
  %v543 = vmax.f32 %v430, 0.0
  %v544 = vmax.f32 %v433, 0.0
  %v545 = vmax.f32 %v435, 0.0
  %v546 = vmax.f32 %v438, 0.0
  %v547 = vmax.f32 %v440, 0.0
  %v548 = vmax.f32 %v443, 0.0
  %v549 = vmax.f32 %v445, 0.0
  %v550 = vmax.f32 %v448, 0.0
  %v551 = vmax.f32 %v450, 0.0
  %v552 = vmax.f32 %v453, 0.0
  %v553 = vmax.f32 %v455, 0.0
  %v554 = vmax.f32 %v458, 0.0
  %v555 = vmax.f32 %v460, 0.0
  %v556 = vmax.f32 %v463, 0.0
  %v557 = vmax.f32 %v465, 0.0
  %v558 = vmax.f32 %v468, 0.0
  %v559 = vmax.f32 %v470, 0.0
  %v560 = vmax.f32 %v473, 0.0
  %v561 = vmax.f32 %v475, 0.0
  %v562 = vmax.f32 %v478, 0.0
  %v563 = vmax.f32 %v480, 0.0
  %v564 = vmax.f32 %v483, 0.0
  %v565 = vmax.f32 %v485, 0.0
  %v566 = vmax.f32 %v488, 0.0
  %v567 = vmax.f32 %v490, 0.0
  %v568 = vmax.f32 %v493, 0.0
  %v569 = vmax.f32 %v495, 0.0
  %v570 = vmax.f32 %v498, 0.0
  %v571 = vmax.f32 %v500, 0.0
  %v572 = vmax.f32 %v503, 0.0
  %v573 = vmax.f32 %v505, 0.0
  %v574 = vmax.f32 %v508, 0.0
  %v575 = vmax.f32 %v510, 0.0
  %v576 = vld [vmem:[%s3] sm:$0x3]
  %v577 = vadd.f32 %v512, %v513
  %v578 = vadd.f32 %v577, %v514
  %v579 = vadd.f32 %v578, %v515
  %v580 = vadd.f32 %v579, %v516
  %v581 = vadd.f32 %v580, %v517
  %v582 = vadd.f32 %v581, %v518
  %v583 = vadd.f32 %v582, %v519
  %v584 = vadd.f32 %v583, %v520
  %v585 = vadd.f32 %v584, %v521
  %v586 = vadd.f32 %v585, %v522
  %v587 = vadd.f32 %v586, %v523
  %v588 = vadd.f32 %v587, %v524
  %v589 = vadd.f32 %v588, %v525
  %v590 = vadd.f32 %v589, %v526
  %v591 = vadd.f32 %v590, %v527
  %v592 = vadd.f32 %v591, %v528
  %v593 = vadd.f32 %v592, %v529
  %v594 = vadd.f32 %v593, %v530
  %v595 = vadd.f32 %v594, %v531
  %v596 = vadd.f32 %v595, %v532
  %v597 = vadd.f32 %v596, %v533
  %v598 = vadd.f32 %v597, %v534
  %v599 = vadd.f32 %v598, %v535
  %v600 = vadd.f32 %v599, %v536
  %v601 = vadd.f32 %v600, %v537
  %v602 = vadd.f32 %v601, %v538
  %v603 = vadd.f32 %v602, %v539
  %v604 = vadd.f32 %v603, %v540
  %v605 = vadd.f32 %v604, %v541
  %v606 = vadd.f32 %v605, %v542
  %v607 = vadd.f32 %v606, %v543
  %v608 = vrot.slane %v607, 4
  %v609 = vadd.f32 %v607, %v608
  %v610 = vrot.slane %v609, 2
  %v611 = vadd.f32 %v609, %v610
  %v612 = vrot.slane %v611, 1
  %v613 = vadd.f32 %v611, %v612
  %v614 = vadd.f32 %v544, %v545
  %v615 = vadd.f32 %v614, %v546
  %v616 = vadd.f32 %v615, %v547
  %v617 = vadd.f32 %v616, %v548
  %v618 = vadd.f32 %v617, %v549
  %v619 = vadd.f32 %v618, %v550
  %v620 = vadd.f32 %v619, %v551
  %v621 = vadd.f32 %v620, %v552
  %v622 = vadd.f32 %v621, %v553
  %v623 = vadd.f32 %v622, %v554
  %v624 = vadd.f32 %v623, %v555
  %v625 = vadd.f32 %v624, %v556
  %v626 = vadd.f32 %v625, %v557
  %v627 = vadd.f32 %v626, %v558
  %v628 = vadd.f32 %v627, %v559
  %v629 = vadd.f32 %v628, %v560
  %v630 = vadd.f32 %v629, %v561
  %v631 = vadd.f32 %v630, %v562
  %v632 = vadd.f32 %v631, %v563
  %v633 = vadd.f32 %v632, %v564
  %v634 = vadd.f32 %v633, %v565
  %v635 = vadd.f32 %v634, %v566
  %v636 = vadd.f32 %v635, %v567
  %v637 = vadd.f32 %v636, %v568
  %v638 = vadd.f32 %v637, %v569
  %v639 = vadd.f32 %v638, %v570
  %v640 = vadd.f32 %v639, %v571
  %v641 = vadd.f32 %v640, %v572
  %v642 = vadd.f32 %v641, %v573
  %v643 = vadd.f32 %v642, %v574
  %v644 = vadd.f32 %v643, %v575
  %v645 = vrot.slane %v644, 4
  %v646 = vadd.f32 %v644, %v645
  %v647 = vrot.slane %v646, 2
  %v648 = vadd.f32 %v646, %v647
  %v649 = vrot.slane %v648, 1
  %v650 = vadd.f32 %v648, %v649
  %vm653 = vcmask 1041409
  %v654 = vsel %vm653, %v650, %v613
  %v656 = vadd.f32 %v576, %v654
  %657 = vst [vmem:[%s3] sm:$0x3] %v656
  // Predicated region
  $region18: #{cnn_to_rnn_forward.7} parent=0 // pred_check
    %p658 = pneg %p14
  $region19: #{cnn_to_rnn_forward.7} parent=0 // pred_check_branch
    %660 = sbr.rel (%p658) target = $region21
  $region20: #{cnn_to_rnn_forward.7} parent=0 // pred_region
    %v661 = vld [vmem:[%s3] sm:$0x3]
    %v662 = vmul.f32 %v661, 0.00390625
    %663 = vst [vmem:[%s3] sm:$0x3] %v662
  $region21: #{cnn_to_rnn_forward.7} parent=0 // pred_fallthru
    _
  // Predicated region
  $region22: #{cnn_to_rnn_forward.7} parent=0 // pred_check
    _
  $region23: #{cnn_to_rnn_forward.7} parent=0 // pred_check_branch
    %665 = sbr.rel (0) target = $region25
  $region24: #{cnn_to_rnn_forward.7} parent=0 // pred_region
    _
  $region25: #{cnn_to_rnn_forward.7} parent=0 // pred_fallthru
    _
  // Predicated region
  $region26: #{cnn_to_rnn_forward.7} parent=0 // pred_check
    _
  $region27: #{cnn_to_rnn_forward.7} parent=0 // pred_check_branch
    %667 = sbr.rel (0) target = $region29
  $region28: #{cnn_to_rnn_forward.7} parent=0 // pred_region
    _
  $region29: #{cnn_to_rnn_forward.7} parent=0 // pred_fallthru
    _

// kernel: cnn_to_rnn_forward.13
$region0: #{cnn_to_rnn_forward.13}
  #allocation0 [shape = 'u32[]', space=smem, size = 0x4, offset = 0x4, fixed_abs, tag = 'smem constant byte address 0x4 - core index']
  #allocation1 [shape = 'u32[72,128]{1,0:T(1,128)}', space=vmem, size = 0x9000, scoped, tag = 'internal scratch']
  #allocation2 [shape = 'f32[72,128]{1,0:T(8,128)}', space=vmem, size = 0x9000, scoped, tag = 'scratch operand']
  %s0 = inlined_call_operand.vmem [shape: bf16[72,128], index: 0, kind: input, shape index: {}]
  %s1 = inlined_call_operand.vmem [shape: bf16[128,128], index: 1, kind: input, shape index: {}]
  %s2 = inlined_call_operand.vmem [shape: f32[1,128], index: 2, kind: input, shape index: {}]
  %s3 = inlined_call_operand.vmem [shape: f32[72,128], index: 3, kind: output, shape index: {}]
  %s4 = sld [smem:[#allocation0]]
  $region30: #{cnn_to_rnn_forward.13} parent=0
    _
  %s6 = ssub.s32 1, %s4
  %s7 = scalar_select 0, %s6, %s4
  // Predicated region
  $region2: #{cnn_to_rnn_forward.13} parent=0 // pred_check
    _
  $region3: #{cnn_to_rnn_forward.13} parent=0 // pred_check_branch
    %9 = sbr.rel (0) target = $region5
  $region4: #{cnn_to_rnn_forward.13} parent=0 // pred_region
    _
  $region5: #{cnn_to_rnn_forward.13} parent=0 // pred_fallthru
    _
  // Predicated region
  $region6: #{cnn_to_rnn_forward.13} parent=0 // pred_check
    _
  $region7: #{cnn_to_rnn_forward.13} parent=0 // pred_check_branch
    %11 = sbr.rel (0) target = $region9
  $region8: #{cnn_to_rnn_forward.13} parent=0 // pred_region
    _
  $region9: #{cnn_to_rnn_forward.13} parent=0 // pred_fallthru
    _
  // Predicated region
  $region10: #{cnn_to_rnn_forward.13} parent=0 // pred_check
    _
  $region11: #{cnn_to_rnn_forward.13} parent=0 // pred_check_branch
    %13 = sbr.rel (0) target = $region13
  $region12: #{cnn_to_rnn_forward.13} parent=0 // pred_region
    _
  $region13: #{cnn_to_rnn_forward.13} parent=0 // pred_fallthru
    _
  %p14 = scmp.eq.s32.totalorder 0, 0
  // Predicated region
  $region14: #{cnn_to_rnn_forward.13} parent=0 // pred_check
    %p15 = pneg %p14
  $region15: #{cnn_to_rnn_forward.13} parent=0 // pred_check_branch
    %17 = sbr.rel (%p15) target = $region17
  $region16: #{cnn_to_rnn_forward.13} parent=0 // pred_region
    %18 = vst [vmem:[#allocation2] sm:$0xff] 0.0
    %19 = vst [vmem:[#allocation2 + $0x8] sm:$0xff] 0.0
    %20 = vst [vmem:[#allocation2 + $0x10] sm:$0xff] 0.0
    %21 = vst [vmem:[#allocation2 + $0x18] sm:$0xff] 0.0
    %22 = vst [vmem:[#allocation2 + $0x20] sm:$0xff] 0.0
    %23 = vst [vmem:[#allocation2 + $0x28] sm:$0xff] 0.0
    %24 = vst [vmem:[#allocation2 + $0x30] sm:$0xff] 0.0
    %25 = vst [vmem:[#allocation2 + $0x38] sm:$0xff] 0.0
    %26 = vst [vmem:[#allocation2 + $0x40] sm:$0xff] 0.0
  $region17: #{cnn_to_rnn_forward.13} parent=0 // pred_fallthru
    _
  %v27 = vld [vmem:[#allocation2] sm:$0xff]
  %v28 = vld [vmem:[#allocation2 + $0x8] sm:$0xff]
  %v29 = vld [vmem:[#allocation2 + $0x10] sm:$0xff]
  %v30 = vld [vmem:[#allocation2 + $0x18] sm:$0xff]
  %v31 = vld [vmem:[#allocation2 + $0x20] sm:$0xff]
  %v32 = vld [vmem:[#allocation2 + $0x28] sm:$0xff]
  %v33 = vld [vmem:[#allocation2 + $0x30] sm:$0xff]
  %v34 = vld [vmem:[#allocation2 + $0x38] sm:$0xff]
  %v35 = vld [vmem:[#allocation2 + $0x40] sm:$0xff]
  %v36 = vld [vmem:[%s0] sm:$0xf]
  %v37 = vld [vmem:[%s0 + $0x4] sm:$0xf]
  %v38 = vld [vmem:[%s0 + $0x8] sm:$0xf]
  %v39 = vld [vmem:[%s0 + $0xc] sm:$0xf]
  %v40 = vld [vmem:[%s0 + $0x10] sm:$0xf]
  %v41 = vld [vmem:[%s0 + $0x14] sm:$0xf]
  %v42 = vld [vmem:[%s0 + $0x18] sm:$0xf]
  %v43 = vld [vmem:[%s0 + $0x1c] sm:$0xf]
  %v44 = vld [vmem:[%s0 + $0x20] sm:$0xf]
  %v45 = vld [vmem:[%s1] sm:$0xf]
  %v46 = vld [vmem:[%s1 + $0x4] sm:$0xf]
  %v47 = vld [vmem:[%s1 + $0x8] sm:$0xf]
  %v48 = vld [vmem:[%s1 + $0xc] sm:$0xf]
  %v49 = vld [vmem:[%s1 + $0x10] sm:$0xf]
  %v50 = vld [vmem:[%s1 + $0x14] sm:$0xf]
  %v51 = vld [vmem:[%s1 + $0x18] sm:$0xf]
  %v52 = vld [vmem:[%s1 + $0x1c] sm:$0xf]
  %v53 = vld [vmem:[%s1 + $0x20] sm:$0xf]
  %v54 = vld [vmem:[%s1 + $0x24] sm:$0xf]
  %v55 = vld [vmem:[%s1 + $0x28] sm:$0xf]
  %v56 = vld [vmem:[%s1 + $0x2c] sm:$0xf]
  %v57 = vld [vmem:[%s1 + $0x30] sm:$0xf]
  %v58 = vld [vmem:[%s1 + $0x34] sm:$0xf]
  %v59 = vld [vmem:[%s1 + $0x38] sm:$0xf]
  %v60 = vld [vmem:[%s1 + $0x3c] sm:$0xf]
  %v70 = vunpack.c.l.b16 %v36
  %v71 = vunpack.c.l.b16 %v37
  %v72 = vunpack.c.l.b16 %v38
  %v73 = vunpack.c.l.b16 %v39
  %v74 = vunpack.c.l.b16 %v40
  %v75 = vunpack.c.l.b16 %v41
  %v76 = vunpack.c.l.b16 %v42
  %v77 = vunpack.c.l.b16 %v43
  %v78 = vunpack.c.l.b16 %v44
  %v79 = vpack.c.b16 %v71, %v70
  %v80 = vpack.c.b16 %v73, %v72
  %v81 = vpack.c.b16 %v75, %v74
  %v82 = vpack.c.b16 %v77, %v76
  %v83 = vpack.c.b16 %v78, %v78
  %v105 = vunpack.c.l.b16 %v45
  %v106 = vunpack.c.l.b16 %v46
  %v107 = vunpack.c.l.b16 %v47
  %v108 = vunpack.c.l.b16 %v48
  %v109 = vunpack.c.l.b16 %v49
  %v110 = vunpack.c.l.b16 %v50
  %v111 = vunpack.c.l.b16 %v51
  %v112 = vunpack.c.l.b16 %v52
  %v113 = vunpack.c.l.b16 %v53
  %v114 = vunpack.c.l.b16 %v54
  %v115 = vunpack.c.l.b16 %v55
  %v116 = vunpack.c.l.b16 %v56
  %v117 = vunpack.c.l.b16 %v57
  %v118 = vunpack.c.l.b16 %v58
  %v119 = vunpack.c.l.b16 %v59
  %v120 = vunpack.c.l.b16 %v60
  %v121 = vpack.c.b16 %v106, %v105
  %v122 = vpack.c.b16 %v108, %v107
  %v123 = vpack.c.b16 %v110, %v109
  %v124 = vpack.c.b16 %v112, %v111
  %v125 = vpack.c.b16 %v114, %v113
  %v126 = vpack.c.b16 %v116, %v115
  %v127 = vpack.c.b16 %v118, %v117
  %v128 = vpack.c.b16 %v120, %v119
  %137 = vmatpush.bf16.msra.mxu0 %v128
  %138 = vmatpush.bf16.msra.mxu0 %v127
  %139 = vmatpush.bf16.msra.mxu0 %v126
  %140 = vmatpush.bf16.msra.mxu0 %v125
  %141 = vmatpush.bf16.msra.mxu0 %v124
  %142 = vmatpush.bf16.msra.mxu0 %v123
  %143 = vmatpush.bf16.msra.mxu0 %v122
  %144 = vmatpush.bf16.msra.mxu0 %v121
  %145 = vmatmul.bf16.gmra.mxu0 %v79
  %v146 = vpop.f32.mrf.mxu0
  %v147 = vadd.f32 0.0, %v146
  %v148 = vpop.f32.mrf.mxu0
  %v149 = vadd.f32 0.0, %v148
  %150 = vmatmul.bf16.gmra.mxu0 %v80
  %v151 = vpop.f32.mrf.mxu0
  %v152 = vadd.f32 0.0, %v151
  %v153 = vpop.f32.mrf.mxu0
  %v154 = vadd.f32 0.0, %v153
  %155 = vmatmul.bf16.gmra.mxu0 %v81
  %v156 = vpop.f32.mrf.mxu0
  %v157 = vadd.f32 0.0, %v156
  %v158 = vpop.f32.mrf.mxu0
  %v159 = vadd.f32 0.0, %v158
  %160 = vmatmul.bf16.gmra.mxu0 %v82
  %v161 = vpop.f32.mrf.mxu0
  %v162 = vadd.f32 0.0, %v161
  %v163 = vpop.f32.mrf.mxu0
  %v164 = vadd.f32 0.0, %v163
  %165 = vmatmul.bf16.gmra.mxu0 %v83
  %v166 = vpop.f32.mrf.mxu0
  %v167 = vadd.f32 0.0, %v166
  %v168 = vpop.f32.mrf.mxu0
  %169 = vdwg.mxu0
  %v170 = vadd.f32 %v27, %v147
  %v171 = vadd.f32 %v28, %v149
  %v172 = vadd.f32 %v29, %v152
  %v173 = vadd.f32 %v30, %v154
  %v174 = vadd.f32 %v31, %v157
  %v175 = vadd.f32 %v32, %v159
  %v176 = vadd.f32 %v33, %v162
  %v177 = vadd.f32 %v34, %v164
  %v178 = vadd.f32 %v35, %v167
  %179 = vst [vmem:[#allocation2] sm:$0xff] %v170
  %180 = vst [vmem:[#allocation2 + $0x8] sm:$0xff] %v171
  %181 = vst [vmem:[#allocation2 + $0x10] sm:$0xff] %v172
  %182 = vst [vmem:[#allocation2 + $0x18] sm:$0xff] %v173
  %183 = vst [vmem:[#allocation2 + $0x20] sm:$0xff] %v174
  %184 = vst [vmem:[#allocation2 + $0x28] sm:$0xff] %v175
  %185 = vst [vmem:[#allocation2 + $0x30] sm:$0xff] %v176
  %186 = vst [vmem:[#allocation2 + $0x38] sm:$0xff] %v177
  %187 = vst [vmem:[#allocation2 + $0x40] sm:$0xff] %v178
  // Predicated region
  $region18: #{cnn_to_rnn_forward.13} parent=0 // pred_check
    %p188 = pneg %p14
  $region19: #{cnn_to_rnn_forward.13} parent=0 // pred_check_branch
    %190 = sbr.rel (%p188) target = $region21
  $region20: #{cnn_to_rnn_forward.13} parent=0 // pred_region
    %v191 = vld [vmem:[#allocation2] sm:$0xff]
    %v192 = vld [vmem:[#allocation2 + $0x8] sm:$0xff]
    %v193 = vld [vmem:[#allocation2 + $0x10] sm:$0xff]
    %v194 = vld [vmem:[#allocation2 + $0x18] sm:$0xff]
    %v195 = vld [vmem:[#allocation2 + $0x20] sm:$0xff]
    %v196 = vld [vmem:[#allocation2 + $0x28] sm:$0xff]
    %v197 = vld [vmem:[#allocation2 + $0x30] sm:$0xff]
    %v198 = vld [vmem:[#allocation2 + $0x38] sm:$0xff]
    %v199 = vld [vmem:[#allocation2 + $0x40] sm:$0xff]
    %v200 = vld [vmem:[%s2] sm:$0x1]
    %v202 = vperm.slane %v200, 0
    %v204 = vadd.f32 %v191, %v202
    %v205 = vadd.f32 %v192, %v202
    %v206 = vadd.f32 %v193, %v202
    %v207 = vadd.f32 %v194, %v202
    %v208 = vadd.f32 %v195, %v202
    %v209 = vadd.f32 %v196, %v202
    %v210 = vadd.f32 %v197, %v202
    %v211 = vadd.f32 %v198, %v202
    %v212 = vadd.f32 %v199, %v202
    %213 = vst [vmem:[%s3] sm:$0xff] %v204
    %214 = vst [vmem:[%s3 + $0x8] sm:$0xff] %v205
    %215 = vst [vmem:[%s3 + $0x10] sm:$0xff] %v206
    %216 = vst [vmem:[%s3 + $0x18] sm:$0xff] %v207
    %217 = vst [vmem:[%s3 + $0x20] sm:$0xff] %v208
    %218 = vst [vmem:[%s3 + $0x28] sm:$0xff] %v209
    %219 = vst [vmem:[%s3 + $0x30] sm:$0xff] %v210
    %220 = vst [vmem:[%s3 + $0x38] sm:$0xff] %v211
    %221 = vst [vmem:[%s3 + $0x40] sm:$0xff] %v212
  $region21: #{cnn_to_rnn_forward.13} parent=0 // pred_fallthru
    _
  // Predicated region
  $region22: #{cnn_to_rnn_forward.13} parent=0 // pred_check
    _
  $region23: #{cnn_to_rnn_forward.13} parent=0 // pred_check_branch
    %223 = sbr.rel (0) target = $region25
  $region24: #{cnn_to_rnn_forward.13} parent=0 // pred_region
    _
  $region25: #{cnn_to_rnn_forward.13} parent=0 // pred_fallthru
    _
  // Predicated region
  $region26: #{cnn_to_rnn_forward.13} parent=0 // pred_check
    _
  $region27: #{cnn_to_rnn_forward.13} parent=0 // pred_check_branch
    %225 = sbr.rel (0) target = $region29
  $region28: #{cnn_to_rnn_forward.13} parent=0 // pred_region
    _
  $region29: #{cnn_to_rnn_forward.13} parent=0 // pred_fallthru
    _

// kernel: cnn_to_rnn_forward.9
$region0: #{cnn_to_rnn_forward.9}
  #allocation0 [shape = 'u32[]', space=smem, size = 0x4, offset = 0x4, fixed_abs, tag = 'smem constant byte address 0x4 - core index']
  #allocation1 [shape = 'u32[72,128]{1,0:T(1,128)}', space=vmem, size = 0x9000, scoped, tag = 'internal scratch']
  #allocation2 [shape = 'f32[72,512]{1,0:T(8,128)}', space=vmem, size = 0x24000, scoped, tag = 'scratch operand']
  %s0 = inlined_call_operand.vmem [shape: bf16[72,128], index: 0, kind: input, shape index: {}]
  %s1 = inlined_call_operand.vmem [shape: bf16[128,512], index: 1, kind: input, shape index: {}]
  %s2 = inlined_call_operand.vmem [shape: f32[1,512], index: 2, kind: input, shape index: {}]
  %s3 = inlined_call_operand.vmem [shape: bf16[72,512], index: 3, kind: output, shape index: {}]
  %s4 = sld [smem:[#allocation0]]
  $region30: #{cnn_to_rnn_forward.9} parent=0
    _
  %s6 = ssub.s32 1, %s4
  %s7 = scalar_select 0, %s6, %s4
  // Predicated region
  $region2: #{cnn_to_rnn_forward.9} parent=0 // pred_check
    _
  $region3: #{cnn_to_rnn_forward.9} parent=0 // pred_check_branch
    %9 = sbr.rel (0) target = $region5
  $region4: #{cnn_to_rnn_forward.9} parent=0 // pred_region
    _
  $region5: #{cnn_to_rnn_forward.9} parent=0 // pred_fallthru
    _
  // Predicated region
  $region6: #{cnn_to_rnn_forward.9} parent=0 // pred_check
    _
  $region7: #{cnn_to_rnn_forward.9} parent=0 // pred_check_branch
    %11 = sbr.rel (0) target = $region9
  $region8: #{cnn_to_rnn_forward.9} parent=0 // pred_region
    _
  $region9: #{cnn_to_rnn_forward.9} parent=0 // pred_fallthru
    _
  // Predicated region
  $region10: #{cnn_to_rnn_forward.9} parent=0 // pred_check
    _
  $region11: #{cnn_to_rnn_forward.9} parent=0 // pred_check_branch
    %13 = sbr.rel (0) target = $region13
  $region12: #{cnn_to_rnn_forward.9} parent=0 // pred_region
    _
  $region13: #{cnn_to_rnn_forward.9} parent=0 // pred_fallthru
    _
  %p14 = scmp.eq.s32.totalorder 0, 0
  // Predicated region
  $region14: #{cnn_to_rnn_forward.9} parent=0 // pred_check
    %p15 = pneg %p14
  $region15: #{cnn_to_rnn_forward.9} parent=0 // pred_check_branch
    %17 = sbr.rel (%p15) target = $region17
  $region16: #{cnn_to_rnn_forward.9} parent=0 // pred_region
    %18 = vst [vmem:[#allocation2] sm:$0xff] 0.0
    %19 = vst [vmem:[#allocation2 + $0x8] sm:$0xff] 0.0
    %20 = vst [vmem:[#allocation2 + $0x10] sm:$0xff] 0.0
    %21 = vst [vmem:[#allocation2 + $0x18] sm:$0xff] 0.0
    %22 = vst [vmem:[#allocation2 + $0x20] sm:$0xff] 0.0
    %23 = vst [vmem:[#allocation2 + $0x28] sm:$0xff] 0.0
    %24 = vst [vmem:[#allocation2 + $0x30] sm:$0xff] 0.0
    %25 = vst [vmem:[#allocation2 + $0x38] sm:$0xff] 0.0
    %26 = vst [vmem:[#allocation2 + $0x40] sm:$0xff] 0.0
    %27 = vst [vmem:[#allocation2 + $0x48] sm:$0xff] 0.0
    %28 = vst [vmem:[#allocation2 + $0x50] sm:$0xff] 0.0
    %29 = vst [vmem:[#allocation2 + $0x58] sm:$0xff] 0.0
    %30 = vst [vmem:[#allocation2 + $0x60] sm:$0xff] 0.0
    %31 = vst [vmem:[#allocation2 + $0x68] sm:$0xff] 0.0
    %32 = vst [vmem:[#allocation2 + $0x70] sm:$0xff] 0.0
    %33 = vst [vmem:[#allocation2 + $0x78] sm:$0xff] 0.0
    %34 = vst [vmem:[#allocation2 + $0x80] sm:$0xff] 0.0
    %35 = vst [vmem:[#allocation2 + $0x88] sm:$0xff] 0.0
    %36 = vst [vmem:[#allocation2 + $0x90] sm:$0xff] 0.0
    %37 = vst [vmem:[#allocation2 + $0x98] sm:$0xff] 0.0
    %38 = vst [vmem:[#allocation2 + $0xa0] sm:$0xff] 0.0
    %39 = vst [vmem:[#allocation2 + $0xa8] sm:$0xff] 0.0
    %40 = vst [vmem:[#allocation2 + $0xb0] sm:$0xff] 0.0
    %41 = vst [vmem:[#allocation2 + $0xb8] sm:$0xff] 0.0
    %42 = vst [vmem:[#allocation2 + $0xc0] sm:$0xff] 0.0
    %43 = vst [vmem:[#allocation2 + $0xc8] sm:$0xff] 0.0
    %44 = vst [vmem:[#allocation2 + $0xd0] sm:$0xff] 0.0
    %45 = vst [vmem:[#allocation2 + $0xd8] sm:$0xff] 0.0
    %46 = vst [vmem:[#allocation2 + $0xe0] sm:$0xff] 0.0
    %47 = vst [vmem:[#allocation2 + $0xe8] sm:$0xff] 0.0
    %48 = vst [vmem:[#allocation2 + $0xf0] sm:$0xff] 0.0
    %49 = vst [vmem:[#allocation2 + $0xf8] sm:$0xff] 0.0
    %50 = vst [vmem:[#allocation2 + $0x100] sm:$0xff] 0.0
    %51 = vst [vmem:[#allocation2 + $0x108] sm:$0xff] 0.0
    %52 = vst [vmem:[#allocation2 + $0x110] sm:$0xff] 0.0
    %53 = vst [vmem:[#allocation2 + $0x118] sm:$0xff] 0.0
  $region17: #{cnn_to_rnn_forward.9} parent=0 // pred_fallthru
    _
  %v54 = vld [vmem:[#allocation2] sm:$0xff]
  %v55 = vld [vmem:[#allocation2 + $0x8] sm:$0xff]
  %v56 = vld [vmem:[#allocation2 + $0x10] sm:$0xff]
  %v57 = vld [vmem:[#allocation2 + $0x18] sm:$0xff]
  %v58 = vld [vmem:[#allocation2 + $0x20] sm:$0xff]
  %v59 = vld [vmem:[#allocation2 + $0x28] sm:$0xff]
  %v60 = vld [vmem:[#allocation2 + $0x30] sm:$0xff]
  %v61 = vld [vmem:[#allocation2 + $0x38] sm:$0xff]
  %v62 = vld [vmem:[#allocation2 + $0x40] sm:$0xff]
  %v63 = vld [vmem:[#allocation2 + $0x48] sm:$0xff]
  %v64 = vld [vmem:[#allocation2 + $0x50] sm:$0xff]
  %v65 = vld [vmem:[#allocation2 + $0x58] sm:$0xff]
  %v66 = vld [vmem:[#allocation2 + $0x60] sm:$0xff]
  %v67 = vld [vmem:[#allocation2 + $0x68] sm:$0xff]
  %v68 = vld [vmem:[#allocation2 + $0x70] sm:$0xff]
  %v69 = vld [vmem:[#allocation2 + $0x78] sm:$0xff]
  %v70 = vld [vmem:[#allocation2 + $0x80] sm:$0xff]
  %v71 = vld [vmem:[#allocation2 + $0x88] sm:$0xff]
  %v72 = vld [vmem:[#allocation2 + $0x90] sm:$0xff]
  %v73 = vld [vmem:[#allocation2 + $0x98] sm:$0xff]
  %v74 = vld [vmem:[#allocation2 + $0xa0] sm:$0xff]
  %v75 = vld [vmem:[#allocation2 + $0xa8] sm:$0xff]
  %v76 = vld [vmem:[#allocation2 + $0xb0] sm:$0xff]
  %v77 = vld [vmem:[#allocation2 + $0xb8] sm:$0xff]
  %v78 = vld [vmem:[#allocation2 + $0xc0] sm:$0xff]
  %v79 = vld [vmem:[#allocation2 + $0xc8] sm:$0xff]
  %v80 = vld [vmem:[#allocation2 + $0xd0] sm:$0xff]
  %v81 = vld [vmem:[#allocation2 + $0xd8] sm:$0xff]
  %v82 = vld [vmem:[#allocation2 + $0xe0] sm:$0xff]
  %v83 = vld [vmem:[#allocation2 + $0xe8] sm:$0xff]
  %v84 = vld [vmem:[#allocation2 + $0xf0] sm:$0xff]
  %v85 = vld [vmem:[#allocation2 + $0xf8] sm:$0xff]
  %v86 = vld [vmem:[#allocation2 + $0x100] sm:$0xff]
  %v87 = vld [vmem:[#allocation2 + $0x108] sm:$0xff]
  %v88 = vld [vmem:[#allocation2 + $0x110] sm:$0xff]
  %v89 = vld [vmem:[#allocation2 + $0x118] sm:$0xff]
  %v90 = vld [vmem:[%s0] sm:$0xf]
  %v91 = vld [vmem:[%s0 + $0x4] sm:$0xf]
  %v92 = vld [vmem:[%s0 + $0x8] sm:$0xf]
  %v93 = vld [vmem:[%s0 + $0xc] sm:$0xf]
  %v94 = vld [vmem:[%s0 + $0x10] sm:$0xf]
  %v95 = vld [vmem:[%s0 + $0x14] sm:$0xf]
  %v96 = vld [vmem:[%s0 + $0x18] sm:$0xf]
  %v97 = vld [vmem:[%s0 + $0x1c] sm:$0xf]
  %v98 = vld [vmem:[%s0 + $0x20] sm:$0xf]
  %v99 = vld [vmem:[%s1] sm:$0xff]
  %v100 = vld [vmem:[%s1 + $0x8] sm:$0xff]
  %v101 = vld [vmem:[%s1 + $0x10] sm:$0xff]
  %v102 = vld [vmem:[%s1 + $0x18] sm:$0xff]
  %v103 = vld [vmem:[%s1 + $0x20] sm:$0xff]
  %v104 = vld [vmem:[%s1 + $0x28] sm:$0xff]
  %v105 = vld [vmem:[%s1 + $0x30] sm:$0xff]
  %v106 = vld [vmem:[%s1 + $0x38] sm:$0xff]
  %v107 = vld [vmem:[%s1 + $0x40] sm:$0xff]
  %v108 = vld [vmem:[%s1 + $0x48] sm:$0xff]
  %v109 = vld [vmem:[%s1 + $0x50] sm:$0xff]
  %v110 = vld [vmem:[%s1 + $0x58] sm:$0xff]
  %v111 = vld [vmem:[%s1 + $0x60] sm:$0xff]
  %v112 = vld [vmem:[%s1 + $0x68] sm:$0xff]
  %v113 = vld [vmem:[%s1 + $0x70] sm:$0xff]
  %v114 = vld [vmem:[%s1 + $0x78] sm:$0xff]
  %v115 = vld [vmem:[%s1 + $0x80] sm:$0xff]
  %v116 = vld [vmem:[%s1 + $0x88] sm:$0xff]
  %v117 = vld [vmem:[%s1 + $0x90] sm:$0xff]
  %v118 = vld [vmem:[%s1 + $0x98] sm:$0xff]
  %v119 = vld [vmem:[%s1 + $0xa0] sm:$0xff]
  %v120 = vld [vmem:[%s1 + $0xa8] sm:$0xff]
  %v121 = vld [vmem:[%s1 + $0xb0] sm:$0xff]
  %v122 = vld [vmem:[%s1 + $0xb8] sm:$0xff]
  %v123 = vld [vmem:[%s1 + $0xc0] sm:$0xff]
  %v124 = vld [vmem:[%s1 + $0xc8] sm:$0xff]
  %v125 = vld [vmem:[%s1 + $0xd0] sm:$0xff]
  %v126 = vld [vmem:[%s1 + $0xd8] sm:$0xff]
  %v127 = vld [vmem:[%s1 + $0xe0] sm:$0xff]
  %v128 = vld [vmem:[%s1 + $0xe8] sm:$0xff]
  %v129 = vld [vmem:[%s1 + $0xf0] sm:$0xff]
  %v130 = vld [vmem:[%s1 + $0xf8] sm:$0xff]
  %v140 = vunpack.c.l.b16 %v90
  %v141 = vunpack.c.l.b16 %v91
  %v142 = vunpack.c.l.b16 %v92
  %v143 = vunpack.c.l.b16 %v93
  %v144 = vunpack.c.l.b16 %v94
  %v145 = vunpack.c.l.b16 %v95
  %v146 = vunpack.c.l.b16 %v96
  %v147 = vunpack.c.l.b16 %v97
  %v148 = vunpack.c.l.b16 %v98
  %v149 = vpack.c.b16 %v141, %v140
  %v150 = vpack.c.b16 %v143, %v142
  %v151 = vpack.c.b16 %v145, %v144
  %v152 = vpack.c.b16 %v147, %v146
  %v153 = vpack.c.b16 %v148, %v148
  %v191 = vunpack.c.l.b16 %v99
  %v192 = vunpack.c.h.b16 %v99
  %v193 = vunpack.c.l.b16 %v100
  %v194 = vunpack.c.h.b16 %v100
  %v195 = vunpack.c.l.b16 %v101
  %v196 = vunpack.c.h.b16 %v101
  %v197 = vunpack.c.l.b16 %v102
  %v198 = vunpack.c.h.b16 %v102
  %v199 = vunpack.c.l.b16 %v103
  %v200 = vunpack.c.h.b16 %v103
  %v201 = vunpack.c.l.b16 %v104
  %v202 = vunpack.c.h.b16 %v104
  %v203 = vunpack.c.l.b16 %v105
  %v204 = vunpack.c.h.b16 %v105
  %v205 = vunpack.c.l.b16 %v106
  %v206 = vunpack.c.h.b16 %v106
  %v207 = vunpack.c.l.b16 %v107
  %v208 = vunpack.c.h.b16 %v107
  %v209 = vunpack.c.l.b16 %v108
  %v210 = vunpack.c.h.b16 %v108
  %v211 = vunpack.c.l.b16 %v109
  %v212 = vunpack.c.h.b16 %v109
  %v213 = vunpack.c.l.b16 %v110
  %v214 = vunpack.c.h.b16 %v110
  %v215 = vunpack.c.l.b16 %v111
  %v216 = vunpack.c.h.b16 %v111
  %v217 = vunpack.c.l.b16 %v112
  %v218 = vunpack.c.h.b16 %v112
  %v219 = vunpack.c.l.b16 %v113
  %v220 = vunpack.c.h.b16 %v113
  %v221 = vunpack.c.l.b16 %v114
  %v222 = vunpack.c.h.b16 %v114
  %v223 = vunpack.c.l.b16 %v115
  %v224 = vunpack.c.h.b16 %v115
  %v225 = vunpack.c.l.b16 %v116
  %v226 = vunpack.c.h.b16 %v116
  %v227 = vunpack.c.l.b16 %v117
  %v228 = vunpack.c.h.b16 %v117
  %v229 = vunpack.c.l.b16 %v118
  %v230 = vunpack.c.h.b16 %v118
  %v231 = vunpack.c.l.b16 %v119
  %v232 = vunpack.c.h.b16 %v119
  %v233 = vunpack.c.l.b16 %v120
  %v234 = vunpack.c.h.b16 %v120
  %v235 = vunpack.c.l.b16 %v121
  %v236 = vunpack.c.h.b16 %v121
  %v237 = vunpack.c.l.b16 %v122
  %v238 = vunpack.c.h.b16 %v122
  %v239 = vunpack.c.l.b16 %v123
  %v240 = vunpack.c.h.b16 %v123
  %v241 = vunpack.c.l.b16 %v124
  %v242 = vunpack.c.h.b16 %v124
  %v243 = vunpack.c.l.b16 %v125
  %v244 = vunpack.c.h.b16 %v125
  %v245 = vunpack.c.l.b16 %v126
  %v246 = vunpack.c.h.b16 %v126
  %v247 = vunpack.c.l.b16 %v127
  %v248 = vunpack.c.h.b16 %v127
  %v249 = vunpack.c.l.b16 %v128
  %v250 = vunpack.c.h.b16 %v128
  %v251 = vunpack.c.l.b16 %v129
  %v252 = vunpack.c.h.b16 %v129
  %v253 = vunpack.c.l.b16 %v130
  %v254 = vunpack.c.h.b16 %v130
  %v255 = vpack.c.b16 %v195, %v191
  %v256 = vpack.c.b16 %v196, %v192
  %v257 = vpack.c.b16 %v197, %v193
  %v258 = vpack.c.b16 %v198, %v194
  %v259 = vpack.c.b16 %v203, %v199
  %v260 = vpack.c.b16 %v204, %v200
  %v261 = vpack.c.b16 %v205, %v201
  %v262 = vpack.c.b16 %v206, %v202
  %v263 = vpack.c.b16 %v211, %v207
  %v264 = vpack.c.b16 %v212, %v208
  %v265 = vpack.c.b16 %v213, %v209
  %v266 = vpack.c.b16 %v214, %v210
  %v267 = vpack.c.b16 %v219, %v215
  %v268 = vpack.c.b16 %v220, %v216
  %v269 = vpack.c.b16 %v221, %v217
  %v270 = vpack.c.b16 %v222, %v218
  %v271 = vpack.c.b16 %v227, %v223
  %v272 = vpack.c.b16 %v228, %v224
  %v273 = vpack.c.b16 %v229, %v225
  %v274 = vpack.c.b16 %v230, %v226
  %v275 = vpack.c.b16 %v235, %v231
  %v276 = vpack.c.b16 %v236, %v232
  %v277 = vpack.c.b16 %v237, %v233
  %v278 = vpack.c.b16 %v238, %v234
  %v279 = vpack.c.b16 %v243, %v239
  %v280 = vpack.c.b16 %v244, %v240
  %v281 = vpack.c.b16 %v245, %v241
  %v282 = vpack.c.b16 %v246, %v242
  %v283 = vpack.c.b16 %v251, %v247
  %v284 = vpack.c.b16 %v252, %v248
  %v285 = vpack.c.b16 %v253, %v249
  %v286 = vpack.c.b16 %v254, %v250
  %319 = vmatpush.bf16.msra.mxu0 %v283
  %320 = vmatpush.bf16.msra.mxu0 %v279
  %321 = vmatpush.bf16.msra.mxu0 %v275
  %322 = vmatpush.bf16.msra.mxu0 %v271
  %323 = vmatpush.bf16.msra.mxu0 %v267
  %324 = vmatpush.bf16.msra.mxu0 %v263
  %325 = vmatpush.bf16.msra.mxu0 %v259
  %326 = vmatpush.bf16.msra.mxu0 %v255
  %327 = vmatmul.bf16.gmra.mxu0 %v149
  %v328 = vpop.f32.mrf.mxu0
  %v329 = vadd.f32 0.0, %v328
  %v330 = vpop.f32.mrf.mxu0
  %v331 = vadd.f32 0.0, %v330
  %332 = vmatmul.bf16.gmra.mxu0 %v150
  %v333 = vpop.f32.mrf.mxu0
  %v334 = vadd.f32 0.0, %v333
  %v335 = vpop.f32.mrf.mxu0
  %v336 = vadd.f32 0.0, %v335
  %337 = vmatmul.bf16.gmra.mxu0 %v151
  %v338 = vpop.f32.mrf.mxu0
  %v339 = vadd.f32 0.0, %v338
  %v340 = vpop.f32.mrf.mxu0
  %v341 = vadd.f32 0.0, %v340
  %342 = vmatmul.bf16.gmra.mxu0 %v152
  %v343 = vpop.f32.mrf.mxu0
  %v344 = vadd.f32 0.0, %v343
  %v345 = vpop.f32.mrf.mxu0
  %v346 = vadd.f32 0.0, %v345
  %347 = vmatmul.bf16.gmra.mxu0 %v153
  %v348 = vpop.f32.mrf.mxu0
  %v349 = vadd.f32 0.0, %v348
  %v350 = vpop.f32.mrf.mxu0
  %351 = vdwg.mxu0
  %352 = vmatpush.bf16.msra.mxu0 %v284
  %353 = vmatpush.bf16.msra.mxu0 %v280
  %354 = vmatpush.bf16.msra.mxu0 %v276
  %355 = vmatpush.bf16.msra.mxu0 %v272
  %356 = vmatpush.bf16.msra.mxu0 %v268
  %357 = vmatpush.bf16.msra.mxu0 %v264
  %358 = vmatpush.bf16.msra.mxu0 %v260
  %359 = vmatpush.bf16.msra.mxu0 %v256
  %360 = vmatmul.bf16.gmra.mxu0 %v149
  %v361 = vpop.f32.mrf.mxu0
  %v362 = vadd.f32 0.0, %v361
  %v363 = vpop.f32.mrf.mxu0
  %v364 = vadd.f32 0.0, %v363
  %365 = vmatmul.bf16.gmra.mxu0 %v150
  %v366 = vpop.f32.mrf.mxu0
  %v367 = vadd.f32 0.0, %v366
  %v368 = vpop.f32.mrf.mxu0
  %v369 = vadd.f32 0.0, %v368
  %370 = vmatmul.bf16.gmra.mxu0 %v151
  %v371 = vpop.f32.mrf.mxu0
  %v372 = vadd.f32 0.0, %v371
  %v373 = vpop.f32.mrf.mxu0
  %v374 = vadd.f32 0.0, %v373
  %375 = vmatmul.bf16.gmra.mxu0 %v152
  %v376 = vpop.f32.mrf.mxu0
  %v377 = vadd.f32 0.0, %v376
  %v378 = vpop.f32.mrf.mxu0
  %v379 = vadd.f32 0.0, %v378
  %380 = vmatmul.bf16.gmra.mxu0 %v153
  %v381 = vpop.f32.mrf.mxu0
  %v382 = vadd.f32 0.0, %v381
  %v383 = vpop.f32.mrf.mxu0
  %384 = vdwg.mxu0
  %385 = vmatpush.bf16.msra.mxu0 %v285
  %386 = vmatpush.bf16.msra.mxu0 %v281
  %387 = vmatpush.bf16.msra.mxu0 %v277
  %388 = vmatpush.bf16.msra.mxu0 %v273
  %389 = vmatpush.bf16.msra.mxu0 %v269
  %390 = vmatpush.bf16.msra.mxu0 %v265
  %391 = vmatpush.bf16.msra.mxu0 %v261
  %392 = vmatpush.bf16.msra.mxu0 %v257
  %393 = vmatmul.bf16.gmra.mxu0 %v149
  %v394 = vpop.f32.mrf.mxu0
  %v395 = vadd.f32 0.0, %v394
  %v396 = vpop.f32.mrf.mxu0
  %v397 = vadd.f32 0.0, %v396
  %398 = vmatmul.bf16.gmra.mxu0 %v150
  %v399 = vpop.f32.mrf.mxu0
  %v400 = vadd.f32 0.0, %v399
  %v401 = vpop.f32.mrf.mxu0
  %v402 = vadd.f32 0.0, %v401
  %403 = vmatmul.bf16.gmra.mxu0 %v151
  %v404 = vpop.f32.mrf.mxu0
  %v405 = vadd.f32 0.0, %v404
  %v406 = vpop.f32.mrf.mxu0
  %v407 = vadd.f32 0.0, %v406
  %408 = vmatmul.bf16.gmra.mxu0 %v152
  %v409 = vpop.f32.mrf.mxu0
  %v410 = vadd.f32 0.0, %v409
  %v411 = vpop.f32.mrf.mxu0
  %v412 = vadd.f32 0.0, %v411
  %413 = vmatmul.bf16.gmra.mxu0 %v153
  %v414 = vpop.f32.mrf.mxu0
  %v415 = vadd.f32 0.0, %v414
  %v416 = vpop.f32.mrf.mxu0
  %417 = vdwg.mxu0
  %418 = vmatpush.bf16.msra.mxu0 %v286
  %419 = vmatpush.bf16.msra.mxu0 %v282
  %420 = vmatpush.bf16.msra.mxu0 %v278
  %421 = vmatpush.bf16.msra.mxu0 %v274
  %422 = vmatpush.bf16.msra.mxu0 %v270
  %423 = vmatpush.bf16.msra.mxu0 %v266
  %424 = vmatpush.bf16.msra.mxu0 %v262
  %425 = vmatpush.bf16.msra.mxu0 %v258
  %426 = vmatmul.bf16.gmra.mxu0 %v149
  %v427 = vpop.f32.mrf.mxu0
  %v428 = vadd.f32 0.0, %v427
  %v429 = vpop.f32.mrf.mxu0
  %v430 = vadd.f32 0.0, %v429
  %431 = vmatmul.bf16.gmra.mxu0 %v150
  %v432 = vpop.f32.mrf.mxu0
  %v433 = vadd.f32 0.0, %v432
  %v434 = vpop.f32.mrf.mxu0
  %v435 = vadd.f32 0.0, %v434
  %436 = vmatmul.bf16.gmra.mxu0 %v151
  %v437 = vpop.f32.mrf.mxu0
  %v438 = vadd.f32 0.0, %v437
  %v439 = vpop.f32.mrf.mxu0
  %v440 = vadd.f32 0.0, %v439
  %441 = vmatmul.bf16.gmra.mxu0 %v152
  %v442 = vpop.f32.mrf.mxu0
  %v443 = vadd.f32 0.0, %v442
  %v444 = vpop.f32.mrf.mxu0
  %v445 = vadd.f32 0.0, %v444
  %446 = vmatmul.bf16.gmra.mxu0 %v153
  %v447 = vpop.f32.mrf.mxu0
  %v448 = vadd.f32 0.0, %v447
  %v449 = vpop.f32.mrf.mxu0
  %450 = vdwg.mxu0
  %v451 = vadd.f32 %v54, %v329
  %v452 = vadd.f32 %v55, %v362
  %v453 = vadd.f32 %v56, %v395
  %v454 = vadd.f32 %v57, %v428
  %v455 = vadd.f32 %v58, %v331
  %v456 = vadd.f32 %v59, %v364
  %v457 = vadd.f32 %v60, %v397
  %v458 = vadd.f32 %v61, %v430
  %v459 = vadd.f32 %v62, %v334
  %v460 = vadd.f32 %v63, %v367
  %v461 = vadd.f32 %v64, %v400
  %v462 = vadd.f32 %v65, %v433
  %v463 = vadd.f32 %v66, %v336
  %v464 = vadd.f32 %v67, %v369
  %v465 = vadd.f32 %v68, %v402
  %v466 = vadd.f32 %v69, %v435
  %v467 = vadd.f32 %v70, %v339
  %v468 = vadd.f32 %v71, %v372
  %v469 = vadd.f32 %v72, %v405
  %v470 = vadd.f32 %v73, %v438
  %v471 = vadd.f32 %v74, %v341
  %v472 = vadd.f32 %v75, %v374
  %v473 = vadd.f32 %v76, %v407
  %v474 = vadd.f32 %v77, %v440
  %v475 = vadd.f32 %v78, %v344
  %v476 = vadd.f32 %v79, %v377
  %v477 = vadd.f32 %v80, %v410
  %v478 = vadd.f32 %v81, %v443
  %v479 = vadd.f32 %v82, %v346
  %v480 = vadd.f32 %v83, %v379
  %v481 = vadd.f32 %v84, %v412
  %v482 = vadd.f32 %v85, %v445
  %v483 = vadd.f32 %v86, %v349
  %v484 = vadd.f32 %v87, %v382
  %v485 = vadd.f32 %v88, %v415
  %v486 = vadd.f32 %v89, %v448
  %487 = vst [vmem:[#allocation2] sm:$0xff] %v451
  %488 = vst [vmem:[#allocation2 + $0x8] sm:$0xff] %v452
  %489 = vst [vmem:[#allocation2 + $0x10] sm:$0xff] %v453
  %490 = vst [vmem:[#allocation2 + $0x18] sm:$0xff] %v454
  %491 = vst [vmem:[#allocation2 + $0x20] sm:$0xff] %v455
  %492 = vst [vmem:[#allocation2 + $0x28] sm:$0xff] %v456
  %493 = vst [vmem:[#allocation2 + $0x30] sm:$0xff] %v457
  %494 = vst [vmem:[#allocation2 + $0x38] sm:$0xff] %v458
  %495 = vst [vmem:[#allocation2 + $0x40] sm:$0xff] %v459
  %496 = vst [vmem:[#allocation2 + $0x48] sm:$0xff] %v460
  %497 = vst [vmem:[#allocation2 + $0x50] sm:$0xff] %v461
  %498 = vst [vmem:[#allocation2 + $0x58] sm:$0xff] %v462
  %499 = vst [vmem:[#allocation2 + $0x60] sm:$0xff] %v463
  %500 = vst [vmem:[#allocation2 + $0x68] sm:$0xff] %v464
  %501 = vst [vmem:[#allocation2 + $0x70] sm:$0xff] %v465
  %502 = vst [vmem:[#allocation2 + $0x78] sm:$0xff] %v466
  %503 = vst [vmem:[#allocation2 + $0x80] sm:$0xff] %v467
  %504 = vst [vmem:[#allocation2 + $0x88] sm:$0xff] %v468
  %505 = vst [vmem:[#allocation2 + $0x90] sm:$0xff] %v469
  %506 = vst [vmem:[#allocation2 + $0x98] sm:$0xff] %v470
  %507 = vst [vmem:[#allocation2 + $0xa0] sm:$0xff] %v471
  %508 = vst [vmem:[#allocation2 + $0xa8] sm:$0xff] %v472
  %509 = vst [vmem:[#allocation2 + $0xb0] sm:$0xff] %v473
  %510 = vst [vmem:[#allocation2 + $0xb8] sm:$0xff] %v474
  %511 = vst [vmem:[#allocation2 + $0xc0] sm:$0xff] %v475
  %512 = vst [vmem:[#allocation2 + $0xc8] sm:$0xff] %v476
  %513 = vst [vmem:[#allocation2 + $0xd0] sm:$0xff] %v477
  %514 = vst [vmem:[#allocation2 + $0xd8] sm:$0xff] %v478
  %515 = vst [vmem:[#allocation2 + $0xe0] sm:$0xff] %v479
  %516 = vst [vmem:[#allocation2 + $0xe8] sm:$0xff] %v480
  %517 = vst [vmem:[#allocation2 + $0xf0] sm:$0xff] %v481
  %518 = vst [vmem:[#allocation2 + $0xf8] sm:$0xff] %v482
  %519 = vst [vmem:[#allocation2 + $0x100] sm:$0xff] %v483
  %520 = vst [vmem:[#allocation2 + $0x108] sm:$0xff] %v484
  %521 = vst [vmem:[#allocation2 + $0x110] sm:$0xff] %v485
  %522 = vst [vmem:[#allocation2 + $0x118] sm:$0xff] %v486
  // Predicated region
  $region18: #{cnn_to_rnn_forward.9} parent=0 // pred_check
    %p523 = pneg %p14
  $region19: #{cnn_to_rnn_forward.9} parent=0 // pred_check_branch
    %525 = sbr.rel (%p523) target = $region21
  $region20: #{cnn_to_rnn_forward.9} parent=0 // pred_region
    %v526 = vld [vmem:[#allocation2] sm:$0xff]
    %v527 = vld [vmem:[#allocation2 + $0x8] sm:$0xff]
    %v528 = vld [vmem:[#allocation2 + $0x10] sm:$0xff]
    %v529 = vld [vmem:[#allocation2 + $0x18] sm:$0xff]
    %v530 = vld [vmem:[#allocation2 + $0x20] sm:$0xff]
    %v531 = vld [vmem:[#allocation2 + $0x28] sm:$0xff]
    %v532 = vld [vmem:[#allocation2 + $0x30] sm:$0xff]
    %v533 = vld [vmem:[#allocation2 + $0x38] sm:$0xff]
    %v534 = vld [vmem:[#allocation2 + $0x40] sm:$0xff]
    %v535 = vld [vmem:[#allocation2 + $0x48] sm:$0xff]
    %v536 = vld [vmem:[#allocation2 + $0x50] sm:$0xff]
    %v537 = vld [vmem:[#allocation2 + $0x58] sm:$0xff]
    %v538 = vld [vmem:[#allocation2 + $0x60] sm:$0xff]
    %v539 = vld [vmem:[#allocation2 + $0x68] sm:$0xff]
    %v540 = vld [vmem:[#allocation2 + $0x70] sm:$0xff]
    %v541 = vld [vmem:[#allocation2 + $0x78] sm:$0xff]
    %v542 = vld [vmem:[#allocation2 + $0x80] sm:$0xff]
    %v543 = vld [vmem:[#allocation2 + $0x88] sm:$0xff]
    %v544 = vld [vmem:[#allocation2 + $0x90] sm:$0xff]
    %v545 = vld [vmem:[#allocation2 + $0x98] sm:$0xff]
    %v546 = vld [vmem:[#allocation2 + $0xa0] sm:$0xff]
    %v547 = vld [vmem:[#allocation2 + $0xa8] sm:$0xff]
    %v548 = vld [vmem:[#allocation2 + $0xb0] sm:$0xff]
    %v549 = vld [vmem:[#allocation2 + $0xb8] sm:$0xff]
    %v550 = vld [vmem:[#allocation2 + $0xc0] sm:$0xff]
    %v551 = vld [vmem:[#allocation2 + $0xc8] sm:$0xff]
    %v552 = vld [vmem:[#allocation2 + $0xd0] sm:$0xff]
    %v553 = vld [vmem:[#allocation2 + $0xd8] sm:$0xff]
    %v554 = vld [vmem:[#allocation2 + $0xe0] sm:$0xff]
    %v555 = vld [vmem:[#allocation2 + $0xe8] sm:$0xff]
    %v556 = vld [vmem:[#allocation2 + $0xf0] sm:$0xff]
    %v557 = vld [vmem:[#allocation2 + $0xf8] sm:$0xff]
    %v558 = vld [vmem:[#allocation2 + $0x100] sm:$0xff]
    %v559 = vld [vmem:[#allocation2 + $0x108] sm:$0xff]
    %v560 = vld [vmem:[#allocation2 + $0x110] sm:$0xff]
    %v561 = vld [vmem:[#allocation2 + $0x118] sm:$0xff]
    %v562 = vld [vmem:[%s2] sm:$0xf]
    %v564 = vperm.slane %v562, 0
    %v565 = vperm.slane %v562, 1
    %v566 = vperm.slane %v562, 2
    %v567 = vperm.slane %v562, 3
    %v572 = vadd.f32 %v526, %v564
    %v573 = vadd.f32 %v527, %v565
    %v574 = vadd.f32 %v528, %v566
    %v575 = vadd.f32 %v529, %v567
    %v576 = vadd.f32 %v530, %v564
    %v577 = vadd.f32 %v531, %v565
    %v578 = vadd.f32 %v532, %v566
    %v579 = vadd.f32 %v533, %v567
    %v580 = vadd.f32 %v534, %v564
    %v581 = vadd.f32 %v535, %v565
    %v582 = vadd.f32 %v536, %v566
    %v583 = vadd.f32 %v537, %v567
    %v584 = vadd.f32 %v538, %v564
    %v585 = vadd.f32 %v539, %v565
    %v586 = vadd.f32 %v540, %v566
    %v587 = vadd.f32 %v541, %v567
    %v588 = vadd.f32 %v542, %v564
    %v589 = vadd.f32 %v543, %v565
    %v590 = vadd.f32 %v544, %v566
    %v591 = vadd.f32 %v545, %v567
    %v592 = vadd.f32 %v546, %v564
    %v593 = vadd.f32 %v547, %v565
    %v594 = vadd.f32 %v548, %v566
    %v595 = vadd.f32 %v549, %v567
    %v596 = vadd.f32 %v550, %v564
    %v597 = vadd.f32 %v551, %v565
    %v598 = vadd.f32 %v552, %v566
    %v599 = vadd.f32 %v553, %v567
    %v600 = vadd.f32 %v554, %v564
    %v601 = vadd.f32 %v555, %v565
    %v602 = vadd.f32 %v556, %v566
    %v603 = vadd.f32 %v557, %v567
    %v604 = vadd.f32 %v558, %v564
    %v605 = vadd.f32 %v559, %v565
    %v606 = vadd.f32 %v560, %v566
    %v607 = vadd.f32 %v561, %v567
    %v608 = vpack.c.bf16 %v573, %v572
    %v609 = vpack.c.bf16 %v575, %v574
    %v610 = vpack.c.bf16 %v577, %v576
    %v611 = vpack.c.bf16 %v579, %v578
    %v612 = vpack.c.bf16 %v581, %v580
    %v613 = vpack.c.bf16 %v583, %v582
    %v614 = vpack.c.bf16 %v585, %v584
    %v615 = vpack.c.bf16 %v587, %v586
    %v616 = vpack.c.bf16 %v589, %v588
    %v617 = vpack.c.bf16 %v591, %v590
    %v618 = vpack.c.bf16 %v593, %v592
    %v619 = vpack.c.bf16 %v595, %v594
    %v620 = vpack.c.bf16 %v597, %v596
    %v621 = vpack.c.bf16 %v599, %v598
    %v622 = vpack.c.bf16 %v601, %v600
    %v623 = vpack.c.bf16 %v603, %v602
    %v624 = vpack.c.bf16 %v605, %v604
    %v625 = vpack.c.bf16 %v607, %v606
    %626 = vst [vmem:[%s3] sm:$0xff] %v608
    %627 = vst [vmem:[%s3 + $0x8] sm:$0xff] %v609
    %628 = vst [vmem:[%s3 + $0x10] sm:$0xff] %v610
    %629 = vst [vmem:[%s3 + $0x18] sm:$0xff] %v611
    %630 = vst [vmem:[%s3 + $0x20] sm:$0xff] %v612
    %631 = vst [vmem:[%s3 + $0x28] sm:$0xff] %v613
    %632 = vst [vmem:[%s3 + $0x30] sm:$0xff] %v614
    %633 = vst [vmem:[%s3 + $0x38] sm:$0xff] %v615
    %634 = vst [vmem:[%s3 + $0x40] sm:$0xff] %v616
    %635 = vst [vmem:[%s3 + $0x48] sm:$0xff] %v617
    %636 = vst [vmem:[%s3 + $0x50] sm:$0xff] %v618
    %637 = vst [vmem:[%s3 + $0x58] sm:$0xff] %v619
    %638 = vst [vmem:[%s3 + $0x60] sm:$0xff] %v620
    %639 = vst [vmem:[%s3 + $0x68] sm:$0xff] %v621
    %640 = vst [vmem:[%s3 + $0x70] sm:$0xff] %v622
    %641 = vst [vmem:[%s3 + $0x78] sm:$0xff] %v623
    %642 = vst [vmem:[%s3 + $0x80] sm:$0xff] %v624
    %643 = vst [vmem:[%s3 + $0x88] sm:$0xff] %v625
  $region21: #{cnn_to_rnn_forward.9} parent=0 // pred_fallthru
    _
  // Predicated region
  $region22: #{cnn_to_rnn_forward.9} parent=0 // pred_check
    _
  $region23: #{cnn_to_rnn_forward.9} parent=0 // pred_check_branch
    %645 = sbr.rel (0) target = $region25
  $region24: #{cnn_to_rnn_forward.9} parent=0 // pred_region
    _
  $region25: #{cnn_to_rnn_forward.9} parent=0 // pred_fallthru
    _
  // Predicated region
  $region26: #{cnn_to_rnn_forward.9} parent=0 // pred_check
    _
  $region27: #{cnn_to_rnn_forward.9} parent=0 // pred_check_branch
    %647 = sbr.rel (0) target = $region29
  $region28: #{cnn_to_rnn_forward.9} parent=0 // pred_region
    _
  $region29: #{cnn_to_rnn_forward.9} parent=0 // pred_fallthru
    _

// kernel: cnn_to_rnn_forward.10
$region0: #{cnn_to_rnn_forward.10}
  #allocation0 [shape = 'u32[]', space=smem, size = 0x4, offset = 0x4, fixed_abs, tag = 'smem constant byte address 0x4 - core index']
  #allocation1 [shape = 'u32[72,128]{1,0:T(1,128)}', space=vmem, size = 0x9000, scoped, tag = 'internal scratch']
  #allocation2 [shape = 'f32[8,128]{1,0:T(8,128)}', space=vmem, size = 0x1000, scoped, tag = 'scratch operand']
  #allocation3 [shape = 'f32[8,128]{1,0:T(8,128)}', space=vmem, size = 0x1000, scoped, tag = 'scratch operand']
  %s0 = inlined_call_operand.vmem [shape: bf16[9,8,512], index: 0, kind: input, shape index: {}]
  %s1 = inlined_call_operand.vmem [shape: bf16[128,512], index: 1, kind: input, shape index: {}]
  %s2 = inlined_call_operand.vmem [shape: bf16[9,8,128], index: 2, kind: output, shape index: {}]
  %s3 = sld [smem:[#allocation0]]
  $region22: #{cnn_to_rnn_forward.10} parent=0
    _
  %s5 = ssub.s32 1, %s3
  %s6 = scalar_select 0, %s5, %s3
  // Predicated region
  $region2: #{cnn_to_rnn_forward.10} parent=0 // pred_check
    _
  $region3: #{cnn_to_rnn_forward.10} parent=0 // pred_check_branch
    %8 = sbr.rel (0) target = $region5
  $region4: #{cnn_to_rnn_forward.10} parent=0 // pred_region
    _
  $region5: #{cnn_to_rnn_forward.10} parent=0 // pred_fallthru
    _
  // Predicated region
  $region6: #{cnn_to_rnn_forward.10} parent=0 // pred_check
    _
  $region7: #{cnn_to_rnn_forward.10} parent=0 // pred_check_branch
    %10 = sbr.rel (0) target = $region9
  $region8: #{cnn_to_rnn_forward.10} parent=0 // pred_region
    _
  $region9: #{cnn_to_rnn_forward.10} parent=0 // pred_fallthru
    _
  %p11 = scmp.eq.s32.totalorder 0, 0
  // Predicated region
  $region10: #{cnn_to_rnn_forward.10} parent=0 // pred_check
    %p12 = pneg %p11
  $region11: #{cnn_to_rnn_forward.10} parent=0 // pred_check_branch
    %14 = sbr.rel (%p12) target = $region13
  $region12: #{cnn_to_rnn_forward.10} parent=0 // pred_region
    %15 = vst [vmem:[#allocation2] sm:$0xff] 0.0
    %16 = vst [vmem:[#allocation3] sm:$0xff] 0.0
  $region13: #{cnn_to_rnn_forward.10} parent=0 // pred_fallthru
    _
  %v17 = vld [vmem:[%s1] sm:$0xff]
  %v18 = vld [vmem:[%s1 + $0x8] sm:$0xff]
  %v19 = vld [vmem:[%s1 + $0x10] sm:$0xff]
  %v20 = vld [vmem:[%s1 + $0x18] sm:$0xff]
  %v21 = vld [vmem:[%s1 + $0x20] sm:$0xff]
  %v22 = vld [vmem:[%s1 + $0x28] sm:$0xff]
  %v23 = vld [vmem:[%s1 + $0x30] sm:$0xff]
  %v24 = vld [vmem:[%s1 + $0x38] sm:$0xff]
  %v25 = vld [vmem:[%s1 + $0x40] sm:$0xff]
  %v26 = vld [vmem:[%s1 + $0x48] sm:$0xff]
  %v27 = vld [vmem:[%s1 + $0x50] sm:$0xff]
  %v28 = vld [vmem:[%s1 + $0x58] sm:$0xff]
  %v29 = vld [vmem:[%s1 + $0x60] sm:$0xff]
  %v30 = vld [vmem:[%s1 + $0x68] sm:$0xff]
  %v31 = vld [vmem:[%s1 + $0x70] sm:$0xff]
  %v32 = vld [vmem:[%s1 + $0x78] sm:$0xff]
  %v33 = vld [vmem:[%s1 + $0x80] sm:$0xff]
  %v34 = vld [vmem:[%s1 + $0x88] sm:$0xff]
  %v35 = vld [vmem:[%s1 + $0x90] sm:$0xff]
  %v36 = vld [vmem:[%s1 + $0x98] sm:$0xff]
  %v37 = vld [vmem:[%s1 + $0xa0] sm:$0xff]
  %v38 = vld [vmem:[%s1 + $0xa8] sm:$0xff]
  %v39 = vld [vmem:[%s1 + $0xb0] sm:$0xff]
  %v40 = vld [vmem:[%s1 + $0xb8] sm:$0xff]
  %v41 = vld [vmem:[%s1 + $0xc0] sm:$0xff]
  %v42 = vld [vmem:[%s1 + $0xc8] sm:$0xff]
  %v43 = vld [vmem:[%s1 + $0xd0] sm:$0xff]
  %v44 = vld [vmem:[%s1 + $0xd8] sm:$0xff]
  %v45 = vld [vmem:[%s1 + $0xe0] sm:$0xff]
  %v46 = vld [vmem:[%s1 + $0xe8] sm:$0xff]
  %v47 = vld [vmem:[%s1 + $0xf0] sm:$0xff]
  %v48 = vld [vmem:[%s1 + $0xf8] sm:$0xff]
  %v49 = vld [vmem:[%s0] sm:$0xff]
  %v50 = vld [vmem:[%s0 + $0x8] sm:$0xff]
  %v51 = vunpack.c.l.bf16 %v49
  %v52 = vunpack.c.h.bf16 %v49
  %v53 = vunpack.c.l.bf16 %v50
  %v54 = vunpack.c.h.bf16 %v50
  %v55 = vld [vmem:[#allocation2] sm:$0xff]
  %v56 = vpack.c.bf16 %v55, %v55
  %v89 = vunpack.c.l.b16 %v17
  %v90 = vunpack.c.h.b16 %v17
  %v91 = vunpack.c.l.b16 %v18
  %v92 = vunpack.c.h.b16 %v18
  %v93 = vunpack.c.l.b16 %v19
  %v94 = vunpack.c.h.b16 %v19
  %v95 = vunpack.c.l.b16 %v20
  %v96 = vunpack.c.h.b16 %v20
  %v97 = vunpack.c.l.b16 %v21
  %v98 = vunpack.c.h.b16 %v21
  %v99 = vunpack.c.l.b16 %v22
  %v100 = vunpack.c.h.b16 %v22
  %v101 = vunpack.c.l.b16 %v23
  %v102 = vunpack.c.h.b16 %v23
  %v103 = vunpack.c.l.b16 %v24
  %v104 = vunpack.c.h.b16 %v24
  %v105 = vunpack.c.l.b16 %v25
  %v106 = vunpack.c.h.b16 %v25
  %v107 = vunpack.c.l.b16 %v26
  %v108 = vunpack.c.h.b16 %v26
  %v109 = vunpack.c.l.b16 %v27
  %v110 = vunpack.c.h.b16 %v27
  %v111 = vunpack.c.l.b16 %v28
  %v112 = vunpack.c.h.b16 %v28
  %v113 = vunpack.c.l.b16 %v29
  %v114 = vunpack.c.h.b16 %v29
  %v115 = vunpack.c.l.b16 %v30
  %v116 = vunpack.c.h.b16 %v30
  %v117 = vunpack.c.l.b16 %v31
  %v118 = vunpack.c.h.b16 %v31
  %v119 = vunpack.c.l.b16 %v32
  %v120 = vunpack.c.h.b16 %v32
  %v121 = vunpack.c.l.b16 %v33
  %v122 = vunpack.c.h.b16 %v33
  %v123 = vunpack.c.l.b16 %v34
  %v124 = vunpack.c.h.b16 %v34
  %v125 = vunpack.c.l.b16 %v35
  %v126 = vunpack.c.h.b16 %v35
  %v127 = vunpack.c.l.b16 %v36
  %v128 = vunpack.c.h.b16 %v36
  %v129 = vunpack.c.l.b16 %v37
  %v130 = vunpack.c.h.b16 %v37
  %v131 = vunpack.c.l.b16 %v38
  %v132 = vunpack.c.h.b16 %v38
  %v133 = vunpack.c.l.b16 %v39
  %v134 = vunpack.c.h.b16 %v39
  %v135 = vunpack.c.l.b16 %v40
  %v136 = vunpack.c.h.b16 %v40
  %v137 = vunpack.c.l.b16 %v41
  %v138 = vunpack.c.h.b16 %v41
  %v139 = vunpack.c.l.b16 %v42
  %v140 = vunpack.c.h.b16 %v42
  %v141 = vunpack.c.l.b16 %v43
  %v142 = vunpack.c.h.b16 %v43
  %v143 = vunpack.c.l.b16 %v44
  %v144 = vunpack.c.h.b16 %v44
  %v145 = vunpack.c.l.b16 %v45
  %v146 = vunpack.c.h.b16 %v45
  %v147 = vunpack.c.l.b16 %v46
  %v148 = vunpack.c.h.b16 %v46
  %v149 = vunpack.c.l.b16 %v47
  %v150 = vunpack.c.h.b16 %v47
  %v151 = vunpack.c.l.b16 %v48
  %v152 = vunpack.c.h.b16 %v48
  %v153 = vpack.c.b16 %v93, %v89
  %v154 = vpack.c.b16 %v94, %v90
  %v155 = vpack.c.b16 %v95, %v91
  %v156 = vpack.c.b16 %v96, %v92
  %v157 = vpack.c.b16 %v101, %v97
  %v158 = vpack.c.b16 %v102, %v98
  %v159 = vpack.c.b16 %v103, %v99
  %v160 = vpack.c.b16 %v104, %v100
  %v161 = vpack.c.b16 %v109, %v105
  %v162 = vpack.c.b16 %v110, %v106
  %v163 = vpack.c.b16 %v111, %v107
  %v164 = vpack.c.b16 %v112, %v108
  %v165 = vpack.c.b16 %v117, %v113
  %v166 = vpack.c.b16 %v118, %v114
  %v167 = vpack.c.b16 %v119, %v115
  %v168 = vpack.c.b16 %v120, %v116
  %v169 = vpack.c.b16 %v125, %v121
  %v170 = vpack.c.b16 %v126, %v122
  %v171 = vpack.c.b16 %v127, %v123
  %v172 = vpack.c.b16 %v128, %v124
  %v173 = vpack.c.b16 %v133, %v129
  %v174 = vpack.c.b16 %v134, %v130
  %v175 = vpack.c.b16 %v135, %v131
  %v176 = vpack.c.b16 %v136, %v132
  %v177 = vpack.c.b16 %v141, %v137
  %v178 = vpack.c.b16 %v142, %v138
  %v179 = vpack.c.b16 %v143, %v139
  %v180 = vpack.c.b16 %v144, %v140
  %v181 = vpack.c.b16 %v149, %v145
  %v182 = vpack.c.b16 %v150, %v146
  %v183 = vpack.c.b16 %v151, %v147
  %v184 = vpack.c.b16 %v152, %v148
  %217 = vmatpush.bf16.msra.mxu0 %v181
  %218 = vmatpush.bf16.msra.mxu0 %v177
  %219 = vmatpush.bf16.msra.mxu0 %v173
  %220 = vmatpush.bf16.msra.mxu0 %v169
  %221 = vmatpush.bf16.msra.mxu0 %v165
  %222 = vmatpush.bf16.msra.mxu0 %v161
  %223 = vmatpush.bf16.msra.mxu0 %v157
  %224 = vmatpush.bf16.msra.mxu0 %v153
  %225 = vmatmul.bf16.gmra.mxu0 %v56
  %v226 = vpop.f32.mrf.mxu0
  %v227 = vadd.f32 0.0, %v226
  %v228 = vpop.f32.mrf.mxu0
  %229 = vdwg.mxu0
  %230 = vmatpush.bf16.msra.mxu0 %v182
  %231 = vmatpush.bf16.msra.mxu0 %v178
  %232 = vmatpush.bf16.msra.mxu0 %v174
  %233 = vmatpush.bf16.msra.mxu0 %v170
  %234 = vmatpush.bf16.msra.mxu0 %v166
  %235 = vmatpush.bf16.msra.mxu0 %v162
  %236 = vmatpush.bf16.msra.mxu0 %v158
  %237 = vmatpush.bf16.msra.mxu0 %v154
  %238 = vmatmul.bf16.gmra.mxu0 %v56
  %v239 = vpop.f32.mrf.mxu0
  %v240 = vadd.f32 0.0, %v239
  %v241 = vpop.f32.mrf.mxu0
  %242 = vdwg.mxu0
  %243 = vmatpush.bf16.msra.mxu0 %v183
  %244 = vmatpush.bf16.msra.mxu0 %v179
  %245 = vmatpush.bf16.msra.mxu0 %v175
  %246 = vmatpush.bf16.msra.mxu0 %v171
  %247 = vmatpush.bf16.msra.mxu0 %v167
  %248 = vmatpush.bf16.msra.mxu0 %v163
  %249 = vmatpush.bf16.msra.mxu0 %v159
  %250 = vmatpush.bf16.msra.mxu0 %v155
  %251 = vmatmul.bf16.gmra.mxu0 %v56
  %v252 = vpop.f32.mrf.mxu0
  %v253 = vadd.f32 0.0, %v252
  %v254 = vpop.f32.mrf.mxu0
  %255 = vdwg.mxu0
  %256 = vmatpush.bf16.msra.mxu0 %v184
  %257 = vmatpush.bf16.msra.mxu0 %v180
  %258 = vmatpush.bf16.msra.mxu0 %v176
  %259 = vmatpush.bf16.msra.mxu0 %v172
  %260 = vmatpush.bf16.msra.mxu0 %v168
  %261 = vmatpush.bf16.msra.mxu0 %v164
  %262 = vmatpush.bf16.msra.mxu0 %v160
  %263 = vmatpush.bf16.msra.mxu0 %v156
  %264 = vmatmul.bf16.gmra.mxu0 %v56
  %v265 = vpop.f32.mrf.mxu0
  %v266 = vadd.f32 0.0, %v265
  %v267 = vpop.f32.mrf.mxu0
  %268 = vdwg.mxu0
  %v269 = vadd.f32 %v51, %v227
  %v270 = vadd.f32 %v52, %v240
  %v271 = vadd.f32 %v53, %v253
  %v272 = vadd.f32 %v54, %v266
  %v273 = vxor.u32 %v269, 2147483648
  %v274 = vmul.f32 %v273, 1.442695
  %v275 = vpow.pop %v274
  %v276 = vadd.f32 %v275, 1.0
  %v277 = vrcp.pop %v276
  %v278 = vmul.f32 %v276, %v277
  %v279 = vsub.f32 1.0, %v278
  %v280 = vmul.f32 %v277, %v279
  %v281 = vadd.f32 %v277, %v280
  %vm282 = vweird.f32 %v276
  %vm283 = vweird.f32 %v277
  %vm284 = vmor %vm282, %vm283
  %v285 = vsel %vm284, %v277, %v281
  %v286 = vand.u32 2147483647, %v276
  %vm287 = vcmp.eq.f32.partialorder %v286, 8.507059e+37
  %v288 = vand.u32 %v276, 2147483648
  %v289 = vor.u32 1.1754944e-38, %v288
  %v290 = vsel %vm287, %v289, %v285
  %v291 = vmul.f32 1.0, %v290
  %v292 = vxor.u32 %v270, 2147483648
  %v293 = vmul.f32 %v292, 1.442695
  %v294 = vpow.pop %v293
  %v295 = vadd.f32 %v294, 1.0
  %v296 = vrcp.pop %v295
  %v297 = vmul.f32 %v295, %v296
  %v298 = vsub.f32 1.0, %v297
  %v299 = vmul.f32 %v296, %v298
  %v300 = vadd.f32 %v296, %v299
  %vm301 = vweird.f32 %v295
  %vm302 = vweird.f32 %v296
  %vm303 = vmor %vm301, %vm302
  %v304 = vsel %vm303, %v296, %v300
  %v305 = vand.u32 2147483647, %v295
  %vm306 = vcmp.eq.f32.partialorder %v305, 8.507059e+37
  %v307 = vand.u32 %v295, 2147483648
  %v308 = vor.u32 1.1754944e-38, %v307
  %v309 = vsel %vm306, %v308, %v304
  %v310 = vmul.f32 1.0, %v309
  %v311 = vtanh.pop %v271
  %v312 = vxor.u32 %v272, 2147483648
  %v313 = vmul.f32 %v312, 1.442695
  %v314 = vpow.pop %v313
  %v315 = vadd.f32 %v314, 1.0
  %v316 = vrcp.pop %v315
  %v317 = vmul.f32 %v315, %v316
  %v318 = vsub.f32 1.0, %v317
  %v319 = vmul.f32 %v316, %v318
  %v320 = vadd.f32 %v316, %v319
  %vm321 = vweird.f32 %v315
  %vm322 = vweird.f32 %v316
  %vm323 = vmor %vm321, %vm322
  %v324 = vsel %vm323, %v316, %v320
  %v325 = vand.u32 2147483647, %v315
  %vm326 = vcmp.eq.f32.partialorder %v325, 8.507059e+37
  %v327 = vand.u32 %v315, 2147483648
  %v328 = vor.u32 1.1754944e-38, %v327
  %v329 = vsel %vm326, %v328, %v324
  %v330 = vmul.f32 1.0, %v329
  %v331 = vld [vmem:[#allocation3] sm:$0xff]
  %v332 = vmul.f32 %v310, %v331
  %v333 = vmul.f32 %v291, %v311
  %v334 = vadd.f32 %v332, %v333
  %v335 = vtanh.pop %v334
  %v336 = vmul.f32 %v330, %v335
  %337 = vst [vmem:[#allocation3] sm:$0xff] %v334
  %338 = vst [vmem:[#allocation2] sm:$0xff] %v336
  %v339 = vpack.c.bf16 %v336, %v336
  %340 = vst [vmem:[%s2] sm:$0xf] %v339
  %s341 = scalar_lea.vmem %s0, 16
  %v342 = vld [vmem:[%s341] sm:$0xff]
  %v343 = vld [vmem:[%s341 + $0x8] sm:$0xff]
  %v344 = vunpack.c.l.bf16 %v342
  %v345 = vunpack.c.h.bf16 %v342
  %v346 = vunpack.c.l.bf16 %v343
  %v347 = vunpack.c.h.bf16 %v343
  %v348 = vld [vmem:[#allocation2] sm:$0xff]
  %v349 = vpack.c.bf16 %v348, %v348
  %350 = vmatpush.bf16.msra.mxu0 %v181
  %351 = vmatpush.bf16.msra.mxu0 %v177
  %352 = vmatpush.bf16.msra.mxu0 %v173
  %353 = vmatpush.bf16.msra.mxu0 %v169
  %354 = vmatpush.bf16.msra.mxu0 %v165
  %355 = vmatpush.bf16.msra.mxu0 %v161
  %356 = vmatpush.bf16.msra.mxu0 %v157
  %357 = vmatpush.bf16.msra.mxu0 %v153
  %358 = vmatmul.bf16.gmra.mxu0 %v349
  %v359 = vpop.f32.mrf.mxu0
  %v360 = vadd.f32 0.0, %v359
  %v361 = vpop.f32.mrf.mxu0
  %362 = vdwg.mxu0
  %363 = vmatpush.bf16.msra.mxu0 %v182
  %364 = vmatpush.bf16.msra.mxu0 %v178
  %365 = vmatpush.bf16.msra.mxu0 %v174
  %366 = vmatpush.bf16.msra.mxu0 %v170
  %367 = vmatpush.bf16.msra.mxu0 %v166
  %368 = vmatpush.bf16.msra.mxu0 %v162
  %369 = vmatpush.bf16.msra.mxu0 %v158
  %370 = vmatpush.bf16.msra.mxu0 %v154
  %371 = vmatmul.bf16.gmra.mxu0 %v349
  %v372 = vpop.f32.mrf.mxu0
  %v373 = vadd.f32 0.0, %v372
  %v374 = vpop.f32.mrf.mxu0
  %375 = vdwg.mxu0
  %376 = vmatpush.bf16.msra.mxu0 %v183
  %377 = vmatpush.bf16.msra.mxu0 %v179
  %378 = vmatpush.bf16.msra.mxu0 %v175
  %379 = vmatpush.bf16.msra.mxu0 %v171
  %380 = vmatpush.bf16.msra.mxu0 %v167
  %381 = vmatpush.bf16.msra.mxu0 %v163
  %382 = vmatpush.bf16.msra.mxu0 %v159
  %383 = vmatpush.bf16.msra.mxu0 %v155
  %384 = vmatmul.bf16.gmra.mxu0 %v349
  %v385 = vpop.f32.mrf.mxu0
  %v386 = vadd.f32 0.0, %v385
  %v387 = vpop.f32.mrf.mxu0
  %388 = vdwg.mxu0
  %389 = vmatpush.bf16.msra.mxu0 %v184
  %390 = vmatpush.bf16.msra.mxu0 %v180
  %391 = vmatpush.bf16.msra.mxu0 %v176
  %392 = vmatpush.bf16.msra.mxu0 %v172
  %393 = vmatpush.bf16.msra.mxu0 %v168
  %394 = vmatpush.bf16.msra.mxu0 %v164
  %395 = vmatpush.bf16.msra.mxu0 %v160
  %396 = vmatpush.bf16.msra.mxu0 %v156
  %397 = vmatmul.bf16.gmra.mxu0 %v349
  %v398 = vpop.f32.mrf.mxu0
  %v399 = vadd.f32 0.0, %v398
  %v400 = vpop.f32.mrf.mxu0
  %401 = vdwg.mxu0
  %v402 = vadd.f32 %v344, %v360
  %v403 = vadd.f32 %v345, %v373
  %v404 = vadd.f32 %v346, %v386
  %v405 = vadd.f32 %v347, %v399
  %v406 = vxor.u32 %v402, 2147483648
  %v407 = vmul.f32 %v406, 1.442695
  %v408 = vpow.pop %v407
  %v409 = vadd.f32 %v408, 1.0
  %v410 = vrcp.pop %v409
  %v411 = vmul.f32 %v409, %v410
  %v412 = vsub.f32 1.0, %v411
  %v413 = vmul.f32 %v410, %v412
  %v414 = vadd.f32 %v410, %v413
  %vm415 = vweird.f32 %v409
  %vm416 = vweird.f32 %v410
  %vm417 = vmor %vm415, %vm416
  %v418 = vsel %vm417, %v410, %v414
  %v419 = vand.u32 2147483647, %v409
  %vm420 = vcmp.eq.f32.partialorder %v419, 8.507059e+37
  %v421 = vand.u32 %v409, 2147483648
  %v422 = vor.u32 1.1754944e-38, %v421
  %v423 = vsel %vm420, %v422, %v418
  %v424 = vmul.f32 1.0, %v423
  %v425 = vxor.u32 %v403, 2147483648
  %v426 = vmul.f32 %v425, 1.442695
  %v427 = vpow.pop %v426
  %v428 = vadd.f32 %v427, 1.0
  %v429 = vrcp.pop %v428
  %v430 = vmul.f32 %v428, %v429
  %v431 = vsub.f32 1.0, %v430
  %v432 = vmul.f32 %v429, %v431
  %v433 = vadd.f32 %v429, %v432
  %vm434 = vweird.f32 %v428
  %vm435 = vweird.f32 %v429
  %vm436 = vmor %vm434, %vm435
  %v437 = vsel %vm436, %v429, %v433
  %v438 = vand.u32 2147483647, %v428
  %vm439 = vcmp.eq.f32.partialorder %v438, 8.507059e+37
  %v440 = vand.u32 %v428, 2147483648
  %v441 = vor.u32 1.1754944e-38, %v440
  %v442 = vsel %vm439, %v441, %v437
  %v443 = vmul.f32 1.0, %v442
  %v444 = vtanh.pop %v404
  %v445 = vxor.u32 %v405, 2147483648
  %v446 = vmul.f32 %v445, 1.442695
  %v447 = vpow.pop %v446
  %v448 = vadd.f32 %v447, 1.0
  %v449 = vrcp.pop %v448
  %v450 = vmul.f32 %v448, %v449
  %v451 = vsub.f32 1.0, %v450
  %v452 = vmul.f32 %v449, %v451
  %v453 = vadd.f32 %v449, %v452
  %vm454 = vweird.f32 %v448
  %vm455 = vweird.f32 %v449
  %vm456 = vmor %vm454, %vm455
  %v457 = vsel %vm456, %v449, %v453
  %v458 = vand.u32 2147483647, %v448
  %vm459 = vcmp.eq.f32.partialorder %v458, 8.507059e+37
  %v460 = vand.u32 %v448, 2147483648
  %v461 = vor.u32 1.1754944e-38, %v460
  %v462 = vsel %vm459, %v461, %v457
  %v463 = vmul.f32 1.0, %v462
  %v464 = vld [vmem:[#allocation3] sm:$0xff]
  %v465 = vmul.f32 %v443, %v464
  %v466 = vmul.f32 %v424, %v444
  %v467 = vadd.f32 %v465, %v466
  %v468 = vtanh.pop %v467
  %v469 = vmul.f32 %v463, %v468
  %470 = vst [vmem:[#allocation3] sm:$0xff] %v467
  %471 = vst [vmem:[#allocation2] sm:$0xff] %v469
  %v472 = vpack.c.bf16 %v469, %v469
  %s473 = scalar_lea.vmem %s2, 4
  %474 = vst [vmem:[%s473] sm:$0xf] %v472
  %s475 = scalar_lea.vmem %s0, 32
  %v476 = vld [vmem:[%s475] sm:$0xff]
  %v477 = vld [vmem:[%s475 + $0x8] sm:$0xff]
  %v478 = vunpack.c.l.bf16 %v476
  %v479 = vunpack.c.h.bf16 %v476
  %v480 = vunpack.c.l.bf16 %v477
  %v481 = vunpack.c.h.bf16 %v477
  %v482 = vld [vmem:[#allocation2] sm:$0xff]
  %v483 = vpack.c.bf16 %v482, %v482
  %484 = vmatpush.bf16.msra.mxu0 %v181
  %485 = vmatpush.bf16.msra.mxu0 %v177
  %486 = vmatpush.bf16.msra.mxu0 %v173
  %487 = vmatpush.bf16.msra.mxu0 %v169
  %488 = vmatpush.bf16.msra.mxu0 %v165
  %489 = vmatpush.bf16.msra.mxu0 %v161
  %490 = vmatpush.bf16.msra.mxu0 %v157
  %491 = vmatpush.bf16.msra.mxu0 %v153
  %492 = vmatmul.bf16.gmra.mxu0 %v483
  %v493 = vpop.f32.mrf.mxu0
  %v494 = vadd.f32 0.0, %v493
  %v495 = vpop.f32.mrf.mxu0
  %496 = vdwg.mxu0
  %497 = vmatpush.bf16.msra.mxu0 %v182
  %498 = vmatpush.bf16.msra.mxu0 %v178
  %499 = vmatpush.bf16.msra.mxu0 %v174
  %500 = vmatpush.bf16.msra.mxu0 %v170
  %501 = vmatpush.bf16.msra.mxu0 %v166
  %502 = vmatpush.bf16.msra.mxu0 %v162
  %503 = vmatpush.bf16.msra.mxu0 %v158
  %504 = vmatpush.bf16.msra.mxu0 %v154
  %505 = vmatmul.bf16.gmra.mxu0 %v483
  %v506 = vpop.f32.mrf.mxu0
  %v507 = vadd.f32 0.0, %v506
  %v508 = vpop.f32.mrf.mxu0
  %509 = vdwg.mxu0
  %510 = vmatpush.bf16.msra.mxu0 %v183
  %511 = vmatpush.bf16.msra.mxu0 %v179
  %512 = vmatpush.bf16.msra.mxu0 %v175
  %513 = vmatpush.bf16.msra.mxu0 %v171
  %514 = vmatpush.bf16.msra.mxu0 %v167
  %515 = vmatpush.bf16.msra.mxu0 %v163
  %516 = vmatpush.bf16.msra.mxu0 %v159
  %517 = vmatpush.bf16.msra.mxu0 %v155
  %518 = vmatmul.bf16.gmra.mxu0 %v483
  %v519 = vpop.f32.mrf.mxu0
  %v520 = vadd.f32 0.0, %v519
  %v521 = vpop.f32.mrf.mxu0
  %522 = vdwg.mxu0
  %523 = vmatpush.bf16.msra.mxu0 %v184
  %524 = vmatpush.bf16.msra.mxu0 %v180
  %525 = vmatpush.bf16.msra.mxu0 %v176
  %526 = vmatpush.bf16.msra.mxu0 %v172
  %527 = vmatpush.bf16.msra.mxu0 %v168
  %528 = vmatpush.bf16.msra.mxu0 %v164
  %529 = vmatpush.bf16.msra.mxu0 %v160
  %530 = vmatpush.bf16.msra.mxu0 %v156
  %531 = vmatmul.bf16.gmra.mxu0 %v483
  %v532 = vpop.f32.mrf.mxu0
  %v533 = vadd.f32 0.0, %v532
  %v534 = vpop.f32.mrf.mxu0
  %535 = vdwg.mxu0
  %v536 = vadd.f32 %v478, %v494
  %v537 = vadd.f32 %v479, %v507
  %v538 = vadd.f32 %v480, %v520
  %v539 = vadd.f32 %v481, %v533
  %v540 = vxor.u32 %v536, 2147483648
  %v541 = vmul.f32 %v540, 1.442695
  %v542 = vpow.pop %v541
  %v543 = vadd.f32 %v542, 1.0
  %v544 = vrcp.pop %v543
  %v545 = vmul.f32 %v543, %v544
  %v546 = vsub.f32 1.0, %v545
  %v547 = vmul.f32 %v544, %v546
  %v548 = vadd.f32 %v544, %v547
  %vm549 = vweird.f32 %v543
  %vm550 = vweird.f32 %v544
  %vm551 = vmor %vm549, %vm550
  %v552 = vsel %vm551, %v544, %v548
  %v553 = vand.u32 2147483647, %v543
  %vm554 = vcmp.eq.f32.partialorder %v553, 8.507059e+37
  %v555 = vand.u32 %v543, 2147483648
  %v556 = vor.u32 1.1754944e-38, %v555
  %v557 = vsel %vm554, %v556, %v552
  %v558 = vmul.f32 1.0, %v557
  %v559 = vxor.u32 %v537, 2147483648
  %v560 = vmul.f32 %v559, 1.442695
  %v561 = vpow.pop %v560
  %v562 = vadd.f32 %v561, 1.0
  %v563 = vrcp.pop %v562
  %v564 = vmul.f32 %v562, %v563
  %v565 = vsub.f32 1.0, %v564
  %v566 = vmul.f32 %v563, %v565
  %v567 = vadd.f32 %v563, %v566
  %vm568 = vweird.f32 %v562
  %vm569 = vweird.f32 %v563
  %vm570 = vmor %vm568, %vm569
  %v571 = vsel %vm570, %v563, %v567
  %v572 = vand.u32 2147483647, %v562
  %vm573 = vcmp.eq.f32.partialorder %v572, 8.507059e+37
  %v574 = vand.u32 %v562, 2147483648
  %v575 = vor.u32 1.1754944e-38, %v574
  %v576 = vsel %vm573, %v575, %v571
  %v577 = vmul.f32 1.0, %v576
  %v578 = vtanh.pop %v538
  %v579 = vxor.u32 %v539, 2147483648
  %v580 = vmul.f32 %v579, 1.442695
  %v581 = vpow.pop %v580
  %v582 = vadd.f32 %v581, 1.0
  %v583 = vrcp.pop %v582
  %v584 = vmul.f32 %v582, %v583
  %v585 = vsub.f32 1.0, %v584
  %v586 = vmul.f32 %v583, %v585
  %v587 = vadd.f32 %v583, %v586
  %vm588 = vweird.f32 %v582
  %vm589 = vweird.f32 %v583
  %vm590 = vmor %vm588, %vm589
  %v591 = vsel %vm590, %v583, %v587
  %v592 = vand.u32 2147483647, %v582
  %vm593 = vcmp.eq.f32.partialorder %v592, 8.507059e+37
  %v594 = vand.u32 %v582, 2147483648
  %v595 = vor.u32 1.1754944e-38, %v594
  %v596 = vsel %vm593, %v595, %v591
  %v597 = vmul.f32 1.0, %v596
  %v598 = vld [vmem:[#allocation3] sm:$0xff]
  %v599 = vmul.f32 %v577, %v598
  %v600 = vmul.f32 %v558, %v578
  %v601 = vadd.f32 %v599, %v600
  %v602 = vtanh.pop %v601
  %v603 = vmul.f32 %v597, %v602
  %604 = vst [vmem:[#allocation3] sm:$0xff] %v601
  %605 = vst [vmem:[#allocation2] sm:$0xff] %v603
  %v606 = vpack.c.bf16 %v603, %v603
  %s607 = scalar_lea.vmem %s2, 8
  %608 = vst [vmem:[%s607] sm:$0xf] %v606
  %s609 = scalar_lea.vmem %s0, 48
  %v610 = vld [vmem:[%s609] sm:$0xff]
  %v611 = vld [vmem:[%s609 + $0x8] sm:$0xff]
  %v612 = vunpack.c.l.bf16 %v610
  %v613 = vunpack.c.h.bf16 %v610
  %v614 = vunpack.c.l.bf16 %v611
  %v615 = vunpack.c.h.bf16 %v611
  %v616 = vld [vmem:[#allocation2] sm:$0xff]
  %v617 = vpack.c.bf16 %v616, %v616
  %618 = vmatpush.bf16.msra.mxu0 %v181
  %619 = vmatpush.bf16.msra.mxu0 %v177
  %620 = vmatpush.bf16.msra.mxu0 %v173
  %621 = vmatpush.bf16.msra.mxu0 %v169
  %622 = vmatpush.bf16.msra.mxu0 %v165
  %623 = vmatpush.bf16.msra.mxu0 %v161
  %624 = vmatpush.bf16.msra.mxu0 %v157
  %625 = vmatpush.bf16.msra.mxu0 %v153
  %626 = vmatmul.bf16.gmra.mxu0 %v617
  %v627 = vpop.f32.mrf.mxu0
  %v628 = vadd.f32 0.0, %v627
  %v629 = vpop.f32.mrf.mxu0
  %630 = vdwg.mxu0
  %631 = vmatpush.bf16.msra.mxu0 %v182
  %632 = vmatpush.bf16.msra.mxu0 %v178
  %633 = vmatpush.bf16.msra.mxu0 %v174
  %634 = vmatpush.bf16.msra.mxu0 %v170
  %635 = vmatpush.bf16.msra.mxu0 %v166
  %636 = vmatpush.bf16.msra.mxu0 %v162
  %637 = vmatpush.bf16.msra.mxu0 %v158
  %638 = vmatpush.bf16.msra.mxu0 %v154
  %639 = vmatmul.bf16.gmra.mxu0 %v617
  %v640 = vpop.f32.mrf.mxu0
  %v641 = vadd.f32 0.0, %v640
  %v642 = vpop.f32.mrf.mxu0
  %643 = vdwg.mxu0
  %644 = vmatpush.bf16.msra.mxu0 %v183
  %645 = vmatpush.bf16.msra.mxu0 %v179
  %646 = vmatpush.bf16.msra.mxu0 %v175
  %647 = vmatpush.bf16.msra.mxu0 %v171
  %648 = vmatpush.bf16.msra.mxu0 %v167
  %649 = vmatpush.bf16.msra.mxu0 %v163
  %650 = vmatpush.bf16.msra.mxu0 %v159
  %651 = vmatpush.bf16.msra.mxu0 %v155
  %652 = vmatmul.bf16.gmra.mxu0 %v617
  %v653 = vpop.f32.mrf.mxu0
  %v654 = vadd.f32 0.0, %v653
  %v655 = vpop.f32.mrf.mxu0
  %656 = vdwg.mxu0
  %657 = vmatpush.bf16.msra.mxu0 %v184
  %658 = vmatpush.bf16.msra.mxu0 %v180
  %659 = vmatpush.bf16.msra.mxu0 %v176
  %660 = vmatpush.bf16.msra.mxu0 %v172
  %661 = vmatpush.bf16.msra.mxu0 %v168
  %662 = vmatpush.bf16.msra.mxu0 %v164
  %663 = vmatpush.bf16.msra.mxu0 %v160
  %664 = vmatpush.bf16.msra.mxu0 %v156
  %665 = vmatmul.bf16.gmra.mxu0 %v617
  %v666 = vpop.f32.mrf.mxu0
  %v667 = vadd.f32 0.0, %v666
  %v668 = vpop.f32.mrf.mxu0
  %669 = vdwg.mxu0
  %v670 = vadd.f32 %v612, %v628
  %v671 = vadd.f32 %v613, %v641
  %v672 = vadd.f32 %v614, %v654
  %v673 = vadd.f32 %v615, %v667
  %v674 = vxor.u32 %v670, 2147483648
  %v675 = vmul.f32 %v674, 1.442695
  %v676 = vpow.pop %v675
  %v677 = vadd.f32 %v676, 1.0
  %v678 = vrcp.pop %v677
  %v679 = vmul.f32 %v677, %v678
  %v680 = vsub.f32 1.0, %v679
  %v681 = vmul.f32 %v678, %v680
  %v682 = vadd.f32 %v678, %v681
  %vm683 = vweird.f32 %v677
  %vm684 = vweird.f32 %v678
  %vm685 = vmor %vm683, %vm684
  %v686 = vsel %vm685, %v678, %v682
  %v687 = vand.u32 2147483647, %v677
  %vm688 = vcmp.eq.f32.partialorder %v687, 8.507059e+37
  %v689 = vand.u32 %v677, 2147483648
  %v690 = vor.u32 1.1754944e-38, %v689
  %v691 = vsel %vm688, %v690, %v686
  %v692 = vmul.f32 1.0, %v691
  %v693 = vxor.u32 %v671, 2147483648
  %v694 = vmul.f32 %v693, 1.442695
  %v695 = vpow.pop %v694
  %v696 = vadd.f32 %v695, 1.0
  %v697 = vrcp.pop %v696
  %v698 = vmul.f32 %v696, %v697
  %v699 = vsub.f32 1.0, %v698
  %v700 = vmul.f32 %v697, %v699
  %v701 = vadd.f32 %v697, %v700
  %vm702 = vweird.f32 %v696
  %vm703 = vweird.f32 %v697
  %vm704 = vmor %vm702, %vm703
  %v705 = vsel %vm704, %v697, %v701
  %v706 = vand.u32 2147483647, %v696
  %vm707 = vcmp.eq.f32.partialorder %v706, 8.507059e+37
  %v708 = vand.u32 %v696, 2147483648
  %v709 = vor.u32 1.1754944e-38, %v708
  %v710 = vsel %vm707, %v709, %v705
  %v711 = vmul.f32 1.0, %v710
  %v712 = vtanh.pop %v672
  %v713 = vxor.u32 %v673, 2147483648
  %v714 = vmul.f32 %v713, 1.442695
  %v715 = vpow.pop %v714
  %v716 = vadd.f32 %v715, 1.0
  %v717 = vrcp.pop %v716
  %v718 = vmul.f32 %v716, %v717
  %v719 = vsub.f32 1.0, %v718
  %v720 = vmul.f32 %v717, %v719
  %v721 = vadd.f32 %v717, %v720
  %vm722 = vweird.f32 %v716
  %vm723 = vweird.f32 %v717
  %vm724 = vmor %vm722, %vm723
  %v725 = vsel %vm724, %v717, %v721
  %v726 = vand.u32 2147483647, %v716
  %vm727 = vcmp.eq.f32.partialorder %v726, 8.507059e+37
  %v728 = vand.u32 %v716, 2147483648
  %v729 = vor.u32 1.1754944e-38, %v728
  %v730 = vsel %vm727, %v729, %v725
  %v731 = vmul.f32 1.0, %v730
  %v732 = vld [vmem:[#allocation3] sm:$0xff]
  %v733 = vmul.f32 %v711, %v732
  %v734 = vmul.f32 %v692, %v712
  %v735 = vadd.f32 %v733, %v734
  %v736 = vtanh.pop %v735
  %v737 = vmul.f32 %v731, %v736
  %738 = vst [vmem:[#allocation3] sm:$0xff] %v735
  %739 = vst [vmem:[#allocation2] sm:$0xff] %v737
  %v740 = vpack.c.bf16 %v737, %v737
  %s741 = scalar_lea.vmem %s2, 12
  %742 = vst [vmem:[%s741] sm:$0xf] %v740
  %s743 = scalar_lea.vmem %s0, 64
  %v744 = vld [vmem:[%s743] sm:$0xff]
  %v745 = vld [vmem:[%s743 + $0x8] sm:$0xff]
  %v746 = vunpack.c.l.bf16 %v744
  %v747 = vunpack.c.h.bf16 %v744
  %v748 = vunpack.c.l.bf16 %v745
  %v749 = vunpack.c.h.bf16 %v745
  %v750 = vld [vmem:[#allocation2] sm:$0xff]
  %v751 = vpack.c.bf16 %v750, %v750
  %752 = vmatpush.bf16.msra.mxu0 %v181
  %753 = vmatpush.bf16.msra.mxu0 %v177
  %754 = vmatpush.bf16.msra.mxu0 %v173
  %755 = vmatpush.bf16.msra.mxu0 %v169
  %756 = vmatpush.bf16.msra.mxu0 %v165
  %757 = vmatpush.bf16.msra.mxu0 %v161
  %758 = vmatpush.bf16.msra.mxu0 %v157
  %759 = vmatpush.bf16.msra.mxu0 %v153
  %760 = vmatmul.bf16.gmra.mxu0 %v751
  %v761 = vpop.f32.mrf.mxu0
  %v762 = vadd.f32 0.0, %v761
  %v763 = vpop.f32.mrf.mxu0
  %764 = vdwg.mxu0
  %765 = vmatpush.bf16.msra.mxu0 %v182
  %766 = vmatpush.bf16.msra.mxu0 %v178
  %767 = vmatpush.bf16.msra.mxu0 %v174
  %768 = vmatpush.bf16.msra.mxu0 %v170
  %769 = vmatpush.bf16.msra.mxu0 %v166
  %770 = vmatpush.bf16.msra.mxu0 %v162
  %771 = vmatpush.bf16.msra.mxu0 %v158
  %772 = vmatpush.bf16.msra.mxu0 %v154
  %773 = vmatmul.bf16.gmra.mxu0 %v751
  %v774 = vpop.f32.mrf.mxu0
  %v775 = vadd.f32 0.0, %v774
  %v776 = vpop.f32.mrf.mxu0
  %777 = vdwg.mxu0
  %778 = vmatpush.bf16.msra.mxu0 %v183
  %779 = vmatpush.bf16.msra.mxu0 %v179
  %780 = vmatpush.bf16.msra.mxu0 %v175
  %781 = vmatpush.bf16.msra.mxu0 %v171
  %782 = vmatpush.bf16.msra.mxu0 %v167
  %783 = vmatpush.bf16.msra.mxu0 %v163
  %784 = vmatpush.bf16.msra.mxu0 %v159
  %785 = vmatpush.bf16.msra.mxu0 %v155
  %786 = vmatmul.bf16.gmra.mxu0 %v751
  %v787 = vpop.f32.mrf.mxu0
  %v788 = vadd.f32 0.0, %v787
  %v789 = vpop.f32.mrf.mxu0
  %790 = vdwg.mxu0
  %791 = vmatpush.bf16.msra.mxu0 %v184
  %792 = vmatpush.bf16.msra.mxu0 %v180
  %793 = vmatpush.bf16.msra.mxu0 %v176
  %794 = vmatpush.bf16.msra.mxu0 %v172
  %795 = vmatpush.bf16.msra.mxu0 %v168
  %796 = vmatpush.bf16.msra.mxu0 %v164
  %797 = vmatpush.bf16.msra.mxu0 %v160
  %798 = vmatpush.bf16.msra.mxu0 %v156
  %799 = vmatmul.bf16.gmra.mxu0 %v751
  %v800 = vpop.f32.mrf.mxu0
  %v801 = vadd.f32 0.0, %v800
  %v802 = vpop.f32.mrf.mxu0
  %803 = vdwg.mxu0
  %v804 = vadd.f32 %v746, %v762
  %v805 = vadd.f32 %v747, %v775
  %v806 = vadd.f32 %v748, %v788
  %v807 = vadd.f32 %v749, %v801
  %v808 = vxor.u32 %v804, 2147483648
  %v809 = vmul.f32 %v808, 1.442695
  %v810 = vpow.pop %v809
  %v811 = vadd.f32 %v810, 1.0
  %v812 = vrcp.pop %v811
  %v813 = vmul.f32 %v811, %v812
  %v814 = vsub.f32 1.0, %v813
  %v815 = vmul.f32 %v812, %v814
  %v816 = vadd.f32 %v812, %v815
  %vm817 = vweird.f32 %v811
  %vm818 = vweird.f32 %v812
  %vm819 = vmor %vm817, %vm818
  %v820 = vsel %vm819, %v812, %v816
  %v821 = vand.u32 2147483647, %v811
  %vm822 = vcmp.eq.f32.partialorder %v821, 8.507059e+37
  %v823 = vand.u32 %v811, 2147483648
  %v824 = vor.u32 1.1754944e-38, %v823
  %v825 = vsel %vm822, %v824, %v820
  %v826 = vmul.f32 1.0, %v825
  %v827 = vxor.u32 %v805, 2147483648
  %v828 = vmul.f32 %v827, 1.442695
  %v829 = vpow.pop %v828
  %v830 = vadd.f32 %v829, 1.0
  %v831 = vrcp.pop %v830
  %v832 = vmul.f32 %v830, %v831
  %v833 = vsub.f32 1.0, %v832
  %v834 = vmul.f32 %v831, %v833
  %v835 = vadd.f32 %v831, %v834
  %vm836 = vweird.f32 %v830
  %vm837 = vweird.f32 %v831
  %vm838 = vmor %vm836, %vm837
  %v839 = vsel %vm838, %v831, %v835
  %v840 = vand.u32 2147483647, %v830
  %vm841 = vcmp.eq.f32.partialorder %v840, 8.507059e+37
  %v842 = vand.u32 %v830, 2147483648
  %v843 = vor.u32 1.1754944e-38, %v842
  %v844 = vsel %vm841, %v843, %v839
  %v845 = vmul.f32 1.0, %v844
  %v846 = vtanh.pop %v806
  %v847 = vxor.u32 %v807, 2147483648
  %v848 = vmul.f32 %v847, 1.442695
  %v849 = vpow.pop %v848
  %v850 = vadd.f32 %v849, 1.0
  %v851 = vrcp.pop %v850
  %v852 = vmul.f32 %v850, %v851
  %v853 = vsub.f32 1.0, %v852
  %v854 = vmul.f32 %v851, %v853
  %v855 = vadd.f32 %v851, %v854
  %vm856 = vweird.f32 %v850
  %vm857 = vweird.f32 %v851
  %vm858 = vmor %vm856, %vm857
  %v859 = vsel %vm858, %v851, %v855
  %v860 = vand.u32 2147483647, %v850
  %vm861 = vcmp.eq.f32.partialorder %v860, 8.507059e+37
  %v862 = vand.u32 %v850, 2147483648
  %v863 = vor.u32 1.1754944e-38, %v862
  %v864 = vsel %vm861, %v863, %v859
  %v865 = vmul.f32 1.0, %v864
  %v866 = vld [vmem:[#allocation3] sm:$0xff]
  %v867 = vmul.f32 %v845, %v866
  %v868 = vmul.f32 %v826, %v846
  %v869 = vadd.f32 %v867, %v868
  %v870 = vtanh.pop %v869
  %v871 = vmul.f32 %v865, %v870
  %872 = vst [vmem:[#allocation3] sm:$0xff] %v869
  %873 = vst [vmem:[#allocation2] sm:$0xff] %v871
  %v874 = vpack.c.bf16 %v871, %v871
  %s875 = scalar_lea.vmem %s2, 16
  %876 = vst [vmem:[%s875] sm:$0xf] %v874
  %s877 = scalar_lea.vmem %s0, 80
  %v878 = vld [vmem:[%s877] sm:$0xff]
  %v879 = vld [vmem:[%s877 + $0x8] sm:$0xff]
  %v880 = vunpack.c.l.bf16 %v878
  %v881 = vunpack.c.h.bf16 %v878
  %v882 = vunpack.c.l.bf16 %v879
  %v883 = vunpack.c.h.bf16 %v879
  %v884 = vld [vmem:[#allocation2] sm:$0xff]
  %v885 = vpack.c.bf16 %v884, %v884
  %886 = vmatpush.bf16.msra.mxu0 %v181
  %887 = vmatpush.bf16.msra.mxu0 %v177
  %888 = vmatpush.bf16.msra.mxu0 %v173
  %889 = vmatpush.bf16.msra.mxu0 %v169
  %890 = vmatpush.bf16.msra.mxu0 %v165
  %891 = vmatpush.bf16.msra.mxu0 %v161
  %892 = vmatpush.bf16.msra.mxu0 %v157
  %893 = vmatpush.bf16.msra.mxu0 %v153
  %894 = vmatmul.bf16.gmra.mxu0 %v885
  %v895 = vpop.f32.mrf.mxu0
  %v896 = vadd.f32 0.0, %v895
  %v897 = vpop.f32.mrf.mxu0
  %898 = vdwg.mxu0
  %899 = vmatpush.bf16.msra.mxu0 %v182
  %900 = vmatpush.bf16.msra.mxu0 %v178
  %901 = vmatpush.bf16.msra.mxu0 %v174
  %902 = vmatpush.bf16.msra.mxu0 %v170
  %903 = vmatpush.bf16.msra.mxu0 %v166
  %904 = vmatpush.bf16.msra.mxu0 %v162
  %905 = vmatpush.bf16.msra.mxu0 %v158
  %906 = vmatpush.bf16.msra.mxu0 %v154
  %907 = vmatmul.bf16.gmra.mxu0 %v885
  %v908 = vpop.f32.mrf.mxu0
  %v909 = vadd.f32 0.0, %v908
  %v910 = vpop.f32.mrf.mxu0
  %911 = vdwg.mxu0
  %912 = vmatpush.bf16.msra.mxu0 %v183
  %913 = vmatpush.bf16.msra.mxu0 %v179
  %914 = vmatpush.bf16.msra.mxu0 %v175
  %915 = vmatpush.bf16.msra.mxu0 %v171
  %916 = vmatpush.bf16.msra.mxu0 %v167
  %917 = vmatpush.bf16.msra.mxu0 %v163
  %918 = vmatpush.bf16.msra.mxu0 %v159
  %919 = vmatpush.bf16.msra.mxu0 %v155
  %920 = vmatmul.bf16.gmra.mxu0 %v885
  %v921 = vpop.f32.mrf.mxu0
  %v922 = vadd.f32 0.0, %v921
  %v923 = vpop.f32.mrf.mxu0
  %924 = vdwg.mxu0
  %925 = vmatpush.bf16.msra.mxu0 %v184
  %926 = vmatpush.bf16.msra.mxu0 %v180
  %927 = vmatpush.bf16.msra.mxu0 %v176
  %928 = vmatpush.bf16.msra.mxu0 %v172
  %929 = vmatpush.bf16.msra.mxu0 %v168
  %930 = vmatpush.bf16.msra.mxu0 %v164
  %931 = vmatpush.bf16.msra.mxu0 %v160
  %932 = vmatpush.bf16.msra.mxu0 %v156
  %933 = vmatmul.bf16.gmra.mxu0 %v885
  %v934 = vpop.f32.mrf.mxu0
  %v935 = vadd.f32 0.0, %v934
  %v936 = vpop.f32.mrf.mxu0
  %937 = vdwg.mxu0
  %v938 = vadd.f32 %v880, %v896
  %v939 = vadd.f32 %v881, %v909
  %v940 = vadd.f32 %v882, %v922
  %v941 = vadd.f32 %v883, %v935
  %v942 = vxor.u32 %v938, 2147483648
  %v943 = vmul.f32 %v942, 1.442695
  %v944 = vpow.pop %v943
  %v945 = vadd.f32 %v944, 1.0
  %v946 = vrcp.pop %v945
  %v947 = vmul.f32 %v945, %v946
  %v948 = vsub.f32 1.0, %v947
  %v949 = vmul.f32 %v946, %v948
  %v950 = vadd.f32 %v946, %v949
  %vm951 = vweird.f32 %v945
  %vm952 = vweird.f32 %v946
  %vm953 = vmor %vm951, %vm952
  %v954 = vsel %vm953, %v946, %v950
  %v955 = vand.u32 2147483647, %v945
  %vm956 = vcmp.eq.f32.partialorder %v955, 8.507059e+37
  %v957 = vand.u32 %v945, 2147483648
  %v958 = vor.u32 1.1754944e-38, %v957
  %v959 = vsel %vm956, %v958, %v954
  %v960 = vmul.f32 1.0, %v959
  %v961 = vxor.u32 %v939, 2147483648
  %v962 = vmul.f32 %v961, 1.442695
  %v963 = vpow.pop %v962
  %v964 = vadd.f32 %v963, 1.0
  %v965 = vrcp.pop %v964
  %v966 = vmul.f32 %v964, %v965
  %v967 = vsub.f32 1.0, %v966
  %v968 = vmul.f32 %v965, %v967
  %v969 = vadd.f32 %v965, %v968
  %vm970 = vweird.f32 %v964
  %vm971 = vweird.f32 %v965
  %vm972 = vmor %vm970, %vm971
  %v973 = vsel %vm972, %v965, %v969
  %v974 = vand.u32 2147483647, %v964
  %vm975 = vcmp.eq.f32.partialorder %v974, 8.507059e+37
  %v976 = vand.u32 %v964, 2147483648
  %v977 = vor.u32 1.1754944e-38, %v976
  %v978 = vsel %vm975, %v977, %v973
  %v979 = vmul.f32 1.0, %v978
  %v980 = vtanh.pop %v940
  %v981 = vxor.u32 %v941, 2147483648
  %v982 = vmul.f32 %v981, 1.442695
  %v983 = vpow.pop %v982
  %v984 = vadd.f32 %v983, 1.0
  %v985 = vrcp.pop %v984
  %v986 = vmul.f32 %v984, %v985
  %v987 = vsub.f32 1.0, %v986
  %v988 = vmul.f32 %v985, %v987
  %v989 = vadd.f32 %v985, %v988
  %vm990 = vweird.f32 %v984
  %vm991 = vweird.f32 %v985
  %vm992 = vmor %vm990, %vm991
  %v993 = vsel %vm992, %v985, %v989
  %v994 = vand.u32 2147483647, %v984
  %vm995 = vcmp.eq.f32.partialorder %v994, 8.507059e+37
  %v996 = vand.u32 %v984, 2147483648
  %v997 = vor.u32 1.1754944e-38, %v996
  %v998 = vsel %vm995, %v997, %v993
  %v999 = vmul.f32 1.0, %v998
  %v1000 = vld [vmem:[#allocation3] sm:$0xff]
  %v1001 = vmul.f32 %v979, %v1000
  %v1002 = vmul.f32 %v960, %v980
  %v1003 = vadd.f32 %v1001, %v1002
  %v1004 = vtanh.pop %v1003
  %v1005 = vmul.f32 %v999, %v1004
  %1006 = vst [vmem:[#allocation3] sm:$0xff] %v1003
  %1007 = vst [vmem:[#allocation2] sm:$0xff] %v1005
  %v1008 = vpack.c.bf16 %v1005, %v1005
  %s1009 = scalar_lea.vmem %s2, 20
  %1010 = vst [vmem:[%s1009] sm:$0xf] %v1008
  %s1011 = scalar_lea.vmem %s0, 96
  %v1012 = vld [vmem:[%s1011] sm:$0xff]
  %v1013 = vld [vmem:[%s1011 + $0x8] sm:$0xff]
  %v1014 = vunpack.c.l.bf16 %v1012
  %v1015 = vunpack.c.h.bf16 %v1012
  %v1016 = vunpack.c.l.bf16 %v1013
  %v1017 = vunpack.c.h.bf16 %v1013
  %v1018 = vld [vmem:[#allocation2] sm:$0xff]
  %v1019 = vpack.c.bf16 %v1018, %v1018
  %1020 = vmatpush.bf16.msra.mxu0 %v181
  %1021 = vmatpush.bf16.msra.mxu0 %v177
  %1022 = vmatpush.bf16.msra.mxu0 %v173
  %1023 = vmatpush.bf16.msra.mxu0 %v169
  %1024 = vmatpush.bf16.msra.mxu0 %v165
  %1025 = vmatpush.bf16.msra.mxu0 %v161
  %1026 = vmatpush.bf16.msra.mxu0 %v157
  %1027 = vmatpush.bf16.msra.mxu0 %v153
  %1028 = vmatmul.bf16.gmra.mxu0 %v1019
  %v1029 = vpop.f32.mrf.mxu0
  %v1030 = vadd.f32 0.0, %v1029
  %v1031 = vpop.f32.mrf.mxu0
  %1032 = vdwg.mxu0
  %1033 = vmatpush.bf16.msra.mxu0 %v182
  %1034 = vmatpush.bf16.msra.mxu0 %v178
  %1035 = vmatpush.bf16.msra.mxu0 %v174
  %1036 = vmatpush.bf16.msra.mxu0 %v170
  %1037 = vmatpush.bf16.msra.mxu0 %v166
  %1038 = vmatpush.bf16.msra.mxu0 %v162
  %1039 = vmatpush.bf16.msra.mxu0 %v158
  %1040 = vmatpush.bf16.msra.mxu0 %v154
  %1041 = vmatmul.bf16.gmra.mxu0 %v1019
  %v1042 = vpop.f32.mrf.mxu0
  %v1043 = vadd.f32 0.0, %v1042
  %v1044 = vpop.f32.mrf.mxu0
  %1045 = vdwg.mxu0
  %1046 = vmatpush.bf16.msra.mxu0 %v183
  %1047 = vmatpush.bf16.msra.mxu0 %v179
  %1048 = vmatpush.bf16.msra.mxu0 %v175
  %1049 = vmatpush.bf16.msra.mxu0 %v171
  %1050 = vmatpush.bf16.msra.mxu0 %v167
  %1051 = vmatpush.bf16.msra.mxu0 %v163
  %1052 = vmatpush.bf16.msra.mxu0 %v159
  %1053 = vmatpush.bf16.msra.mxu0 %v155
  %1054 = vmatmul.bf16.gmra.mxu0 %v1019
  %v1055 = vpop.f32.mrf.mxu0
  %v1056 = vadd.f32 0.0, %v1055
  %v1057 = vpop.f32.mrf.mxu0
  %1058 = vdwg.mxu0
  %1059 = vmatpush.bf16.msra.mxu0 %v184
  %1060 = vmatpush.bf16.msra.mxu0 %v180
  %1061 = vmatpush.bf16.msra.mxu0 %v176
  %1062 = vmatpush.bf16.msra.mxu0 %v172
  %1063 = vmatpush.bf16.msra.mxu0 %v168
  %1064 = vmatpush.bf16.msra.mxu0 %v164
  %1065 = vmatpush.bf16.msra.mxu0 %v160
  %1066 = vmatpush.bf16.msra.mxu0 %v156
  %1067 = vmatmul.bf16.gmra.mxu0 %v1019
  %v1068 = vpop.f32.mrf.mxu0
  %v1069 = vadd.f32 0.0, %v1068
  %v1070 = vpop.f32.mrf.mxu0
  %1071 = vdwg.mxu0
  %v1072 = vadd.f32 %v1014, %v1030
  %v1073 = vadd.f32 %v1015, %v1043
  %v1074 = vadd.f32 %v1016, %v1056
  %v1075 = vadd.f32 %v1017, %v1069
  %v1076 = vxor.u32 %v1072, 2147483648
  %v1077 = vmul.f32 %v1076, 1.442695
  %v1078 = vpow.pop %v1077
  %v1079 = vadd.f32 %v1078, 1.0
  %v1080 = vrcp.pop %v1079
  %v1081 = vmul.f32 %v1079, %v1080
  %v1082 = vsub.f32 1.0, %v1081
  %v1083 = vmul.f32 %v1080, %v1082
  %v1084 = vadd.f32 %v1080, %v1083
  %vm1085 = vweird.f32 %v1079
  %vm1086 = vweird.f32 %v1080
  %vm1087 = vmor %vm1085, %vm1086
  %v1088 = vsel %vm1087, %v1080, %v1084
  %v1089 = vand.u32 2147483647, %v1079
  %vm1090 = vcmp.eq.f32.partialorder %v1089, 8.507059e+37
  %v1091 = vand.u32 %v1079, 2147483648
  %v1092 = vor.u32 1.1754944e-38, %v1091
  %v1093 = vsel %vm1090, %v1092, %v1088
  %v1094 = vmul.f32 1.0, %v1093
  %v1095 = vxor.u32 %v1073, 2147483648
  %v1096 = vmul.f32 %v1095, 1.442695
  %v1097 = vpow.pop %v1096
  %v1098 = vadd.f32 %v1097, 1.0
  %v1099 = vrcp.pop %v1098
  %v1100 = vmul.f32 %v1098, %v1099
  %v1101 = vsub.f32 1.0, %v1100
  %v1102 = vmul.f32 %v1099, %v1101
  %v1103 = vadd.f32 %v1099, %v1102
  %vm1104 = vweird.f32 %v1098
  %vm1105 = vweird.f32 %v1099
  %vm1106 = vmor %vm1104, %vm1105
  %v1107 = vsel %vm1106, %v1099, %v1103
  %v1108 = vand.u32 2147483647, %v1098
  %vm1109 = vcmp.eq.f32.partialorder %v1108, 8.507059e+37
  %v1110 = vand.u32 %v1098, 2147483648
  %v1111 = vor.u32 1.1754944e-38, %v1110
  %v1112 = vsel %vm1109, %v1111, %v1107
  %v1113 = vmul.f32 1.0, %v1112
  %v1114 = vtanh.pop %v1074
  %v1115 = vxor.u32 %v1075, 2147483648
  %v1116 = vmul.f32 %v1115, 1.442695
  %v1117 = vpow.pop %v1116
  %v1118 = vadd.f32 %v1117, 1.0
  %v1119 = vrcp.pop %v1118
  %v1120 = vmul.f32 %v1118, %v1119
  %v1121 = vsub.f32 1.0, %v1120
  %v1122 = vmul.f32 %v1119, %v1121
  %v1123 = vadd.f32 %v1119, %v1122
  %vm1124 = vweird.f32 %v1118
  %vm1125 = vweird.f32 %v1119
  %vm1126 = vmor %vm1124, %vm1125
  %v1127 = vsel %vm1126, %v1119, %v1123
  %v1128 = vand.u32 2147483647, %v1118
  %vm1129 = vcmp.eq.f32.partialorder %v1128, 8.507059e+37
  %v1130 = vand.u32 %v1118, 2147483648
  %v1131 = vor.u32 1.1754944e-38, %v1130
  %v1132 = vsel %vm1129, %v1131, %v1127
  %v1133 = vmul.f32 1.0, %v1132
  %v1134 = vld [vmem:[#allocation3] sm:$0xff]
  %v1135 = vmul.f32 %v1113, %v1134
  %v1136 = vmul.f32 %v1094, %v1114
  %v1137 = vadd.f32 %v1135, %v1136
  %v1138 = vtanh.pop %v1137
  %v1139 = vmul.f32 %v1133, %v1138
  %1140 = vst [vmem:[#allocation3] sm:$0xff] %v1137
  %1141 = vst [vmem:[#allocation2] sm:$0xff] %v1139
  %v1142 = vpack.c.bf16 %v1139, %v1139
  %s1143 = scalar_lea.vmem %s2, 24
  %1144 = vst [vmem:[%s1143] sm:$0xf] %v1142
  %s1145 = scalar_lea.vmem %s0, 112
  %v1146 = vld [vmem:[%s1145] sm:$0xff]
  %v1147 = vld [vmem:[%s1145 + $0x8] sm:$0xff]
  %v1148 = vunpack.c.l.bf16 %v1146
  %v1149 = vunpack.c.h.bf16 %v1146
  %v1150 = vunpack.c.l.bf16 %v1147
  %v1151 = vunpack.c.h.bf16 %v1147
  %v1152 = vld [vmem:[#allocation2] sm:$0xff]
  %v1153 = vpack.c.bf16 %v1152, %v1152
  %1154 = vmatpush.bf16.msra.mxu0 %v181
  %1155 = vmatpush.bf16.msra.mxu0 %v177
  %1156 = vmatpush.bf16.msra.mxu0 %v173
  %1157 = vmatpush.bf16.msra.mxu0 %v169
  %1158 = vmatpush.bf16.msra.mxu0 %v165
  %1159 = vmatpush.bf16.msra.mxu0 %v161
  %1160 = vmatpush.bf16.msra.mxu0 %v157
  %1161 = vmatpush.bf16.msra.mxu0 %v153
  %1162 = vmatmul.bf16.gmra.mxu0 %v1153
  %v1163 = vpop.f32.mrf.mxu0
  %v1164 = vadd.f32 0.0, %v1163
  %v1165 = vpop.f32.mrf.mxu0
  %1166 = vdwg.mxu0
  %1167 = vmatpush.bf16.msra.mxu0 %v182
  %1168 = vmatpush.bf16.msra.mxu0 %v178
  %1169 = vmatpush.bf16.msra.mxu0 %v174
  %1170 = vmatpush.bf16.msra.mxu0 %v170
  %1171 = vmatpush.bf16.msra.mxu0 %v166
  %1172 = vmatpush.bf16.msra.mxu0 %v162
  %1173 = vmatpush.bf16.msra.mxu0 %v158
  %1174 = vmatpush.bf16.msra.mxu0 %v154
  %1175 = vmatmul.bf16.gmra.mxu0 %v1153
  %v1176 = vpop.f32.mrf.mxu0
  %v1177 = vadd.f32 0.0, %v1176
  %v1178 = vpop.f32.mrf.mxu0
  %1179 = vdwg.mxu0
  %1180 = vmatpush.bf16.msra.mxu0 %v183
  %1181 = vmatpush.bf16.msra.mxu0 %v179
  %1182 = vmatpush.bf16.msra.mxu0 %v175
  %1183 = vmatpush.bf16.msra.mxu0 %v171
  %1184 = vmatpush.bf16.msra.mxu0 %v167
  %1185 = vmatpush.bf16.msra.mxu0 %v163
  %1186 = vmatpush.bf16.msra.mxu0 %v159
  %1187 = vmatpush.bf16.msra.mxu0 %v155
  %1188 = vmatmul.bf16.gmra.mxu0 %v1153
  %v1189 = vpop.f32.mrf.mxu0
  %v1190 = vadd.f32 0.0, %v1189
  %v1191 = vpop.f32.mrf.mxu0
  %1192 = vdwg.mxu0
  %1193 = vmatpush.bf16.msra.mxu0 %v184
  %1194 = vmatpush.bf16.msra.mxu0 %v180
  %1195 = vmatpush.bf16.msra.mxu0 %v176
  %1196 = vmatpush.bf16.msra.mxu0 %v172
  %1197 = vmatpush.bf16.msra.mxu0 %v168
  %1198 = vmatpush.bf16.msra.mxu0 %v164
  %1199 = vmatpush.bf16.msra.mxu0 %v160
  %1200 = vmatpush.bf16.msra.mxu0 %v156
  %1201 = vmatmul.bf16.gmra.mxu0 %v1153
  %v1202 = vpop.f32.mrf.mxu0
  %v1203 = vadd.f32 0.0, %v1202
  %v1204 = vpop.f32.mrf.mxu0
  %1205 = vdwg.mxu0
  %v1206 = vadd.f32 %v1148, %v1164
  %v1207 = vadd.f32 %v1149, %v1177
  %v1208 = vadd.f32 %v1150, %v1190
  %v1209 = vadd.f32 %v1151, %v1203
  %v1210 = vxor.u32 %v1206, 2147483648
  %v1211 = vmul.f32 %v1210, 1.442695
  %v1212 = vpow.pop %v1211
  %v1213 = vadd.f32 %v1212, 1.0
  %v1214 = vrcp.pop %v1213
  %v1215 = vmul.f32 %v1213, %v1214
  %v1216 = vsub.f32 1.0, %v1215
  %v1217 = vmul.f32 %v1214, %v1216
  %v1218 = vadd.f32 %v1214, %v1217
  %vm1219 = vweird.f32 %v1213
  %vm1220 = vweird.f32 %v1214
  %vm1221 = vmor %vm1219, %vm1220
  %v1222 = vsel %vm1221, %v1214, %v1218
  %v1223 = vand.u32 2147483647, %v1213
  %vm1224 = vcmp.eq.f32.partialorder %v1223, 8.507059e+37
  %v1225 = vand.u32 %v1213, 2147483648
  %v1226 = vor.u32 1.1754944e-38, %v1225
  %v1227 = vsel %vm1224, %v1226, %v1222
  %v1228 = vmul.f32 1.0, %v1227
  %v1229 = vxor.u32 %v1207, 2147483648
  %v1230 = vmul.f32 %v1229, 1.442695
  %v1231 = vpow.pop %v1230
  %v1232 = vadd.f32 %v1231, 1.0
  %v1233 = vrcp.pop %v1232
  %v1234 = vmul.f32 %v1232, %v1233
  %v1235 = vsub.f32 1.0, %v1234
  %v1236 = vmul.f32 %v1233, %v1235
  %v1237 = vadd.f32 %v1233, %v1236
  %vm1238 = vweird.f32 %v1232
  %vm1239 = vweird.f32 %v1233
  %vm1240 = vmor %vm1238, %vm1239
  %v1241 = vsel %vm1240, %v1233, %v1237
  %v1242 = vand.u32 2147483647, %v1232
  %vm1243 = vcmp.eq.f32.partialorder %v1242, 8.507059e+37
  %v1244 = vand.u32 %v1232, 2147483648
  %v1245 = vor.u32 1.1754944e-38, %v1244
  %v1246 = vsel %vm1243, %v1245, %v1241
  %v1247 = vmul.f32 1.0, %v1246
  %v1248 = vtanh.pop %v1208
  %v1249 = vxor.u32 %v1209, 2147483648
  %v1250 = vmul.f32 %v1249, 1.442695
  %v1251 = vpow.pop %v1250
  %v1252 = vadd.f32 %v1251, 1.0
  %v1253 = vrcp.pop %v1252
  %v1254 = vmul.f32 %v1252, %v1253
  %v1255 = vsub.f32 1.0, %v1254
  %v1256 = vmul.f32 %v1253, %v1255
  %v1257 = vadd.f32 %v1253, %v1256
  %vm1258 = vweird.f32 %v1252
  %vm1259 = vweird.f32 %v1253
  %vm1260 = vmor %vm1258, %vm1259
  %v1261 = vsel %vm1260, %v1253, %v1257
  %v1262 = vand.u32 2147483647, %v1252
  %vm1263 = vcmp.eq.f32.partialorder %v1262, 8.507059e+37
  %v1264 = vand.u32 %v1252, 2147483648
  %v1265 = vor.u32 1.1754944e-38, %v1264
  %v1266 = vsel %vm1263, %v1265, %v1261
  %v1267 = vmul.f32 1.0, %v1266
  %v1268 = vld [vmem:[#allocation3] sm:$0xff]
  %v1269 = vmul.f32 %v1247, %v1268
  %v1270 = vmul.f32 %v1228, %v1248
  %v1271 = vadd.f32 %v1269, %v1270
  %v1272 = vtanh.pop %v1271
  %v1273 = vmul.f32 %v1267, %v1272
  %1274 = vst [vmem:[#allocation3] sm:$0xff] %v1271
  %1275 = vst [vmem:[#allocation2] sm:$0xff] %v1273
  %v1276 = vpack.c.bf16 %v1273, %v1273
  %s1277 = scalar_lea.vmem %s2, 28
  %1278 = vst [vmem:[%s1277] sm:$0xf] %v1276
  %s1279 = scalar_lea.vmem %s0, 128
  %v1280 = vld [vmem:[%s1279] sm:$0xff]
  %v1281 = vld [vmem:[%s1279 + $0x8] sm:$0xff]
  %v1282 = vunpack.c.l.bf16 %v1280
  %v1283 = vunpack.c.h.bf16 %v1280
  %v1284 = vunpack.c.l.bf16 %v1281
  %v1285 = vunpack.c.h.bf16 %v1281
  %v1286 = vld [vmem:[#allocation2] sm:$0xff]
  %v1287 = vpack.c.bf16 %v1286, %v1286
  %1288 = vmatpush.bf16.msra.mxu0 %v181
  %1289 = vmatpush.bf16.msra.mxu0 %v177
  %1290 = vmatpush.bf16.msra.mxu0 %v173
  %1291 = vmatpush.bf16.msra.mxu0 %v169
  %1292 = vmatpush.bf16.msra.mxu0 %v165
  %1293 = vmatpush.bf16.msra.mxu0 %v161
  %1294 = vmatpush.bf16.msra.mxu0 %v157
  %1295 = vmatpush.bf16.msra.mxu0 %v153
  %1296 = vmatmul.bf16.gmra.mxu0 %v1287
  %v1297 = vpop.f32.mrf.mxu0
  %v1298 = vadd.f32 0.0, %v1297
  %v1299 = vpop.f32.mrf.mxu0
  %1300 = vdwg.mxu0
  %1301 = vmatpush.bf16.msra.mxu0 %v182
  %1302 = vmatpush.bf16.msra.mxu0 %v178
  %1303 = vmatpush.bf16.msra.mxu0 %v174
  %1304 = vmatpush.bf16.msra.mxu0 %v170
  %1305 = vmatpush.bf16.msra.mxu0 %v166
  %1306 = vmatpush.bf16.msra.mxu0 %v162
  %1307 = vmatpush.bf16.msra.mxu0 %v158
  %1308 = vmatpush.bf16.msra.mxu0 %v154
  %1309 = vmatmul.bf16.gmra.mxu0 %v1287
  %v1310 = vpop.f32.mrf.mxu0
  %v1311 = vadd.f32 0.0, %v1310
  %v1312 = vpop.f32.mrf.mxu0
  %1313 = vdwg.mxu0
  %1314 = vmatpush.bf16.msra.mxu0 %v183
  %1315 = vmatpush.bf16.msra.mxu0 %v179
  %1316 = vmatpush.bf16.msra.mxu0 %v175
  %1317 = vmatpush.bf16.msra.mxu0 %v171
  %1318 = vmatpush.bf16.msra.mxu0 %v167
  %1319 = vmatpush.bf16.msra.mxu0 %v163
  %1320 = vmatpush.bf16.msra.mxu0 %v159
  %1321 = vmatpush.bf16.msra.mxu0 %v155
  %1322 = vmatmul.bf16.gmra.mxu0 %v1287
  %v1323 = vpop.f32.mrf.mxu0
  %v1324 = vadd.f32 0.0, %v1323
  %v1325 = vpop.f32.mrf.mxu0
  %1326 = vdwg.mxu0
  %1327 = vmatpush.bf16.msra.mxu0 %v184
  %1328 = vmatpush.bf16.msra.mxu0 %v180
  %1329 = vmatpush.bf16.msra.mxu0 %v176
  %1330 = vmatpush.bf16.msra.mxu0 %v172
  %1331 = vmatpush.bf16.msra.mxu0 %v168
  %1332 = vmatpush.bf16.msra.mxu0 %v164
  %1333 = vmatpush.bf16.msra.mxu0 %v160
  %1334 = vmatpush.bf16.msra.mxu0 %v156
  %1335 = vmatmul.bf16.gmra.mxu0 %v1287
  %v1336 = vpop.f32.mrf.mxu0
  %v1337 = vadd.f32 0.0, %v1336
  %v1338 = vpop.f32.mrf.mxu0
  %1339 = vdwg.mxu0
  %v1340 = vadd.f32 %v1282, %v1298
  %v1341 = vadd.f32 %v1283, %v1311
  %v1342 = vadd.f32 %v1284, %v1324
  %v1343 = vadd.f32 %v1285, %v1337
  %v1344 = vxor.u32 %v1340, 2147483648
  %v1345 = vmul.f32 %v1344, 1.442695
  %v1346 = vpow.pop %v1345
  %v1347 = vadd.f32 %v1346, 1.0
  %v1348 = vrcp.pop %v1347
  %v1349 = vmul.f32 %v1347, %v1348
  %v1350 = vsub.f32 1.0, %v1349
  %v1351 = vmul.f32 %v1348, %v1350
  %v1352 = vadd.f32 %v1348, %v1351
  %vm1353 = vweird.f32 %v1347
  %vm1354 = vweird.f32 %v1348
  %vm1355 = vmor %vm1353, %vm1354
  %v1356 = vsel %vm1355, %v1348, %v1352
  %v1357 = vand.u32 2147483647, %v1347
  %vm1358 = vcmp.eq.f32.partialorder %v1357, 8.507059e+37
  %v1359 = vand.u32 %v1347, 2147483648
  %v1360 = vor.u32 1.1754944e-38, %v1359
  %v1361 = vsel %vm1358, %v1360, %v1356
  %v1362 = vmul.f32 1.0, %v1361
  %v1363 = vxor.u32 %v1341, 2147483648
  %v1364 = vmul.f32 %v1363, 1.442695
  %v1365 = vpow.pop %v1364
  %v1366 = vadd.f32 %v1365, 1.0
  %v1367 = vrcp.pop %v1366
  %v1368 = vmul.f32 %v1366, %v1367
  %v1369 = vsub.f32 1.0, %v1368
  %v1370 = vmul.f32 %v1367, %v1369
  %v1371 = vadd.f32 %v1367, %v1370
  %vm1372 = vweird.f32 %v1366
  %vm1373 = vweird.f32 %v1367
  %vm1374 = vmor %vm1372, %vm1373
  %v1375 = vsel %vm1374, %v1367, %v1371
  %v1376 = vand.u32 2147483647, %v1366
  %vm1377 = vcmp.eq.f32.partialorder %v1376, 8.507059e+37
  %v1378 = vand.u32 %v1366, 2147483648
  %v1379 = vor.u32 1.1754944e-38, %v1378
  %v1380 = vsel %vm1377, %v1379, %v1375
  %v1381 = vmul.f32 1.0, %v1380
  %v1382 = vtanh.pop %v1342
  %v1383 = vxor.u32 %v1343, 2147483648
  %v1384 = vmul.f32 %v1383, 1.442695
  %v1385 = vpow.pop %v1384
  %v1386 = vadd.f32 %v1385, 1.0
  %v1387 = vrcp.pop %v1386
  %v1388 = vmul.f32 %v1386, %v1387
  %v1389 = vsub.f32 1.0, %v1388
  %v1390 = vmul.f32 %v1387, %v1389
  %v1391 = vadd.f32 %v1387, %v1390
  %vm1392 = vweird.f32 %v1386
  %vm1393 = vweird.f32 %v1387
  %vm1394 = vmor %vm1392, %vm1393
  %v1395 = vsel %vm1394, %v1387, %v1391
  %v1396 = vand.u32 2147483647, %v1386
  %vm1397 = vcmp.eq.f32.partialorder %v1396, 8.507059e+37
  %v1398 = vand.u32 %v1386, 2147483648
  %v1399 = vor.u32 1.1754944e-38, %v1398
  %v1400 = vsel %vm1397, %v1399, %v1395
  %v1401 = vmul.f32 1.0, %v1400
  %v1402 = vld [vmem:[#allocation3] sm:$0xff]
  %v1403 = vmul.f32 %v1381, %v1402
  %v1404 = vmul.f32 %v1362, %v1382
  %v1405 = vadd.f32 %v1403, %v1404
  %v1406 = vtanh.pop %v1405
  %v1407 = vmul.f32 %v1401, %v1406
  %1408 = vst [vmem:[#allocation3] sm:$0xff] %v1405
  %1409 = vst [vmem:[#allocation2] sm:$0xff] %v1407
  %v1410 = vpack.c.bf16 %v1407, %v1407
  %s1411 = scalar_lea.vmem %s2, 32
  %1412 = vst [vmem:[%s1411] sm:$0xf] %v1410
  // Predicated region
  $region14: #{cnn_to_rnn_forward.10} parent=0 // pred_check
    _
  $region15: #{cnn_to_rnn_forward.10} parent=0 // pred_check_branch
    %1414 = sbr.rel (0) target = $region17
  $region16: #{cnn_to_rnn_forward.10} parent=0 // pred_region
    _
  $region17: #{cnn_to_rnn_forward.10} parent=0 // pred_fallthru
    _
  // Predicated region
  $region18: #{cnn_to_rnn_forward.10} parent=0 // pred_check
    _
  $region19: #{cnn_to_rnn_forward.10} parent=0 // pred_check_branch
    %1416 = sbr.rel (0) target = $region21
  $region20: #{cnn_to_rnn_forward.10} parent=0 // pred_region
    _
  $region21: #{cnn_to_rnn_forward.10} parent=0 // pred_fallthru
    _

</llo_original>
